<compile_context>
chip_gen: v7x
topology: tpu7x:2x2x1
jax: 0.10.0
libtpu: 0.0.40
codegen_flags: <defaults>
</compile_context>

<pallas_src>
import functools
from typing import NamedTuple, Tuple

import numpy as np
import jax
import jax.numpy as jnp
from jax import lax
from jax.experimental import pallas as pl
from jax.experimental.pallas import tpu as pltpu


# ------------------------------ static plan -------------------------------- #

class _StageCfg(NamedTuple):
    h: int       # stage input height
    w: int       # stage input width
    wp: int      # padded width = w + 2*pad
    l_p: int     # padded-flat input length   = (h + 2*pad) * wp
    l_o: int     # conv-output flat length    = (h - 1) * wp + w
    l_m: int     # pool-max flat length       = (h - pool)*wp + (w - pool) + 1
    pool: int
    cin: int     # padded (multiple of 8) stage input channels
    cout: int    # padded (multiple of 8) stage output channels


class _NetCfg(NamedTuple):
    kernel_size: int
    depth: int
    stages: Tuple[_StageCfg, ...]


def _rup8(c):
    return ((c + 7) // 8) * 8


# ------------------------------ Pallas kernel ------------------------------ #

def _fused_forward_kernel(cfg, *refs):
    """Whole SegmentationCNN forward for one batch element.

    Every activation is a 2-D (C, L) tile (channels on sublanes, flattened
    padded spatial grid on lanes) living in the f32 VMEM scratch `act`.
    """
    k = cfg.kernel_size
    n_stage = len(cfg.stages)

    it = iter(refs)
    x_ref = next(it)
    conv_refs = [(next(it), next(it)) for _ in range(n_stage * cfg.depth)]
    g_refs = [next(it) for _ in range(n_stage)]   # within-stage re-pad matrices
    s_refs = [next(it) for _ in range(n_stage)]   # pool-subsample matrices
    wd_ref = next(it)
    bd_ref = next(it)
    o_ref = next(it)
    act = next(it)                                # f32 VMEM scratch (C_max, L_max)

    # Stage-0 input: padded-flat image of this batch element.
    st0 = cfg.stages[0]
    act[0:st0.cin, 0:st0.l_p] = x_ref[0]

    li = 0
    pooled = None
    for si, st in enumerate(cfg.stages):
        for d in range(cfg.depth):
            w_ref, b_ref = conv_refs[li]
            li += 1
            cin = st.cin if d == 0 else st.cout
            # Transposed im2col: k*k lane-shifted views of the padded-flat
            # activation, sublane-concatenated -> (k*k*cin, L_O).  ONE MXU
            # matmul with K = k*k*cin replaces k*k tiny K=cin matmuls.
            taps = []
            for ky in range(k):
                for kx in range(k):
                    off = ky * st.wp + kx
                    taps.append(act[0:cin, off:off + st.l_o])
            patches = jnp.concatenate(taps, axis=0).astype(jnp.bfloat16)
            r = jnp.dot(w_ref[...], patches,
                        preferred_element_type=jnp.float32)
            r = jnp.maximum(r + b_ref[...], 0.0)       # f32 bias + ReLU epilogue
            if d < cfg.depth - 1:
                # Restore the SAME-conv zero border and drop the wrap-around
                # garbage columns with a constant 0/1 matmul (gather == matmul
                # on TPU), producing the next conv's padded-flat input.
                act[0:st.cout, 0:st.l_p] = jnp.dot(
                    r.astype(jnp.bfloat16), g_refs[si][...],
                    preferred_element_type=jnp.float32)
            else:
                act[0:st.cout, 0:st.l_o] = r
        # Fused MaxPool(pool, stride=pool): f32 elementwise max over the
        # pool*pool lane-shifted views, then a 0/1 selection matmul that keeps
        # only the stride-aligned columns and lays them out as the next
        # stage's padded-flat input (or the decoder's lane-dense input).
        m = act[0:st.cout, 0:st.l_m]
        for py in range(st.pool):
            for px in range(st.pool):
                if py == 0 and px == 0:
                    continue
                off = py * st.wp + px
                m = jnp.maximum(m, act[0:st.cout, off:off + st.l_m])
        pooled = jnp.dot(m.astype(jnp.bfloat16), s_refs[si][...],
                         preferred_element_type=jnp.float32)
        if si + 1 < n_stage:
            nxt = cfg.stages[si + 1]
            act[0:nxt.cin, 0:nxt.l_p] = pooled
        # else: `pooled` is already the (dec_cin, l_fin) decoder input.

    # 1x1 ConvTranspose decoder: per-pixel channel matmul, lane-dense store.
    out = jnp.dot(wd_ref[...], pooled.astype(jnp.bfloat16),
                  preferred_element_type=jnp.float32) + bd_ref[...]
    o_ref[0] = out.astype(o_ref.dtype)


# ------------------------- wrapper-side constant glue ----------------------- #

def _repad_matrix(st, pad):
    """0/1 matrix: conv-output flat layout -> same stage's padded-flat layout."""
    g = np.zeros((st.l_o, st.l_p), np.float32)
    for y in range(st.h):
        for x in range(st.w):
            g[y * st.wp + x, (y + pad) * st.wp + (x + pad)] = 1.0
    return g


def _pool_select_matrix(st, nxt, pad, l_fin):
    """0/1 matrix: pool-max flat layout -> next padded-flat / decoder layout."""
    ho, wo = st.h // st.pool, st.w // st.pool
    l_next = nxt.l_p if nxt is not None else l_fin
    s = np.zeros((st.l_m, l_next), np.float32)
    for yo in range(ho):
        for xo in range(wo):
            i = (yo * st.pool) * st.wp + (xo * st.pool)
            if nxt is not None:
                q = (yo + pad) * nxt.wp + (xo + pad)
            else:
                q = yo * wo + xo
            s[i, q] = 1.0
    return s


def _fold_conv_weight(w_hwio, cin_p, cout_p):
    """HWIO (k,k,cin,cout) -> (cout_p, k*k*cin_p), zero-padded, tap-major."""
    k1, k2, cin, cout = w_hwio.shape
    wpad = jnp.zeros((k1, k2, cin_p, cout_p), jnp.float32)
    wpad = wpad.at[:, :, :cin, :cout].set(w_hwio.astype(jnp.float32))
    return jnp.transpose(wpad, (3, 0, 1, 2)).reshape(cout_p, k1 * k2 * cin_p)


# ------------------------------ forward wrapper ----------------------------- #

def segmentation_cnn_forward(x_nchw, params, pool_sizes, kernel_size=3):
    B, c_in, H, W = x_nchw.shape
    k = kernel_size
    assert k % 2 == 1, "only odd kernel sizes (PyTorch padding=k//2 semantics)"
    pad = k // 2
    depth = len(params["encoders"][0])
    n_stage = len(pool_sizes)

    # Static per-stage geometry / (8-padded) channel plan.
    stages = []
    hs, ws = H, W
    for si, p in enumerate(pool_sizes):
        w0 = params["encoders"][si][0][0]                  # (k, k, cin, cout)
        cin_real, cout_real = w0.shape[2], w0.shape[3]
        cin_p = _rup8(cin_real) if si == 0 else stages[-1].cout
        cout_p = _rup8(cout_real)
        wp = ws + 2 * pad
        stages.append(_StageCfg(
            h=hs, w=ws, wp=wp,
            l_p=(hs + 2 * pad) * wp,
            l_o=(hs - 1) * wp + ws,
            l_m=(hs - p) * wp + (ws - p) + 1,
            pool=p, cin=cin_p, cout=cout_p))
        hs, ws = hs // p, ws // p
    ho_f, wo_f = hs, ws
    l_fin = max(128, ((ho_f * wo_f + 127) // 128) * 128)   # lane-dense output

    cfg = _NetCfg(kernel_size=k, depth=depth, stages=tuple(stages))

    inputs = []
    in_specs = []

    # Input image -> padded-flat, channels-first (B, cin_p, (H+2p)*(W+2p)).
    st0 = stages[0]
    xf = jnp.pad(x_nchw.astype(jnp.float32),
                 ((0, 0), (0, st0.cin - c_in), (pad, pad), (pad, pad)))
    xf = xf.reshape(B, st0.cin, st0.l_p)
    inputs.append(xf)
    in_specs.append(pl.BlockSpec((1, st0.cin, st0.l_p), lambda bi: (bi, 0, 0)))

    # Conv weights (folded to (Cout, k*k*Cin), bf16) and biases (f32).
    for si, st in enumerate(stages):
        for d, (w, b) in enumerate(params["encoders"][si]):
            cin_p = st.cin if d == 0 else st.cout
            w2 = _fold_conv_weight(w, cin_p, st.cout).astype(jnp.bfloat16)
            b2 = jnp.zeros((st.cout, 1), jnp.float32).at[:b.shape[0], 0].set(b)
            inputs += [w2, b2]
            in_specs += [pl.BlockSpec(w2.shape, lambda bi: (0, 0)),
                         pl.BlockSpec(b2.shape, lambda bi: (0, 0))]

    # Within-stage re-pad matrices, then pool-subsample matrices (0/1, bf16).
    for st in stages:
        g = jnp.asarray(_repad_matrix(st, pad), jnp.bfloat16)
        inputs.append(g)
        in_specs.append(pl.BlockSpec(g.shape, lambda bi: (0, 0)))
    for si, st in enumerate(stages):
        nxt = stages[si + 1] if si + 1 < n_stage else None
        s = jnp.asarray(_pool_select_matrix(st, nxt, pad, l_fin), jnp.bfloat16)
        inputs.append(s)
        in_specs.append(pl.BlockSpec(s.shape, lambda bi: (0, 0)))

    # Decoder (1x1 ConvTranspose): dense (Cout_pad, Cin_pad) bf16 + f32 bias.
    wd, bd = params["decoder"]
    dec_cin_p = stages[-1].cout
    dec_cout = wd.shape[1]
    dec_cout_p = _rup8(dec_cout)
    wd2 = jnp.zeros((dec_cout_p, dec_cin_p), jnp.float32)
    wd2 = wd2.at[:dec_cout, :wd.shape[0]].set(wd.T).astype(jnp.bfloat16)
    bd2 = jnp.zeros((dec_cout_p, 1), jnp.float32).at[:bd.shape[0], 0].set(bd)
    inputs += [wd2, bd2]
    in_specs += [pl.BlockSpec(wd2.shape, lambda bi: (0, 0)),
                 pl.BlockSpec(bd2.shape, lambda bi: (0, 0))]

    c_max = max(max(st.cin, st.cout) for st in stages)
    l_max = max(max(st.l_p, st.l_o) for st in stages)

    out = pl.pallas_call(
        functools.partial(_fused_forward_kernel, cfg),
        out_shape=jax.ShapeDtypeStruct((B, dec_cout_p, l_fin), jnp.float32),
        grid=(B,),
        in_specs=in_specs,
        out_specs=pl.BlockSpec((1, dec_cout_p, l_fin), lambda bi: (bi, 0, 0)),
        scratch_shapes=[pltpu.VMEM((c_max, l_max), jnp.float32)],
        compiler_params=pltpu.CompilerParams(
            dimension_semantics=("parallel",),
            vmem_limit_bytes=32 * 1024 * 1024),
    )(*inputs)

    return out[:, :dec_cout, :ho_f * wo_f].reshape(B, dec_cout, ho_f, wo_f)


# -------------------------- model: parameter init --------------------------- #

def init_params(key, in_channels, out_channels, depth, embedding_size,
                pool_sizes, kernel_size):
    """Deterministic PyTorch-style uniform(-1/sqrt(fan_in), 1/sqrt(fan_in))."""
    def conv_init(kk, cin, cout, ksize):
        kw, kb = jax.random.split(kk)
        bound = 1.0 / float(cin * ksize * ksize) ** 0.5
        w = jax.random.uniform(kw, (ksize, ksize, cin, cout), jnp.float32,
                               -bound, bound)          # HWIO
        b = jax.random.uniform(kb, (cout,), jnp.float32, -bound, bound)
        return w, b

    encoders = []
    for i in range(len(pool_sizes)):
        cin = in_channels if i == 0 else (2 ** (i - 1)) * embedding_size
        cout = embedding_size if i == 0 else (2 ** i) * embedding_size
        layers = []
        for d in range(depth):
            key, sub = jax.random.split(key)
            layers.append(conv_init(sub, cin if d == 0 else cout, cout,
                                    kernel_size))
        encoders.append(layers)

    dec_in = (2 ** (len(pool_sizes) - 1)) * embedding_size
    key, sub = jax.random.split(key)
    kw, kb = jax.random.split(sub)
    bound = 1.0 / float(dec_in) ** 0.5
    # ConvTranspose2d weight (Cin, Cout, 1, 1) stored dense as (Cin, Cout).
    wd = jax.random.uniform(kw, (dec_in, out_channels), jnp.float32,
                            -bound, bound)
    bd = jax.random.uniform(kb, (out_channels,), jnp.float32, -bound, bound)
    return {"encoders": encoders, "decoder": (wd, bd)}


# ------------------------------ pure-JAX reference -------------------------- #

def reference_forward(x_nchw, params, pool_sizes, emulate_mxu_bf16=True):
    """Independent lax.conv / reduce_window reference.

    With emulate_mxu_bf16=True the matmul/conv operands are rounded to bf16
    (round-to-nearest-even) before an otherwise-exact conv, mirroring the
    kernel's single-pass bf16 MXU inputs with f32 accumulation, so the
    comparison stays tight.
    """
    def rnd(a):
        if emulate_mxu_bf16:
            return a.astype(jnp.bfloat16).astype(jnp.float32)
        return a

    x = x_nchw.astype(jnp.float32)
    for enc_layers, p in zip(params["encoders"], pool_sizes):
        for w, b in enc_layers:
            x = lax.conv_general_dilated(
                rnd(x), rnd(w), window_strides=(1, 1), padding="SAME",
                dimension_numbers=("NCHW", "HWIO", "NCHW"),
                precision=lax.Precision.HIGHEST)
            x = jnp.maximum(x + b[None, :, None, None], 0.0)
        x = lax.reduce_window(x, -jnp.inf, lax.max,
                              (1, 1, p, p), (1, 1, p, p), "VALID")
    wd, bd = params["decoder"]
    x = jnp.einsum("bchw,co->bohw", rnd(x), rnd(wd),
                   precision=lax.Precision.HIGHEST) + bd[None, :, None, None]
    return x


# ----------------------------------- main ----------------------------------- #

if __name__ == "__main__":
    # Small config consistent with the module (pool_sizes etc. are ctor args).
    B, Cin, Hs, Ws = 2, 4, 16, 16
    out_channels = 3
    depth = 2
    embedding_size = 16
    pool_sizes = [2, 2, 2]
    kernel_size = 3

    key = jax.random.PRNGKey(0)
    key, xkey = jax.random.split(key)
    x = jax.random.normal(xkey, (B, Cin, Hs, Ws), jnp.float32)

    params = init_params(key, Cin, out_channels, depth, embedding_size,
                         pool_sizes, kernel_size)

    y = segmentation_cnn_forward(x, params, pool_sizes, kernel_size)
    y = jax.block_until_ready(y)

    # shape check: (B, out_channels, H // prod(pool), W // prod(pool))
    assert y.shape == (B, out_channels, Hs // 8, Ws // 8), y.shape

    # numerical check against the bf16-operand-emulating pure-JAX reference
    # (the kernel feeds bf16 operands to the MXU and accumulates in f32).
    y_ref = jax.block_until_ready(reference_forward(x, params, pool_sizes))
    err = float(jnp.max(jnp.abs(y - y_ref)))
    scale = float(jnp.max(jnp.abs(y_ref))) + 1e-6
    assert err <= 1e-2 * scale + 1e-3, (err, scale)

    print("KERNEL_OK")
</pallas_src>

<mosaic_0001>
module attributes {stable_mosaic.version = 11 : i64} {
  func.func @_fused_forward_kernel(%arg0: i32, %arg1: memref<1x8x324xf32, #tpu.memory_space<vmem>>, %arg2: memref<16x72xbf16, #tpu.memory_space<vmem>>, %arg3: memref<16x1xf32, #tpu.memory_space<vmem>>, %arg4: memref<16x144xbf16, #tpu.memory_space<vmem>>, %arg5: memref<16x1xf32, #tpu.memory_space<vmem>>, %arg6: memref<32x144xbf16, #tpu.memory_space<vmem>>, %arg7: memref<32x1xf32, #tpu.memory_space<vmem>>, %arg8: memref<32x288xbf16, #tpu.memory_space<vmem>>, %arg9: memref<32x1xf32, #tpu.memory_space<vmem>>, %arg10: memref<64x288xbf16, #tpu.memory_space<vmem>>, %arg11: memref<64x1xf32, #tpu.memory_space<vmem>>, %arg12: memref<64x576xbf16, #tpu.memory_space<vmem>>, %arg13: memref<64x1xf32, #tpu.memory_space<vmem>>, %arg14: memref<286x324xbf16, #tpu.memory_space<vmem>>, %arg15: memref<78x100xbf16, #tpu.memory_space<vmem>>, %arg16: memref<22x36xbf16, #tpu.memory_space<vmem>>, %arg17: memref<267x100xbf16, #tpu.memory_space<vmem>>, %arg18: memref<67x36xbf16, #tpu.memory_space<vmem>>, %arg19: memref<15x128xbf16, #tpu.memory_space<vmem>>, %arg20: memref<8x64xbf16, #tpu.memory_space<vmem>>, %arg21: memref<8x1xf32, #tpu.memory_space<vmem>>, %arg22: memref<1x8x128xf32, #tpu.memory_space<vmem>>, %arg23: memref<64x324xf32, #tpu.memory_space<vmem>>) attributes {dimension_semantics = [#tpu.dimension_semantics<parallel>], iteration_bounds = array<i64: 2>, scalar_prefetch = 0 : i64, scratch_operands = 1 : i64, tpu.core_type = #tpu.core_type<tc>, window_params = [{transform_indices = @transform_0, window_bounds = array<i64: 1, 8, 324>}, {pipeline_mode = #tpu.pipeline_mode<synchronous>, transform_indices = @transform_1, window_bounds = array<i64: 16, 72>}, {pipeline_mode = #tpu.pipeline_mode<synchronous>, transform_indices = @transform_2, window_bounds = array<i64: 16, 1>}, {pipeline_mode = #tpu.pipeline_mode<synchronous>, transform_indices = @transform_3, window_bounds = array<i64: 16, 144>}, {pipeline_mode = #tpu.pipeline_mode<synchronous>, transform_indices = @transform_4, window_bounds = array<i64: 16, 1>}, {pipeline_mode = #tpu.pipeline_mode<synchronous>, transform_indices = @transform_5, window_bounds = array<i64: 32, 144>}, {pipeline_mode = #tpu.pipeline_mode<synchronous>, transform_indices = @transform_6, window_bounds = array<i64: 32, 1>}, {pipeline_mode = #tpu.pipeline_mode<synchronous>, transform_indices = @transform_7, window_bounds = array<i64: 32, 288>}, {pipeline_mode = #tpu.pipeline_mode<synchronous>, transform_indices = @transform_8, window_bounds = array<i64: 32, 1>}, {pipeline_mode = #tpu.pipeline_mode<synchronous>, transform_indices = @transform_9, window_bounds = array<i64: 64, 288>}, {pipeline_mode = #tpu.pipeline_mode<synchronous>, transform_indices = @transform_10, window_bounds = array<i64: 64, 1>}, {pipeline_mode = #tpu.pipeline_mode<synchronous>, transform_indices = @transform_11, window_bounds = array<i64: 64, 576>}, {pipeline_mode = #tpu.pipeline_mode<synchronous>, transform_indices = @transform_12, window_bounds = array<i64: 64, 1>}, {pipeline_mode = #tpu.pipeline_mode<synchronous>, transform_indices = @transform_13, window_bounds = array<i64: 286, 324>}, {pipeline_mode = #tpu.pipeline_mode<synchronous>, transform_indices = @transform_14, window_bounds = array<i64: 78, 100>}, {pipeline_mode = #tpu.pipeline_mode<synchronous>, transform_indices = @transform_15, window_bounds = array<i64: 22, 36>}, {pipeline_mode = #tpu.pipeline_mode<synchronous>, transform_indices = @transform_16, window_bounds = array<i64: 267, 100>}, {pipeline_mode = #tpu.pipeline_mode<synchronous>, transform_indices = @transform_17, window_bounds = array<i64: 67, 36>}, {pipeline_mode = #tpu.pipeline_mode<synchronous>, transform_indices = @transform_18, window_bounds = array<i64: 15, 128>}, {pipeline_mode = #tpu.pipeline_mode<synchronous>, transform_indices = @transform_19, window_bounds = array<i64: 8, 64>}, {pipeline_mode = #tpu.pipeline_mode<synchronous>, transform_indices = @transform_20, window_bounds = array<i64: 8, 1>}, {transform_indices = @transform_21, window_bounds = array<i64: 1, 8, 128>}]} {
    %c0 = arith.constant 0 : index
    %c0_0 = arith.constant 0 : index
    %c0_1 = arith.constant 0 : index
    %0 = vector.load %arg1[%c0, %c0_0, %c0_1] : memref<1x8x324xf32, #tpu.memory_space<vmem>>, vector<1x8x324xf32>
    %1 = vector.shape_cast %0 : vector<1x8x324xf32> to vector<8x324xf32>
    %c0_2 = arith.constant 0 : index
    %c0_3 = arith.constant 0 : index
    %2 = vector.load %arg23[%c0_2, %c0_3] : memref<64x324xf32, #tpu.memory_space<vmem>>, vector<8x324xf32>
    tpu.vector_store %arg23[%c0_2, %c0_3], %1 {strides = array<i32>} : memref<64x324xf32, #tpu.memory_space<vmem>>, vector<8x324xf32>,
    %c0_4 = arith.constant 0 : index
    %c0_5 = arith.constant 0 : index
    %3 = vector.load %arg23[%c0_4, %c0_5] : memref<64x324xf32, #tpu.memory_space<vmem>>, vector<8x286xf32>
    %c0_6 = arith.constant 0 : index
    %c1 = arith.constant 1 : index
    %4 = vector.load %arg23[%c0_6, %c1] : memref<64x324xf32, #tpu.memory_space<vmem>>, vector<8x286xf32>
    %c0_7 = arith.constant 0 : index
    %c2 = arith.constant 2 : index
    %5 = vector.load %arg23[%c0_7, %c2] : memref<64x324xf32, #tpu.memory_space<vmem>>, vector<8x286xf32>
    %c0_8 = arith.constant 0 : index
    %c18 = arith.constant 18 : index
    %6 = vector.load %arg23[%c0_8, %c18] : memref<64x324xf32, #tpu.memory_space<vmem>>, vector<8x286xf32>
    %c0_9 = arith.constant 0 : index
    %c19 = arith.constant 19 : index
    %7 = vector.load %arg23[%c0_9, %c19] : memref<64x324xf32, #tpu.memory_space<vmem>>, vector<8x286xf32>
    %c0_10 = arith.constant 0 : index
    %c20 = arith.constant 20 : index
    %8 = vector.load %arg23[%c0_10, %c20] : memref<64x324xf32, #tpu.memory_space<vmem>>, vector<8x286xf32>
    %c0_11 = arith.constant 0 : index
    %c36 = arith.constant 36 : index
    %9 = vector.load %arg23[%c0_11, %c36] : memref<64x324xf32, #tpu.memory_space<vmem>>, vector<8x286xf32>
    %c0_12 = arith.constant 0 : index
    %c37 = arith.constant 37 : index
    %10 = vector.load %arg23[%c0_12, %c37] : memref<64x324xf32, #tpu.memory_space<vmem>>, vector<8x286xf32>
    %c0_13 = arith.constant 0 : index
    %c38 = arith.constant 38 : index
    %11 = vector.load %arg23[%c0_13, %c38] : memref<64x324xf32, #tpu.memory_space<vmem>>, vector<8x286xf32>
    %12 = tpu.concatenate %3, %4, %5, %6, %7, %8, %9, %10, %11 in 0 : vector<8x286xf32>, vector<8x286xf32>, vector<8x286xf32>, vector<8x286xf32>, vector<8x286xf32>, vector<8x286xf32>, vector<8x286xf32>, vector<8x286xf32>, vector<8x286xf32> -> vector<72x286xf32>
    %13 = arith.truncf %12 : vector<72x286xf32> to vector<72x286xbf16>
    %c0_14 = arith.constant 0 : index
    %c0_15 = arith.constant 0 : index
    %14 = vector.load %arg2[%c0_14, %c0_15] : memref<16x72xbf16, #tpu.memory_space<vmem>>, vector<16x72xbf16>
    %cst = arith.constant dense<0.000000e+00> : vector<16x286xf32>
    %15 = tpu.matmul %14, %13, %cst {dimension_numbers = #tpu.dot_dimension_numbers<[1], [0], [0], [1], [0, 0, 1, 1], [], []>} : vector<16x72xbf16>, vector<72x286xbf16>, vector<16x286xf32> -> vector<16x286xf32>
    %c0_16 = arith.constant 0 : index
    %c0_17 = arith.constant 0 : index
    %16 = vector.load %arg3[%c0_16, %c0_17] : memref<16x1xf32, #tpu.memory_space<vmem>>, vector<16x1xf32>
    %17 = vector.broadcast %16 : vector<16x1xf32> to vector<16x286xf32>
    %18 = arith.addf %15, %17 : vector<16x286xf32>
    %cst_18 = arith.constant 0.000000e+00 : f32
    %19 = vector.broadcast %cst_18 : f32 to vector<16x286xf32>
    %20 = arith.maximumf %18, %19 : vector<16x286xf32>
    %21 = arith.truncf %20 : vector<16x286xf32> to vector<16x286xbf16>
    %c0_19 = arith.constant 0 : index
    %c0_20 = arith.constant 0 : index
    %22 = vector.load %arg14[%c0_19, %c0_20] : memref<286x324xbf16, #tpu.memory_space<vmem>>, vector<286x324xbf16>
    %cst_21 = arith.constant dense<0.000000e+00> : vector<16x324xf32>
    %23 = tpu.matmul %21, %22, %cst_21 {dimension_numbers = #tpu.dot_dimension_numbers<[1], [0], [0], [1], [0, 0, 1, 1], [], []>} : vector<16x286xbf16>, vector<286x324xbf16>, vector<16x324xf32> -> vector<16x324xf32>
    %c0_22 = arith.constant 0 : index
    %c0_23 = arith.constant 0 : index
    %24 = vector.load %arg23[%c0_22, %c0_23] : memref<64x324xf32, #tpu.memory_space<vmem>>, vector<16x324xf32>
    tpu.vector_store %arg23[%c0_22, %c0_23], %23 {strides = array<i32>} : memref<64x324xf32, #tpu.memory_space<vmem>>, vector<16x324xf32>,
    %c0_24 = arith.constant 0 : index
    %c0_25 = arith.constant 0 : index
    %25 = vector.load %arg23[%c0_24, %c0_25] : memref<64x324xf32, #tpu.memory_space<vmem>>, vector<16x286xf32>
    %c0_26 = arith.constant 0 : index
    %c1_27 = arith.constant 1 : index
    %26 = vector.load %arg23[%c0_26, %c1_27] : memref<64x324xf32, #tpu.memory_space<vmem>>, vector<16x286xf32>
    %c0_28 = arith.constant 0 : index
    %c2_29 = arith.constant 2 : index
    %27 = vector.load %arg23[%c0_28, %c2_29] : memref<64x324xf32, #tpu.memory_space<vmem>>, vector<16x286xf32>
    %c0_30 = arith.constant 0 : index
    %c18_31 = arith.constant 18 : index
    %28 = vector.load %arg23[%c0_30, %c18_31] : memref<64x324xf32, #tpu.memory_space<vmem>>, vector<16x286xf32>
    %c0_32 = arith.constant 0 : index
    %c19_33 = arith.constant 19 : index
    %29 = vector.load %arg23[%c0_32, %c19_33] : memref<64x324xf32, #tpu.memory_space<vmem>>, vector<16x286xf32>
    %c0_34 = arith.constant 0 : index
    %c20_35 = arith.constant 20 : index
    %30 = vector.load %arg23[%c0_34, %c20_35] : memref<64x324xf32, #tpu.memory_space<vmem>>, vector<16x286xf32>
    %c0_36 = arith.constant 0 : index
    %c36_37 = arith.constant 36 : index
    %31 = vector.load %arg23[%c0_36, %c36_37] : memref<64x324xf32, #tpu.memory_space<vmem>>, vector<16x286xf32>
    %c0_38 = arith.constant 0 : index
    %c37_39 = arith.constant 37 : index
    %32 = vector.load %arg23[%c0_38, %c37_39] : memref<64x324xf32, #tpu.memory_space<vmem>>, vector<16x286xf32>
    %c0_40 = arith.constant 0 : index
    %c38_41 = arith.constant 38 : index
    %33 = vector.load %arg23[%c0_40, %c38_41] : memref<64x324xf32, #tpu.memory_space<vmem>>, vector<16x286xf32>
    %34 = tpu.concatenate %25, %26, %27, %28, %29, %30, %31, %32, %33 in 0 : vector<16x286xf32>, vector<16x286xf32>, vector<16x286xf32>, vector<16x286xf32>, vector<16x286xf32>, vector<16x286xf32>, vector<16x286xf32>, vector<16x286xf32>, vector<16x286xf32> -> vector<144x286xf32>
    %35 = arith.truncf %34 : vector<144x286xf32> to vector<144x286xbf16>
    %c0_42 = arith.constant 0 : index
    %c0_43 = arith.constant 0 : index
    %36 = vector.load %arg4[%c0_42, %c0_43] : memref<16x144xbf16, #tpu.memory_space<vmem>>, vector<16x144xbf16>
    %cst_44 = arith.constant dense<0.000000e+00> : vector<16x286xf32>
    %37 = tpu.matmul %36, %35, %cst_44 {dimension_numbers = #tpu.dot_dimension_numbers<[1], [0], [0], [1], [0, 0, 1, 1], [], []>} : vector<16x144xbf16>, vector<144x286xbf16>, vector<16x286xf32> -> vector<16x286xf32>
    %c0_45 = arith.constant 0 : index
    %c0_46 = arith.constant 0 : index
    %38 = vector.load %arg5[%c0_45, %c0_46] : memref<16x1xf32, #tpu.memory_space<vmem>>, vector<16x1xf32>
    %39 = vector.broadcast %38 : vector<16x1xf32> to vector<16x286xf32>
    %40 = arith.addf %37, %39 : vector<16x286xf32>
    %cst_47 = arith.constant 0.000000e+00 : f32
    %41 = vector.broadcast %cst_47 : f32 to vector<16x286xf32>
    %42 = arith.maximumf %40, %41 : vector<16x286xf32>
    %c0_48 = arith.constant 0 : index
    %c0_49 = arith.constant 0 : index
    %43 = vector.load %arg23[%c0_48, %c0_49] : memref<64x324xf32, #tpu.memory_space<vmem>>, vector<16x286xf32>
    tpu.vector_store %arg23[%c0_48, %c0_49], %42 {strides = array<i32>} : memref<64x324xf32, #tpu.memory_space<vmem>>, vector<16x286xf32>,
    %c0_50 = arith.constant 0 : index
    %c0_51 = arith.constant 0 : index
    %44 = vector.load %arg23[%c0_50, %c0_51] : memref<64x324xf32, #tpu.memory_space<vmem>>, vector<16x267xf32>
    %c0_52 = arith.constant 0 : index
    %c1_53 = arith.constant 1 : index
    %45 = vector.load %arg23[%c0_52, %c1_53] : memref<64x324xf32, #tpu.memory_space<vmem>>, vector<16x267xf32>
    %46 = arith.maximumf %44, %45 : vector<16x267xf32>
    %c0_54 = arith.constant 0 : index
    %c18_55 = arith.constant 18 : index
    %47 = vector.load %arg23[%c0_54, %c18_55] : memref<64x324xf32, #tpu.memory_space<vmem>>, vector<16x267xf32>
    %48 = arith.maximumf %46, %47 : vector<16x267xf32>
    %c0_56 = arith.constant 0 : index
    %c19_57 = arith.constant 19 : index
    %49 = vector.load %arg23[%c0_56, %c19_57] : memref<64x324xf32, #tpu.memory_space<vmem>>, vector<16x267xf32>
    %50 = arith.maximumf %48, %49 : vector<16x267xf32>
    %51 = arith.truncf %50 : vector<16x267xf32> to vector<16x267xbf16>
    %c0_58 = arith.constant 0 : index
    %c0_59 = arith.constant 0 : index
    %52 = vector.load %arg17[%c0_58, %c0_59] : memref<267x100xbf16, #tpu.memory_space<vmem>>, vector<267x100xbf16>
    %cst_60 = arith.constant dense<0.000000e+00> : vector<16x100xf32>
    %53 = tpu.matmul %51, %52, %cst_60 {dimension_numbers = #tpu.dot_dimension_numbers<[1], [0], [0], [1], [0, 0, 1, 1], [], []>} : vector<16x267xbf16>, vector<267x100xbf16>, vector<16x100xf32> -> vector<16x100xf32>
    %c0_61 = arith.constant 0 : index
    %c0_62 = arith.constant 0 : index
    %54 = vector.load %arg23[%c0_61, %c0_62] : memref<64x324xf32, #tpu.memory_space<vmem>>, vector<16x100xf32>
    tpu.vector_store %arg23[%c0_61, %c0_62], %53 {strides = array<i32>} : memref<64x324xf32, #tpu.memory_space<vmem>>, vector<16x100xf32>,
    %c0_63 = arith.constant 0 : index
    %c0_64 = arith.constant 0 : index
    %55 = vector.load %arg23[%c0_63, %c0_64] : memref<64x324xf32, #tpu.memory_space<vmem>>, vector<16x78xf32>
    %c0_65 = arith.constant 0 : index
    %c1_66 = arith.constant 1 : index
    %56 = vector.load %arg23[%c0_65, %c1_66] : memref<64x324xf32, #tpu.memory_space<vmem>>, vector<16x78xf32>
    %c0_67 = arith.constant 0 : index
    %c2_68 = arith.constant 2 : index
    %57 = vector.load %arg23[%c0_67, %c2_68] : memref<64x324xf32, #tpu.memory_space<vmem>>, vector<16x78xf32>
    %c0_69 = arith.constant 0 : index
    %c10 = arith.constant 10 : index
    %58 = vector.load %arg23[%c0_69, %c10] : memref<64x324xf32, #tpu.memory_space<vmem>>, vector<16x78xf32>
    %c0_70 = arith.constant 0 : index
    %c11 = arith.constant 11 : index
    %59 = vector.load %arg23[%c0_70, %c11] : memref<64x324xf32, #tpu.memory_space<vmem>>, vector<16x78xf32>
    %c0_71 = arith.constant 0 : index
    %c12 = arith.constant 12 : index
    %60 = vector.load %arg23[%c0_71, %c12] : memref<64x324xf32, #tpu.memory_space<vmem>>, vector<16x78xf32>
    %c0_72 = arith.constant 0 : index
    %c20_73 = arith.constant 20 : index
    %61 = vector.load %arg23[%c0_72, %c20_73] : memref<64x324xf32, #tpu.memory_space<vmem>>, vector<16x78xf32>
    %c0_74 = arith.constant 0 : index
    %c21 = arith.constant 21 : index
    %62 = vector.load %arg23[%c0_74, %c21] : memref<64x324xf32, #tpu.memory_space<vmem>>, vector<16x78xf32>
    %c0_75 = arith.constant 0 : index
    %c22 = arith.constant 22 : index
    %63 = vector.load %arg23[%c0_75, %c22] : memref<64x324xf32, #tpu.memory_space<vmem>>, vector<16x78xf32>
    %64 = tpu.concatenate %55, %56, %57, %58, %59, %60, %61, %62, %63 in 0 : vector<16x78xf32>, vector<16x78xf32>, vector<16x78xf32>, vector<16x78xf32>, vector<16x78xf32>, vector<16x78xf32>, vector<16x78xf32>, vector<16x78xf32>, vector<16x78xf32> -> vector<144x78xf32>
    %65 = arith.truncf %64 : vector<144x78xf32> to vector<144x78xbf16>
    %c0_76 = arith.constant 0 : index
    %c0_77 = arith.constant 0 : index
    %66 = vector.load %arg6[%c0_76, %c0_77] : memref<32x144xbf16, #tpu.memory_space<vmem>>, vector<32x144xbf16>
    %cst_78 = arith.constant dense<0.000000e+00> : vector<32x78xf32>
    %67 = tpu.matmul %66, %65, %cst_78 {dimension_numbers = #tpu.dot_dimension_numbers<[1], [0], [0], [1], [0, 0, 1, 1], [], []>} : vector<32x144xbf16>, vector<144x78xbf16>, vector<32x78xf32> -> vector<32x78xf32>
    %c0_79 = arith.constant 0 : index
    %c0_80 = arith.constant 0 : index
    %68 = vector.load %arg7[%c0_79, %c0_80] : memref<32x1xf32, #tpu.memory_space<vmem>>, vector<32x1xf32>
    %69 = vector.broadcast %68 : vector<32x1xf32> to vector<32x78xf32>
    %70 = arith.addf %67, %69 : vector<32x78xf32>
    %cst_81 = arith.constant 0.000000e+00 : f32
    %71 = vector.broadcast %cst_81 : f32 to vector<32x78xf32>
    %72 = arith.maximumf %70, %71 : vector<32x78xf32>
    %73 = arith.truncf %72 : vector<32x78xf32> to vector<32x78xbf16>
    %c0_82 = arith.constant 0 : index
    %c0_83 = arith.constant 0 : index
    %74 = vector.load %arg15[%c0_82, %c0_83] : memref<78x100xbf16, #tpu.memory_space<vmem>>, vector<78x100xbf16>
    %cst_84 = arith.constant dense<0.000000e+00> : vector<32x100xf32>
    %75 = tpu.matmul %73, %74, %cst_84 {dimension_numbers = #tpu.dot_dimension_numbers<[1], [0], [0], [1], [0, 0, 1, 1], [], []>} : vector<32x78xbf16>, vector<78x100xbf16>, vector<32x100xf32> -> vector<32x100xf32>
    %c0_85 = arith.constant 0 : index
    %c0_86 = arith.constant 0 : index
    %76 = vector.load %arg23[%c0_85, %c0_86] : memref<64x324xf32, #tpu.memory_space<vmem>>, vector<32x100xf32>
    tpu.vector_store %arg23[%c0_85, %c0_86], %75 {strides = array<i32>} : memref<64x324xf32, #tpu.memory_space<vmem>>, vector<32x100xf32>,
    %c0_87 = arith.constant 0 : index
    %c0_88 = arith.constant 0 : index
    %77 = vector.load %arg23[%c0_87, %c0_88] : memref<64x324xf32, #tpu.memory_space<vmem>>, vector<32x78xf32>
    %c0_89 = arith.constant 0 : index
    %c1_90 = arith.constant 1 : index
    %78 = vector.load %arg23[%c0_89, %c1_90] : memref<64x324xf32, #tpu.memory_space<vmem>>, vector<32x78xf32>
    %c0_91 = arith.constant 0 : index
    %c2_92 = arith.constant 2 : index
    %79 = vector.load %arg23[%c0_91, %c2_92] : memref<64x324xf32, #tpu.memory_space<vmem>>, vector<32x78xf32>
    %c0_93 = arith.constant 0 : index
    %c10_94 = arith.constant 10 : index
    %80 = vector.load %arg23[%c0_93, %c10_94] : memref<64x324xf32, #tpu.memory_space<vmem>>, vector<32x78xf32>
    %c0_95 = arith.constant 0 : index
    %c11_96 = arith.constant 11 : index
    %81 = vector.load %arg23[%c0_95, %c11_96] : memref<64x324xf32, #tpu.memory_space<vmem>>, vector<32x78xf32>
    %c0_97 = arith.constant 0 : index
    %c12_98 = arith.constant 12 : index
    %82 = vector.load %arg23[%c0_97, %c12_98] : memref<64x324xf32, #tpu.memory_space<vmem>>, vector<32x78xf32>
    %c0_99 = arith.constant 0 : index
    %c20_100 = arith.constant 20 : index
    %83 = vector.load %arg23[%c0_99, %c20_100] : memref<64x324xf32, #tpu.memory_space<vmem>>, vector<32x78xf32>
    %c0_101 = arith.constant 0 : index
    %c21_102 = arith.constant 21 : index
    %84 = vector.load %arg23[%c0_101, %c21_102] : memref<64x324xf32, #tpu.memory_space<vmem>>, vector<32x78xf32>
    %c0_103 = arith.constant 0 : index
    %c22_104 = arith.constant 22 : index
    %85 = vector.load %arg23[%c0_103, %c22_104] : memref<64x324xf32, #tpu.memory_space<vmem>>, vector<32x78xf32>
    %86 = tpu.concatenate %77, %78, %79, %80, %81, %82, %83, %84, %85 in 0 : vector<32x78xf32>, vector<32x78xf32>, vector<32x78xf32>, vector<32x78xf32>, vector<32x78xf32>, vector<32x78xf32>, vector<32x78xf32>, vector<32x78xf32>, vector<32x78xf32> -> vector<288x78xf32>
    %87 = arith.truncf %86 : vector<288x78xf32> to vector<288x78xbf16>
    %c0_105 = arith.constant 0 : index
    %c0_106 = arith.constant 0 : index
    %88 = vector.load %arg8[%c0_105, %c0_106] : memref<32x288xbf16, #tpu.memory_space<vmem>>, vector<32x288xbf16>
    %cst_107 = arith.constant dense<0.000000e+00> : vector<32x78xf32>
    %89 = tpu.matmul %88, %87, %cst_107 {dimension_numbers = #tpu.dot_dimension_numbers<[1], [0], [0], [1], [0, 0, 1, 1], [], []>} : vector<32x288xbf16>, vector<288x78xbf16>, vector<32x78xf32> -> vector<32x78xf32>
    %c0_108 = arith.constant 0 : index
    %c0_109 = arith.constant 0 : index
    %90 = vector.load %arg9[%c0_108, %c0_109] : memref<32x1xf32, #tpu.memory_space<vmem>>, vector<32x1xf32>
    %91 = vector.broadcast %90 : vector<32x1xf32> to vector<32x78xf32>
    %92 = arith.addf %89, %91 : vector<32x78xf32>
    %cst_110 = arith.constant 0.000000e+00 : f32
    %93 = vector.broadcast %cst_110 : f32 to vector<32x78xf32>
    %94 = arith.maximumf %92, %93 : vector<32x78xf32>
    %c0_111 = arith.constant 0 : index
    %c0_112 = arith.constant 0 : index
    %95 = vector.load %arg23[%c0_111, %c0_112] : memref<64x324xf32, #tpu.memory_space<vmem>>, vector<32x78xf32>
    tpu.vector_store %arg23[%c0_111, %c0_112], %94 {strides = array<i32>} : memref<64x324xf32, #tpu.memory_space<vmem>>, vector<32x78xf32>,
    %c0_113 = arith.constant 0 : index
    %c0_114 = arith.constant 0 : index
    %96 = vector.load %arg23[%c0_113, %c0_114] : memref<64x324xf32, #tpu.memory_space<vmem>>, vector<32x67xf32>
    %c0_115 = arith.constant 0 : index
    %c1_116 = arith.constant 1 : index
    %97 = vector.load %arg23[%c0_115, %c1_116] : memref<64x324xf32, #tpu.memory_space<vmem>>, vector<32x67xf32>
    %98 = arith.maximumf %96, %97 : vector<32x67xf32>
    %c0_117 = arith.constant 0 : index
    %c10_118 = arith.constant 10 : index
    %99 = vector.load %arg23[%c0_117, %c10_118] : memref<64x324xf32, #tpu.memory_space<vmem>>, vector<32x67xf32>
    %100 = arith.maximumf %98, %99 : vector<32x67xf32>
    %c0_119 = arith.constant 0 : index
    %c11_120 = arith.constant 11 : index
    %101 = vector.load %arg23[%c0_119, %c11_120] : memref<64x324xf32, #tpu.memory_space<vmem>>, vector<32x67xf32>
    %102 = arith.maximumf %100, %101 : vector<32x67xf32>
    %103 = arith.truncf %102 : vector<32x67xf32> to vector<32x67xbf16>
    %c0_121 = arith.constant 0 : index
    %c0_122 = arith.constant 0 : index
    %104 = vector.load %arg18[%c0_121, %c0_122] : memref<67x36xbf16, #tpu.memory_space<vmem>>, vector<67x36xbf16>
    %cst_123 = arith.constant dense<0.000000e+00> : vector<32x36xf32>
    %105 = tpu.matmul %103, %104, %cst_123 {dimension_numbers = #tpu.dot_dimension_numbers<[1], [0], [0], [1], [0, 0, 1, 1], [], []>} : vector<32x67xbf16>, vector<67x36xbf16>, vector<32x36xf32> -> vector<32x36xf32>
    %c0_124 = arith.constant 0 : index
    %c0_125 = arith.constant 0 : index
    %106 = vector.load %arg23[%c0_124, %c0_125] : memref<64x324xf32, #tpu.memory_space<vmem>>, vector<32x36xf32>
    tpu.vector_store %arg23[%c0_124, %c0_125], %105 {strides = array<i32>} : memref<64x324xf32, #tpu.memory_space<vmem>>, vector<32x36xf32>,
    %c0_126 = arith.constant 0 : index
    %c0_127 = arith.constant 0 : index
    %107 = vector.load %arg23[%c0_126, %c0_127] : memref<64x324xf32, #tpu.memory_space<vmem>>, vector<32x22xf32>
    %c0_128 = arith.constant 0 : index
    %c1_129 = arith.constant 1 : index
    %108 = vector.load %arg23[%c0_128, %c1_129] : memref<64x324xf32, #tpu.memory_space<vmem>>, vector<32x22xf32>
    %c0_130 = arith.constant 0 : index
    %c2_131 = arith.constant 2 : index
    %109 = vector.load %arg23[%c0_130, %c2_131] : memref<64x324xf32, #tpu.memory_space<vmem>>, vector<32x22xf32>
    %c0_132 = arith.constant 0 : index
    %c6 = arith.constant 6 : index
    %110 = vector.load %arg23[%c0_132, %c6] : memref<64x324xf32, #tpu.memory_space<vmem>>, vector<32x22xf32>
    %c0_133 = arith.constant 0 : index
    %c7 = arith.constant 7 : index
    %111 = vector.load %arg23[%c0_133, %c7] : memref<64x324xf32, #tpu.memory_space<vmem>>, vector<32x22xf32>
    %c0_134 = arith.constant 0 : index
    %c8 = arith.constant 8 : index
    %112 = vector.load %arg23[%c0_134, %c8] : memref<64x324xf32, #tpu.memory_space<vmem>>, vector<32x22xf32>
    %c0_135 = arith.constant 0 : index
    %c12_136 = arith.constant 12 : index
    %113 = vector.load %arg23[%c0_135, %c12_136] : memref<64x324xf32, #tpu.memory_space<vmem>>, vector<32x22xf32>
    %c0_137 = arith.constant 0 : index
    %c13 = arith.constant 13 : index
    %114 = vector.load %arg23[%c0_137, %c13] : memref<64x324xf32, #tpu.memory_space<vmem>>, vector<32x22xf32>
    %c0_138 = arith.constant 0 : index
    %c14 = arith.constant 14 : index
    %115 = vector.load %arg23[%c0_138, %c14] : memref<64x324xf32, #tpu.memory_space<vmem>>, vector<32x22xf32>
    %116 = tpu.concatenate %107, %108, %109, %110, %111, %112, %113, %114, %115 in 0 : vector<32x22xf32>, vector<32x22xf32>, vector<32x22xf32>, vector<32x22xf32>, vector<32x22xf32>, vector<32x22xf32>, vector<32x22xf32>, vector<32x22xf32>, vector<32x22xf32> -> vector<288x22xf32>
    %117 = arith.truncf %116 : vector<288x22xf32> to vector<288x22xbf16>
    %c0_139 = arith.constant 0 : index
    %c0_140 = arith.constant 0 : index
    %118 = vector.load %arg10[%c0_139, %c0_140] : memref<64x288xbf16, #tpu.memory_space<vmem>>, vector<64x288xbf16>
    %cst_141 = arith.constant dense<0.000000e+00> : vector<64x22xf32>
    %119 = tpu.matmul %118, %117, %cst_141 {dimension_numbers = #tpu.dot_dimension_numbers<[1], [0], [0], [1], [0, 0, 1, 1], [], []>} : vector<64x288xbf16>, vector<288x22xbf16>, vector<64x22xf32> -> vector<64x22xf32>
    %c0_142 = arith.constant 0 : index
    %c0_143 = arith.constant 0 : index
    %120 = vector.load %arg11[%c0_142, %c0_143] : memref<64x1xf32, #tpu.memory_space<vmem>>, vector<64x1xf32>
    %121 = vector.broadcast %120 : vector<64x1xf32> to vector<64x22xf32>
    %122 = arith.addf %119, %121 : vector<64x22xf32>
    %cst_144 = arith.constant 0.000000e+00 : f32
    %123 = vector.broadcast %cst_144 : f32 to vector<64x22xf32>
    %124 = arith.maximumf %122, %123 : vector<64x22xf32>
    %125 = arith.truncf %124 : vector<64x22xf32> to vector<64x22xbf16>
    %c0_145 = arith.constant 0 : index
    %c0_146 = arith.constant 0 : index
    %126 = vector.load %arg16[%c0_145, %c0_146] : memref<22x36xbf16, #tpu.memory_space<vmem>>, vector<22x36xbf16>
    %cst_147 = arith.constant dense<0.000000e+00> : vector<64x36xf32>
    %127 = tpu.matmul %125, %126, %cst_147 {dimension_numbers = #tpu.dot_dimension_numbers<[1], [0], [0], [1], [0, 0, 1, 1], [], []>} : vector<64x22xbf16>, vector<22x36xbf16>, vector<64x36xf32> -> vector<64x36xf32>
    %c0_148 = arith.constant 0 : index
    %c0_149 = arith.constant 0 : index
    %128 = vector.load %arg23[%c0_148, %c0_149] : memref<64x324xf32, #tpu.memory_space<vmem>>, vector<64x36xf32>
    tpu.vector_store %arg23[%c0_148, %c0_149], %127 {strides = array<i32>} : memref<64x324xf32, #tpu.memory_space<vmem>>, vector<64x36xf32>,
    %c0_150 = arith.constant 0 : index
    %c0_151 = arith.constant 0 : index
    %129 = vector.load %arg23[%c0_150, %c0_151] : memref<64x324xf32, #tpu.memory_space<vmem>>, vector<64x22xf32>
    %c0_152 = arith.constant 0 : index
    %c1_153 = arith.constant 1 : index
    %130 = vector.load %arg23[%c0_152, %c1_153] : memref<64x324xf32, #tpu.memory_space<vmem>>, vector<64x22xf32>
    %c0_154 = arith.constant 0 : index
    %c2_155 = arith.constant 2 : index
    %131 = vector.load %arg23[%c0_154, %c2_155] : memref<64x324xf32, #tpu.memory_space<vmem>>, vector<64x22xf32>
    %c0_156 = arith.constant 0 : index
    %c6_157 = arith.constant 6 : index
    %132 = vector.load %arg23[%c0_156, %c6_157] : memref<64x324xf32, #tpu.memory_space<vmem>>, vector<64x22xf32>
    %c0_158 = arith.constant 0 : index
    %c7_159 = arith.constant 7 : index
    %133 = vector.load %arg23[%c0_158, %c7_159] : memref<64x324xf32, #tpu.memory_space<vmem>>, vector<64x22xf32>
    %c0_160 = arith.constant 0 : index
    %c8_161 = arith.constant 8 : index
    %134 = vector.load %arg23[%c0_160, %c8_161] : memref<64x324xf32, #tpu.memory_space<vmem>>, vector<64x22xf32>
    %c0_162 = arith.constant 0 : index
    %c12_163 = arith.constant 12 : index
    %135 = vector.load %arg23[%c0_162, %c12_163] : memref<64x324xf32, #tpu.memory_space<vmem>>, vector<64x22xf32>
    %c0_164 = arith.constant 0 : index
    %c13_165 = arith.constant 13 : index
    %136 = vector.load %arg23[%c0_164, %c13_165] : memref<64x324xf32, #tpu.memory_space<vmem>>, vector<64x22xf32>
    %c0_166 = arith.constant 0 : index
    %c14_167 = arith.constant 14 : index
    %137 = vector.load %arg23[%c0_166, %c14_167] : memref<64x324xf32, #tpu.memory_space<vmem>>, vector<64x22xf32>
    %138 = tpu.concatenate %129, %130, %131, %132, %133, %134, %135, %136, %137 in 0 : vector<64x22xf32>, vector<64x22xf32>, vector<64x22xf32>, vector<64x22xf32>, vector<64x22xf32>, vector<64x22xf32>, vector<64x22xf32>, vector<64x22xf32>, vector<64x22xf32> -> vector<576x22xf32>
    %139 = arith.truncf %138 : vector<576x22xf32> to vector<576x22xbf16>
    %c0_168 = arith.constant 0 : index
    %c0_169 = arith.constant 0 : index
    %140 = vector.load %arg12[%c0_168, %c0_169] : memref<64x576xbf16, #tpu.memory_space<vmem>>, vector<64x576xbf16>
    %cst_170 = arith.constant dense<0.000000e+00> : vector<64x22xf32>
    %141 = tpu.matmul %140, %139, %cst_170 {dimension_numbers = #tpu.dot_dimension_numbers<[1], [0], [0], [1], [0, 0, 1, 1], [], []>} : vector<64x576xbf16>, vector<576x22xbf16>, vector<64x22xf32> -> vector<64x22xf32>
    %c0_171 = arith.constant 0 : index
    %c0_172 = arith.constant 0 : index
    %142 = vector.load %arg13[%c0_171, %c0_172] : memref<64x1xf32, #tpu.memory_space<vmem>>, vector<64x1xf32>
    %143 = vector.broadcast %142 : vector<64x1xf32> to vector<64x22xf32>
    %144 = arith.addf %141, %143 : vector<64x22xf32>
    %cst_173 = arith.constant 0.000000e+00 : f32
    %145 = vector.broadcast %cst_173 : f32 to vector<64x22xf32>
    %146 = arith.maximumf %144, %145 : vector<64x22xf32>
    %c0_174 = arith.constant 0 : index
    %c0_175 = arith.constant 0 : index
    %147 = vector.load %arg23[%c0_174, %c0_175] : memref<64x324xf32, #tpu.memory_space<vmem>>, vector<64x22xf32>
    tpu.vector_store %arg23[%c0_174, %c0_175], %146 {strides = array<i32>} : memref<64x324xf32, #tpu.memory_space<vmem>>, vector<64x22xf32>,
    %c0_176 = arith.constant 0 : index
    %c0_177 = arith.constant 0 : index
    %148 = vector.load %arg23[%c0_176, %c0_177] : memref<64x324xf32, #tpu.memory_space<vmem>>, vector<64x15xf32>
    %c0_178 = arith.constant 0 : index
    %c1_179 = arith.constant 1 : index
    %149 = vector.load %arg23[%c0_178, %c1_179] : memref<64x324xf32, #tpu.memory_space<vmem>>, vector<64x15xf32>
    %150 = arith.maximumf %148, %149 : vector<64x15xf32>
    %c0_180 = arith.constant 0 : index
    %c6_181 = arith.constant 6 : index
    %151 = vector.load %arg23[%c0_180, %c6_181] : memref<64x324xf32, #tpu.memory_space<vmem>>, vector<64x15xf32>
    %152 = arith.maximumf %150, %151 : vector<64x15xf32>
    %c0_182 = arith.constant 0 : index
    %c7_183 = arith.constant 7 : index
    %153 = vector.load %arg23[%c0_182, %c7_183] : memref<64x324xf32, #tpu.memory_space<vmem>>, vector<64x15xf32>
    %154 = arith.maximumf %152, %153 : vector<64x15xf32>
    %155 = arith.truncf %154 : vector<64x15xf32> to vector<64x15xbf16>
    %c0_184 = arith.constant 0 : index
    %c0_185 = arith.constant 0 : index
    %156 = vector.load %arg19[%c0_184, %c0_185] : memref<15x128xbf16, #tpu.memory_space<vmem>>, vector<15x128xbf16>
    %cst_186 = arith.constant dense<0.000000e+00> : vector<64x128xf32>
    %157 = tpu.matmul %155, %156, %cst_186 {dimension_numbers = #tpu.dot_dimension_numbers<[1], [0], [0], [1], [0, 0, 1, 1], [], []>} : vector<64x15xbf16>, vector<15x128xbf16>, vector<64x128xf32> -> vector<64x128xf32>
    %c0_187 = arith.constant 0 : index
    %c0_188 = arith.constant 0 : index
    %158 = vector.load %arg20[%c0_187, %c0_188] : memref<8x64xbf16, #tpu.memory_space<vmem>>, vector<8x64xbf16>
    %159 = arith.truncf %157 : vector<64x128xf32> to vector<64x128xbf16>
    %cst_189 = arith.constant dense<0.000000e+00> : vector<8x128xf32>
    %160 = tpu.matmul %158, %159, %cst_189 {dimension_numbers = #tpu.dot_dimension_numbers<[1], [0], [0], [1], [0, 0, 1, 1], [], []>} : vector<8x64xbf16>, vector<64x128xbf16>, vector<8x128xf32> -> vector<8x128xf32>
    %c0_190 = arith.constant 0 : index
    %c0_191 = arith.constant 0 : index
    %161 = vector.load %arg21[%c0_190, %c0_191] : memref<8x1xf32, #tpu.memory_space<vmem>>, vector<8x1xf32>
    %162 = vector.broadcast %161 : vector<8x1xf32> to vector<8x128xf32>
    %163 = arith.addf %160, %162 : vector<8x128xf32>
    %c0_192 = arith.constant 0 : index
    %c0_193 = arith.constant 0 : index
    %c0_194 = arith.constant 0 : index
    %164 = vector.load %arg22[%c0_192, %c0_193, %c0_194] : memref<1x8x128xf32, #tpu.memory_space<vmem>>, vector<1x8x128xf32>
    %165 = vector.shape_cast %164 : vector<1x8x128xf32> to vector<8x128xf32>
    %166 = vector.shape_cast %163 : vector<8x128xf32> to vector<1x8x128xf32>
    tpu.vector_store %arg22[%c0_192, %c0_193, %c0_194], %166 {strides = array<i32>} : memref<1x8x128xf32, #tpu.memory_space<vmem>>, vector<1x8x128xf32>,
    return
  }
  func.func @transform_0(%arg0: i32) -> (i32, i32, i32) {
    %c0_i32 = arith.constant 0 : i32
    %c0_i32_0 = arith.constant 0 : i32
    %c0_i32_1 = arith.constant 0 : i32
    return %arg0, %c0_i32, %c0_i32_0 : i32, i32, i32
  }
  func.func @transform_1(%arg0: i32) -> (i32, i32) {
    %c0_i32 = arith.constant 0 : i32
    %c0_i32_0 = arith.constant 0 : i32
    %c0_i32_1 = arith.constant 0 : i32
    return %c0_i32, %c0_i32_0 : i32, i32
  }
  func.func @transform_2(%arg0: i32) -> (i32, i32) {
    %c0_i32 = arith.constant 0 : i32
    %c0_i32_0 = arith.constant 0 : i32
    %c0_i32_1 = arith.constant 0 : i32
    return %c0_i32, %c0_i32_0 : i32, i32
  }
  func.func @transform_3(%arg0: i32) -> (i32, i32) {
    %c0_i32 = arith.constant 0 : i32
    %c0_i32_0 = arith.constant 0 : i32
    %c0_i32_1 = arith.constant 0 : i32
    return %c0_i32, %c0_i32_0 : i32, i32
  }
  func.func @transform_4(%arg0: i32) -> (i32, i32) {
    %c0_i32 = arith.constant 0 : i32
    %c0_i32_0 = arith.constant 0 : i32
    %c0_i32_1 = arith.constant 0 : i32
    return %c0_i32, %c0_i32_0 : i32, i32
  }
  func.func @transform_5(%arg0: i32) -> (i32, i32) {
    %c0_i32 = arith.constant 0 : i32
    %c0_i32_0 = arith.constant 0 : i32
    %c0_i32_1 = arith.constant 0 : i32
    return %c0_i32, %c0_i32_0 : i32, i32
  }
  func.func @transform_6(%arg0: i32) -> (i32, i32) {
    %c0_i32 = arith.constant 0 : i32
    %c0_i32_0 = arith.constant 0 : i32
    %c0_i32_1 = arith.constant 0 : i32
    return %c0_i32, %c0_i32_0 : i32, i32
  }
  func.func @transform_7(%arg0: i32) -> (i32, i32) {
    %c0_i32 = arith.constant 0 : i32
    %c0_i32_0 = arith.constant 0 : i32
    %c0_i32_1 = arith.constant 0 : i32
    return %c0_i32, %c0_i32_0 : i32, i32
  }
  func.func @transform_8(%arg0: i32) -> (i32, i32) {
    %c0_i32 = arith.constant 0 : i32
    %c0_i32_0 = arith.constant 0 : i32
    %c0_i32_1 = arith.constant 0 : i32
    return %c0_i32, %c0_i32_0 : i32, i32
  }
  func.func @transform_9(%arg0: i32) -> (i32, i32) {
    %c0_i32 = arith.constant 0 : i32
    %c0_i32_0 = arith.constant 0 : i32
    %c0_i32_1 = arith.constant 0 : i32
    return %c0_i32, %c0_i32_0 : i32, i32
  }
  func.func @transform_10(%arg0: i32) -> (i32, i32) {
    %c0_i32 = arith.constant 0 : i32
    %c0_i32_0 = arith.constant 0 : i32
    %c0_i32_1 = arith.constant 0 : i32
    return %c0_i32, %c0_i32_0 : i32, i32
  }
  func.func @transform_11(%arg0: i32) -> (i32, i32) {
    %c0_i32 = arith.constant 0 : i32
    %c0_i32_0 = arith.constant 0 : i32
    %c0_i32_1 = arith.constant 0 : i32
    return %c0_i32, %c0_i32_0 : i32, i32
  }
  func.func @transform_12(%arg0: i32) -> (i32, i32) {
    %c0_i32 = arith.constant 0 : i32
    %c0_i32_0 = arith.constant 0 : i32
    %c0_i32_1 = arith.constant 0 : i32
    return %c0_i32, %c0_i32_0 : i32, i32
  }
  func.func @transform_13(%arg0: i32) -> (i32, i32) {
    %c0_i32 = arith.constant 0 : i32
    %c0_i32_0 = arith.constant 0 : i32
    %c0_i32_1 = arith.constant 0 : i32
    return %c0_i32, %c0_i32_0 : i32, i32
  }
  func.func @transform_14(%arg0: i32) -> (i32, i32) {
    %c0_i32 = arith.constant 0 : i32
    %c0_i32_0 = arith.constant 0 : i32
    %c0_i32_1 = arith.constant 0 : i32
    return %c0_i32, %c0_i32_0 : i32, i32
  }
  func.func @transform_15(%arg0: i32) -> (i32, i32) {
    %c0_i32 = arith.constant 0 : i32
    %c0_i32_0 = arith.constant 0 : i32
    %c0_i32_1 = arith.constant 0 : i32
    return %c0_i32, %c0_i32_0 : i32, i32
  }
  func.func @transform_16(%arg0: i32) -> (i32, i32) {
    %c0_i32 = arith.constant 0 : i32
    %c0_i32_0 = arith.constant 0 : i32
    %c0_i32_1 = arith.constant 0 : i32
    return %c0_i32, %c0_i32_0 : i32, i32
  }
  func.func @transform_17(%arg0: i32) -> (i32, i32) {
    %c0_i32 = arith.constant 0 : i32
    %c0_i32_0 = arith.constant 0 : i32
    %c0_i32_1 = arith.constant 0 : i32
    return %c0_i32, %c0_i32_0 : i32, i32
  }
  func.func @transform_18(%arg0: i32) -> (i32, i32) {
    %c0_i32 = arith.constant 0 : i32
    %c0_i32_0 = arith.constant 0 : i32
    %c0_i32_1 = arith.constant 0 : i32
    return %c0_i32, %c0_i32_0 : i32, i32
  }
  func.func @transform_19(%arg0: i32) -> (i32, i32) {
    %c0_i32 = arith.constant 0 : i32
    %c0_i32_0 = arith.constant 0 : i32
    %c0_i32_1 = arith.constant 0 : i32
    return %c0_i32, %c0_i32_0 : i32, i32
  }
  func.func @transform_20(%arg0: i32) -> (i32, i32) {
    %c0_i32 = arith.constant 0 : i32
    %c0_i32_0 = arith.constant 0 : i32
    %c0_i32_1 = arith.constant 0 : i32
    return %c0_i32, %c0_i32_0 : i32, i32
  }
  func.func @transform_21(%arg0: i32) -> (i32, i32, i32) {
    %c0_i32 = arith.constant 0 : i32
    %c0_i32_0 = arith.constant 0 : i32
    %c0_i32_1 = arith.constant 0 : i32
    return %arg0, %c0_i32, %c0_i32_0 : i32, i32, i32
  }
}

</mosaic_0001>

<llo_original>
// kernel: tpu_custom_call.1
$region0: #{tpu_custom_call.1}
  #allocation0 [shape = 'u32[]', space=smem, size = 0x4, offset = 0x4, fixed_abs, tag = 'smem constant byte address 0x4 - core index']
  #allocation1 [shape = 'u32[144,128]{1,0:T(1,128)}', space=vmem, size = 0x12000, scoped, tag = 'internal scratch']
  #allocation2 [shape = 'f32[64,324]{1,0:T(8,128)}', space=vmem, size = 0x18000, scoped, tag = 'scratch operand']
  %s0 = inlined_call_operand.hbm [shape: f32[2,8,324], index: 0, kind: input, shape index: {}]
  %s1 = inlined_call_operand.hbm [shape: bf16[16,72], index: 1, kind: input, shape index: {}]
  %s2 = inlined_call_operand.vmem [shape: f32[16,1], index: 2, kind: input, shape index: {}]
  %s3 = inlined_call_operand.hbm [shape: bf16[16,144], index: 3, kind: input, shape index: {}]
  %s4 = inlined_call_operand.vmem [shape: f32[16,1], index: 4, kind: input, shape index: {}]
  %s5 = inlined_call_operand.hbm [shape: bf16[32,144], index: 5, kind: input, shape index: {}]
  %s6 = inlined_call_operand.vmem [shape: f32[32,1], index: 6, kind: input, shape index: {}]
  %s7 = inlined_call_operand.hbm [shape: bf16[32,288], index: 7, kind: input, shape index: {}]
  %s8 = inlined_call_operand.vmem [shape: f32[32,1], index: 8, kind: input, shape index: {}]
  %s9 = inlined_call_operand.hbm [shape: bf16[64,288], index: 9, kind: input, shape index: {}]
  %s10 = inlined_call_operand.vmem [shape: f32[64,1], index: 10, kind: input, shape index: {}]
  %s11 = inlined_call_operand.vmem [shape: bf16[64,576], index: 11, kind: input, shape index: {}]
  %s12 = inlined_call_operand.vmem [shape: f32[64,1], index: 12, kind: input, shape index: {}]
  %s13 = inlined_call_operand.hbm [shape: bf16[286,324], index: 13, kind: input, shape index: {}]
  %s14 = inlined_call_operand.vmem [shape: bf16[78,100], index: 14, kind: input, shape index: {}]
  %s15 = inlined_call_operand.hbm [shape: bf16[22,36], index: 15, kind: input, shape index: {}]
  %s16 = inlined_call_operand.vmem [shape: bf16[267,100], index: 16, kind: input, shape index: {}]
  %s17 = inlined_call_operand.vmem [shape: bf16[67,36], index: 17, kind: input, shape index: {}]
  %s18 = inlined_call_operand.hbm [shape: bf16[15,128], index: 18, kind: input, shape index: {}]
  %s19 = inlined_call_operand.vmem [shape: bf16[8,64], index: 19, kind: input, shape index: {}]
  %s20 = inlined_call_operand.vmem [shape: f32[8,1], index: 20, kind: input, shape index: {}]
  %s21 = inlined_call_operand.hbm [shape: f32[2,8,128], index: 21, kind: output, shape index: {}]
  %s22 = sld [smem:[#allocation0]]
  $region153: #{tpu_custom_call.1} parent=0
    _
  %s24 = ssub.s32 1, %s22
  %s25 = scalar_select 0, %s24, %s22
  $region1: #{tpu_custom_call.1} parent=0
    #allocation3 [shape = 'u8[24576]{0}', space=vmem, size = 0x6000, scoped, tag = 'input window, operand 0']
    #allocation4 [shape = 's32[2]{0}', space=sflag, size = 0x8, scoped, tag = 'scoped memory for tpu_custom_call.1']
    #allocation5 [shape = 's32[2]{0}', space=sflag, size = 0x8, scoped, tag = 'scoped memory for tpu_custom_call.1']
    #allocation6 [shape = 'u8[4096]{0}', space=vmem, size = 0x1000, scoped, tag = 'input window, operand 1, single buffered']
    #allocation7 [shape = 's32[1]{0}', space=sflag, size = 0x4, scoped, tag = 'scoped memory for tpu_custom_call.1']
    #allocation8 [shape = 'u8[8192]{0}', space=vmem, size = 0x2000, scoped, tag = 'input window, operand 3, single buffered']
    #allocation9 [shape = 'u8[16384]{0}', space=vmem, size = 0x4000, scoped, tag = 'input window, operand 5, single buffered']
    #allocation10 [shape = 's32[1]{0}', space=sflag, size = 0x4, scoped, tag = 'scoped memory for tpu_custom_call.1']
    #allocation11 [shape = 'u8[24576]{0}', space=vmem, size = 0x6000, scoped, tag = 'input window, operand 7, single buffered']
    #allocation12 [shape = 'u8[49152]{0}', space=vmem, size = 0xc000, scoped, tag = 'input window, operand 9, single buffered']
    #allocation13 [shape = 's32[1]{0}', space=sflag, size = 0x4, scoped, tag = 'scoped memory for tpu_custom_call.1']
    #allocation14 [shape = 'u8[221184]{0}', space=vmem, size = 0x36000, scoped, tag = 'input window, operand 13, single buffered']
    #allocation15 [shape = 'u8[6144]{0}', space=vmem, size = 0x1800, scoped, tag = 'input window, operand 15, single buffered']
    #allocation16 [shape = 's32[1]{0}', space=sflag, size = 0x4, scoped, tag = 'scoped memory for tpu_custom_call.1']
    #allocation17 [shape = 'u8[4096]{0}', space=vmem, size = 0x1000, scoped, tag = 'input window, operand 18, single buffered']
    #allocation18 [shape = 'u8[8192]{0}', space=vmem, size = 0x2000, scoped, tag = 'output window, operand 0']
    %26 = vsyncpa [#allocation4], 0
    %s27 = scalar_lea.sflag [#allocation4], 1
    %28 = vsyncpa %s27, 0
    %29 = vsyncpa [#allocation7], 0
    %30 = vsyncpa [#allocation10], 0
    %31 = vsyncpa [#allocation13], 0
    %32 = vsyncpa [#allocation16], 0
    %33 = vsyncpa [#allocation5], 0
    %s34 = scalar_lea.sflag [#allocation5], 1
    %35 = vsyncpa %s34, 0
    loop: start=0, step=1, limit=4
    $region2: #{tpu_custom_call.1} parent=1 // loop_pre_header
      _
    $region3: #{tpu_custom_call.1} parent=1 // loop_header
      %s37 = sphi 0, %s41
      %p38 = scmp.ge.s32.totalorder %s37, 4
      %s47 = sphi 0, %s49
      %s50 = sphi 0, %s47
      %s51 = sphi 0, %s50
      %s67 = sphi 0, %s51
      %s71 = sphi 0, %s71
      %s73 = sphi 0, %s71
      %s74 = sphi 0, %s73
      %s88 = sphi 0, %s74
      %s92 = sphi 0, %s92
      %s94 = sphi 0, %s92
      %s95 = sphi 0, %s94
      %s109 = sphi 0, %s95
      %s113 = sphi 0, %s113
      %s115 = sphi 0, %s113
      %s116 = sphi 0, %s115
      %s130 = sphi 0, %s116
      %s134 = sphi 0, %s134
      %s136 = sphi 0, %s134
      %s137 = sphi 0, %s136
      %s151 = sphi 0, %s137
      %s155 = sphi 0, %s155
      %s157 = sphi 0, %s155
      %s158 = sphi 0, %s157
      %s172 = sphi 0, %s158
      %s176 = sphi 0, %s176
      %s178 = sphi 0, %s176
      %s179 = sphi 0, %s178
      %s193 = sphi 0, %s179
      %s197 = sphi 0, %s197
      %s199 = sphi 0, %s197
      %s200 = sphi 0, %s199
      %s214 = sphi 0, %s200
      %s218 = sphi 0, %s218
      %s220 = sphi 0, %s218
      %s221 = sphi 0, %s220
      %s235 = sphi 0, %s221
      %s239 = sphi 0, %s239
      %s241 = sphi 0, %s239
      %s242 = sphi 0, %s241
      %s256 = sphi 0, %s242
      %s260 = sphi 0, %s260
      %s262 = sphi 0, %s260
      %s263 = sphi 0, %s262
      %s277 = sphi 0, %s263
      %s281 = sphi 0, %s281
      %s283 = sphi 0, %s281
      %s284 = sphi 0, %s283
      %s298 = sphi 0, %s284
      %s302 = sphi 0, %s302
      %s304 = sphi 0, %s302
      %s305 = sphi 0, %s304
      %s319 = sphi 0, %s305
      %s323 = sphi 0, %s323
      %s325 = sphi 0, %s323
      %s326 = sphi 0, %s325
      %s340 = sphi 0, %s326
      %s344 = sphi 0, %s344
      %s346 = sphi 0, %s344
      %s347 = sphi 0, %s346
      %s361 = sphi 0, %s347
      %s365 = sphi 0, %s365
      %s367 = sphi 0, %s365
      %s368 = sphi 0, %s367
      %s382 = sphi 0, %s368
      %s386 = sphi 0, %s386
      %s388 = sphi 0, %s386
      %s389 = sphi 0, %s388
      %s403 = sphi 0, %s389
      %s407 = sphi 0, %s407
      %s409 = sphi 0, %s407
      %s410 = sphi 0, %s409
      %s424 = sphi 0, %s410
      %s428 = sphi 0, %s428
      %s430 = sphi 0, %s428
      %s431 = sphi 0, %s430
      %s445 = sphi 0, %s431
      %s449 = sphi 0, %s449
      %s451 = sphi 0, %s449
      %s452 = sphi 0, %s451
      %s466 = sphi 0, %s452
      %s470 = sphi 0, %s470
      %s472 = sphi 0, %s470
      %s473 = sphi 0, %s472
      %s487 = sphi 0, %s473
      %s493 = sphi 0, %s495
      %s496 = sphi 0, %s493
      %s497 = sphi 0, %s496
      %s513 = sphi 0, %s497
    $region4: #{tpu_custom_call.1} parent=1 // loop_header_branch
      %40 = sbr.rel (%p38) target = $region8
    $region5: #{tpu_custom_call.1} parent=1 // loop_body
      %s42 = ssub.s32 %s37, 1
      %s43 = ssub.s32 %s37, 2
      %s44 = sadd.s32 %s37, 1
      %s45 = ssub.s32 %s37, %s44
      %p46 = scmp.eq.s32.totalorder %s45, 0
      %s48 = sadd.s32 %s47, 1
      %s49 = scalar_select %p46, %s47, %s48
      %p52 = pneg %p46
      %p53 = scmp.eq.s32.totalorder %s37, 1
      %p54 = por %p52, %p53
      %p55 = scmp.ne.s32.totalorder %s47, %s50
      %p56 = scmp.eq.s32.totalorder %s37, 0
      %p57 = por %p55, %p56
      %p58 = scmp.ne.s32.totalorder %s47, %s50
      %p59 = scmp.eq.s32.totalorder %s42, 1
      %p60 = por %p58, %p59
      %p61 = scmp.ne.s32.totalorder %s50, %s51
      %p62 = scmp.eq.s32.totalorder %s42, 0
      %p63 = por %p61, %p62
      %p64 = scmp.ne.s32.totalorder %s50, %s51
      %p65 = scmp.eq.s32.totalorder %s43, 1
      %p66 = por %p64, %p65
      %p68 = scmp.ne.s32.totalorder %s51, %s67
      %p69 = scmp.eq.s32.totalorder %s43, 0
      %p70 = por %p68, %p69
      %s72 = sadd.s32 %s71, 1
      %p75 = scmp.eq.s32.totalorder %s37, 1
      %p76 = scmp.ne.s32.totalorder %s71, %s73
      %p77 = scmp.eq.s32.totalorder %s37, 0
      %p78 = por %p76, %p77
      %p79 = scmp.ne.s32.totalorder %s71, %s73
      %p80 = scmp.eq.s32.totalorder %s42, 1
      %p81 = por %p79, %p80
      %p82 = scmp.ne.s32.totalorder %s73, %s74
      %p83 = scmp.eq.s32.totalorder %s42, 0
      %p84 = por %p82, %p83
      %p85 = scmp.ne.s32.totalorder %s73, %s74
      %p86 = scmp.eq.s32.totalorder %s43, 1
      %p87 = por %p85, %p86
      %p89 = scmp.ne.s32.totalorder %s74, %s88
      %p90 = scmp.eq.s32.totalorder %s43, 0
      %p91 = por %p89, %p90
      %s93 = sadd.s32 %s92, 1
      %p96 = scmp.eq.s32.totalorder %s37, 1
      %p97 = scmp.ne.s32.totalorder %s92, %s94
      %p98 = scmp.eq.s32.totalorder %s37, 0
      %p99 = por %p97, %p98
      %p100 = scmp.ne.s32.totalorder %s92, %s94
      %p101 = scmp.eq.s32.totalorder %s42, 1
      %p102 = por %p100, %p101
      %p103 = scmp.ne.s32.totalorder %s94, %s95
      %p104 = scmp.eq.s32.totalorder %s42, 0
      %p105 = por %p103, %p104
      %p106 = scmp.ne.s32.totalorder %s94, %s95
      %p107 = scmp.eq.s32.totalorder %s43, 1
      %p108 = por %p106, %p107
      %p110 = scmp.ne.s32.totalorder %s95, %s109
      %p111 = scmp.eq.s32.totalorder %s43, 0
      %p112 = por %p110, %p111
      %s114 = sadd.s32 %s113, 1
      %p117 = scmp.eq.s32.totalorder %s37, 1
      %p118 = scmp.ne.s32.totalorder %s113, %s115
      %p119 = scmp.eq.s32.totalorder %s37, 0
      %p120 = por %p118, %p119
      %p121 = scmp.ne.s32.totalorder %s113, %s115
      %p122 = scmp.eq.s32.totalorder %s42, 1
      %p123 = por %p121, %p122
      %p124 = scmp.ne.s32.totalorder %s115, %s116
      %p125 = scmp.eq.s32.totalorder %s42, 0
      %p126 = por %p124, %p125
      %p127 = scmp.ne.s32.totalorder %s115, %s116
      %p128 = scmp.eq.s32.totalorder %s43, 1
      %p129 = por %p127, %p128
      %p131 = scmp.ne.s32.totalorder %s116, %s130
      %p132 = scmp.eq.s32.totalorder %s43, 0
      %p133 = por %p131, %p132
      %s135 = sadd.s32 %s134, 1
      %p138 = scmp.eq.s32.totalorder %s37, 1
      %p139 = scmp.ne.s32.totalorder %s134, %s136
      %p140 = scmp.eq.s32.totalorder %s37, 0
      %p141 = por %p139, %p140
      %p142 = scmp.ne.s32.totalorder %s134, %s136
      %p143 = scmp.eq.s32.totalorder %s42, 1
      %p144 = por %p142, %p143
      %p145 = scmp.ne.s32.totalorder %s136, %s137
      %p146 = scmp.eq.s32.totalorder %s42, 0
      %p147 = por %p145, %p146
      %p148 = scmp.ne.s32.totalorder %s136, %s137
      %p149 = scmp.eq.s32.totalorder %s43, 1
      %p150 = por %p148, %p149
      %p152 = scmp.ne.s32.totalorder %s137, %s151
      %p153 = scmp.eq.s32.totalorder %s43, 0
      %p154 = por %p152, %p153
      %s156 = sadd.s32 %s155, 1
      %p159 = scmp.eq.s32.totalorder %s37, 1
      %p160 = scmp.ne.s32.totalorder %s155, %s157
      %p161 = scmp.eq.s32.totalorder %s37, 0
      %p162 = por %p160, %p161
      %p163 = scmp.ne.s32.totalorder %s155, %s157
      %p164 = scmp.eq.s32.totalorder %s42, 1
      %p165 = por %p163, %p164
      %p166 = scmp.ne.s32.totalorder %s157, %s158
      %p167 = scmp.eq.s32.totalorder %s42, 0
      %p168 = por %p166, %p167
      %p169 = scmp.ne.s32.totalorder %s157, %s158
      %p170 = scmp.eq.s32.totalorder %s43, 1
      %p171 = por %p169, %p170
      %p173 = scmp.ne.s32.totalorder %s158, %s172
      %p174 = scmp.eq.s32.totalorder %s43, 0
      %p175 = por %p173, %p174
      %s177 = sadd.s32 %s176, 1
      %p180 = scmp.eq.s32.totalorder %s37, 1
      %p181 = scmp.ne.s32.totalorder %s176, %s178
      %p182 = scmp.eq.s32.totalorder %s37, 0
      %p183 = por %p181, %p182
      %p184 = scmp.ne.s32.totalorder %s176, %s178
      %p185 = scmp.eq.s32.totalorder %s42, 1
      %p186 = por %p184, %p185
      %p187 = scmp.ne.s32.totalorder %s178, %s179
      %p188 = scmp.eq.s32.totalorder %s42, 0
      %p189 = por %p187, %p188
      %p190 = scmp.ne.s32.totalorder %s178, %s179
      %p191 = scmp.eq.s32.totalorder %s43, 1
      %p192 = por %p190, %p191
      %p194 = scmp.ne.s32.totalorder %s179, %s193
      %p195 = scmp.eq.s32.totalorder %s43, 0
      %p196 = por %p194, %p195
      %s198 = sadd.s32 %s197, 1
      %p201 = scmp.eq.s32.totalorder %s37, 1
      %p202 = scmp.ne.s32.totalorder %s197, %s199
      %p203 = scmp.eq.s32.totalorder %s37, 0
      %p204 = por %p202, %p203
      %p205 = scmp.ne.s32.totalorder %s197, %s199
      %p206 = scmp.eq.s32.totalorder %s42, 1
      %p207 = por %p205, %p206
      %p208 = scmp.ne.s32.totalorder %s199, %s200
      %p209 = scmp.eq.s32.totalorder %s42, 0
      %p210 = por %p208, %p209
      %p211 = scmp.ne.s32.totalorder %s199, %s200
      %p212 = scmp.eq.s32.totalorder %s43, 1
      %p213 = por %p211, %p212
      %p215 = scmp.ne.s32.totalorder %s200, %s214
      %p216 = scmp.eq.s32.totalorder %s43, 0
      %p217 = por %p215, %p216
      %s219 = sadd.s32 %s218, 1
      %p222 = scmp.eq.s32.totalorder %s37, 1
      %p223 = scmp.ne.s32.totalorder %s218, %s220
      %p224 = scmp.eq.s32.totalorder %s37, 0
      %p225 = por %p223, %p224
      %p226 = scmp.ne.s32.totalorder %s218, %s220
      %p227 = scmp.eq.s32.totalorder %s42, 1
      %p228 = por %p226, %p227
      %p229 = scmp.ne.s32.totalorder %s220, %s221
      %p230 = scmp.eq.s32.totalorder %s42, 0
      %p231 = por %p229, %p230
      %p232 = scmp.ne.s32.totalorder %s220, %s221
      %p233 = scmp.eq.s32.totalorder %s43, 1
      %p234 = por %p232, %p233
      %p236 = scmp.ne.s32.totalorder %s221, %s235
      %p237 = scmp.eq.s32.totalorder %s43, 0
      %p238 = por %p236, %p237
      %s240 = sadd.s32 %s239, 1
      %p243 = scmp.eq.s32.totalorder %s37, 1
      %p244 = scmp.ne.s32.totalorder %s239, %s241
      %p245 = scmp.eq.s32.totalorder %s37, 0
      %p246 = por %p244, %p245
      %p247 = scmp.ne.s32.totalorder %s239, %s241
      %p248 = scmp.eq.s32.totalorder %s42, 1
      %p249 = por %p247, %p248
      %p250 = scmp.ne.s32.totalorder %s241, %s242
      %p251 = scmp.eq.s32.totalorder %s42, 0
      %p252 = por %p250, %p251
      %p253 = scmp.ne.s32.totalorder %s241, %s242
      %p254 = scmp.eq.s32.totalorder %s43, 1
      %p255 = por %p253, %p254
      %p257 = scmp.ne.s32.totalorder %s242, %s256
      %p258 = scmp.eq.s32.totalorder %s43, 0
      %p259 = por %p257, %p258
      %s261 = sadd.s32 %s260, 1
      %p264 = scmp.eq.s32.totalorder %s37, 1
      %p265 = scmp.ne.s32.totalorder %s260, %s262
      %p266 = scmp.eq.s32.totalorder %s37, 0
      %p267 = por %p265, %p266
      %p268 = scmp.ne.s32.totalorder %s260, %s262
      %p269 = scmp.eq.s32.totalorder %s42, 1
      %p270 = por %p268, %p269
      %p271 = scmp.ne.s32.totalorder %s262, %s263
      %p272 = scmp.eq.s32.totalorder %s42, 0
      %p273 = por %p271, %p272
      %p274 = scmp.ne.s32.totalorder %s262, %s263
      %p275 = scmp.eq.s32.totalorder %s43, 1
      %p276 = por %p274, %p275
      %p278 = scmp.ne.s32.totalorder %s263, %s277
      %p279 = scmp.eq.s32.totalorder %s43, 0
      %p280 = por %p278, %p279
      %s282 = sadd.s32 %s281, 1
      %p285 = scmp.eq.s32.totalorder %s37, 1
      %p286 = scmp.ne.s32.totalorder %s281, %s283
      %p287 = scmp.eq.s32.totalorder %s37, 0
      %p288 = por %p286, %p287
      %p289 = scmp.ne.s32.totalorder %s281, %s283
      %p290 = scmp.eq.s32.totalorder %s42, 1
      %p291 = por %p289, %p290
      %p292 = scmp.ne.s32.totalorder %s283, %s284
      %p293 = scmp.eq.s32.totalorder %s42, 0
      %p294 = por %p292, %p293
      %p295 = scmp.ne.s32.totalorder %s283, %s284
      %p296 = scmp.eq.s32.totalorder %s43, 1
      %p297 = por %p295, %p296
      %p299 = scmp.ne.s32.totalorder %s284, %s298
      %p300 = scmp.eq.s32.totalorder %s43, 0
      %p301 = por %p299, %p300
      %s303 = sadd.s32 %s302, 1
      %p306 = scmp.eq.s32.totalorder %s37, 1
      %p307 = scmp.ne.s32.totalorder %s302, %s304
      %p308 = scmp.eq.s32.totalorder %s37, 0
      %p309 = por %p307, %p308
      %p310 = scmp.ne.s32.totalorder %s302, %s304
      %p311 = scmp.eq.s32.totalorder %s42, 1
      %p312 = por %p310, %p311
      %p313 = scmp.ne.s32.totalorder %s304, %s305
      %p314 = scmp.eq.s32.totalorder %s42, 0
      %p315 = por %p313, %p314
      %p316 = scmp.ne.s32.totalorder %s304, %s305
      %p317 = scmp.eq.s32.totalorder %s43, 1
      %p318 = por %p316, %p317
      %p320 = scmp.ne.s32.totalorder %s305, %s319
      %p321 = scmp.eq.s32.totalorder %s43, 0
      %p322 = por %p320, %p321
      %s324 = sadd.s32 %s323, 1
      %p327 = scmp.eq.s32.totalorder %s37, 1
      %p328 = scmp.ne.s32.totalorder %s323, %s325
      %p329 = scmp.eq.s32.totalorder %s37, 0
      %p330 = por %p328, %p329
      %p331 = scmp.ne.s32.totalorder %s323, %s325
      %p332 = scmp.eq.s32.totalorder %s42, 1
      %p333 = por %p331, %p332
      %p334 = scmp.ne.s32.totalorder %s325, %s326
      %p335 = scmp.eq.s32.totalorder %s42, 0
      %p336 = por %p334, %p335
      %p337 = scmp.ne.s32.totalorder %s325, %s326
      %p338 = scmp.eq.s32.totalorder %s43, 1
      %p339 = por %p337, %p338
      %p341 = scmp.ne.s32.totalorder %s326, %s340
      %p342 = scmp.eq.s32.totalorder %s43, 0
      %p343 = por %p341, %p342
      %s345 = sadd.s32 %s344, 1
      %p348 = scmp.eq.s32.totalorder %s37, 1
      %p349 = scmp.ne.s32.totalorder %s344, %s346
      %p350 = scmp.eq.s32.totalorder %s37, 0
      %p351 = por %p349, %p350
      %p352 = scmp.ne.s32.totalorder %s344, %s346
      %p353 = scmp.eq.s32.totalorder %s42, 1
      %p354 = por %p352, %p353
      %p355 = scmp.ne.s32.totalorder %s346, %s347
      %p356 = scmp.eq.s32.totalorder %s42, 0
      %p357 = por %p355, %p356
      %p358 = scmp.ne.s32.totalorder %s346, %s347
      %p359 = scmp.eq.s32.totalorder %s43, 1
      %p360 = por %p358, %p359
      %p362 = scmp.ne.s32.totalorder %s347, %s361
      %p363 = scmp.eq.s32.totalorder %s43, 0
      %p364 = por %p362, %p363
      %s366 = sadd.s32 %s365, 1
      %p369 = scmp.eq.s32.totalorder %s37, 1
      %p370 = scmp.ne.s32.totalorder %s365, %s367
      %p371 = scmp.eq.s32.totalorder %s37, 0
      %p372 = por %p370, %p371
      %p373 = scmp.ne.s32.totalorder %s365, %s367
      %p374 = scmp.eq.s32.totalorder %s42, 1
      %p375 = por %p373, %p374
      %p376 = scmp.ne.s32.totalorder %s367, %s368
      %p377 = scmp.eq.s32.totalorder %s42, 0
      %p378 = por %p376, %p377
      %p379 = scmp.ne.s32.totalorder %s367, %s368
      %p380 = scmp.eq.s32.totalorder %s43, 1
      %p381 = por %p379, %p380
      %p383 = scmp.ne.s32.totalorder %s368, %s382
      %p384 = scmp.eq.s32.totalorder %s43, 0
      %p385 = por %p383, %p384
      %s387 = sadd.s32 %s386, 1
      %p390 = scmp.eq.s32.totalorder %s37, 1
      %p391 = scmp.ne.s32.totalorder %s386, %s388
      %p392 = scmp.eq.s32.totalorder %s37, 0
      %p393 = por %p391, %p392
      %p394 = scmp.ne.s32.totalorder %s386, %s388
      %p395 = scmp.eq.s32.totalorder %s42, 1
      %p396 = por %p394, %p395
      %p397 = scmp.ne.s32.totalorder %s388, %s389
      %p398 = scmp.eq.s32.totalorder %s42, 0
      %p399 = por %p397, %p398
      %p400 = scmp.ne.s32.totalorder %s388, %s389
      %p401 = scmp.eq.s32.totalorder %s43, 1
      %p402 = por %p400, %p401
      %p404 = scmp.ne.s32.totalorder %s389, %s403
      %p405 = scmp.eq.s32.totalorder %s43, 0
      %p406 = por %p404, %p405
      %s408 = sadd.s32 %s407, 1
      %p411 = scmp.eq.s32.totalorder %s37, 1
      %p412 = scmp.ne.s32.totalorder %s407, %s409
      %p413 = scmp.eq.s32.totalorder %s37, 0
      %p414 = por %p412, %p413
      %p415 = scmp.ne.s32.totalorder %s407, %s409
      %p416 = scmp.eq.s32.totalorder %s42, 1
      %p417 = por %p415, %p416
      %p418 = scmp.ne.s32.totalorder %s409, %s410
      %p419 = scmp.eq.s32.totalorder %s42, 0
      %p420 = por %p418, %p419
      %p421 = scmp.ne.s32.totalorder %s409, %s410
      %p422 = scmp.eq.s32.totalorder %s43, 1
      %p423 = por %p421, %p422
      %p425 = scmp.ne.s32.totalorder %s410, %s424
      %p426 = scmp.eq.s32.totalorder %s43, 0
      %p427 = por %p425, %p426
      %s429 = sadd.s32 %s428, 1
      %p432 = scmp.eq.s32.totalorder %s37, 1
      %p433 = scmp.ne.s32.totalorder %s428, %s430
      %p434 = scmp.eq.s32.totalorder %s37, 0
      %p435 = por %p433, %p434
      %p436 = scmp.ne.s32.totalorder %s428, %s430
      %p437 = scmp.eq.s32.totalorder %s42, 1
      %p438 = por %p436, %p437
      %p439 = scmp.ne.s32.totalorder %s430, %s431
      %p440 = scmp.eq.s32.totalorder %s42, 0
      %p441 = por %p439, %p440
      %p442 = scmp.ne.s32.totalorder %s430, %s431
      %p443 = scmp.eq.s32.totalorder %s43, 1
      %p444 = por %p442, %p443
      %p446 = scmp.ne.s32.totalorder %s431, %s445
      %p447 = scmp.eq.s32.totalorder %s43, 0
      %p448 = por %p446, %p447
      %s450 = sadd.s32 %s449, 1
      %p453 = scmp.eq.s32.totalorder %s37, 1
      %p454 = scmp.ne.s32.totalorder %s449, %s451
      %p455 = scmp.eq.s32.totalorder %s37, 0
      %p456 = por %p454, %p455
      %p457 = scmp.ne.s32.totalorder %s449, %s451
      %p458 = scmp.eq.s32.totalorder %s42, 1
      %p459 = por %p457, %p458
      %p460 = scmp.ne.s32.totalorder %s451, %s452
      %p461 = scmp.eq.s32.totalorder %s42, 0
      %p462 = por %p460, %p461
      %p463 = scmp.ne.s32.totalorder %s451, %s452
      %p464 = scmp.eq.s32.totalorder %s43, 1
      %p465 = por %p463, %p464
      %p467 = scmp.ne.s32.totalorder %s452, %s466
      %p468 = scmp.eq.s32.totalorder %s43, 0
      %p469 = por %p467, %p468
      %s471 = sadd.s32 %s470, 1
      %p474 = scmp.eq.s32.totalorder %s37, 1
      %p475 = scmp.ne.s32.totalorder %s470, %s472
      %p476 = scmp.eq.s32.totalorder %s37, 0
      %p477 = por %p475, %p476
      %p478 = scmp.ne.s32.totalorder %s470, %s472
      %p479 = scmp.eq.s32.totalorder %s42, 1
      %p480 = por %p478, %p479
      %p481 = scmp.ne.s32.totalorder %s472, %s473
      %p482 = scmp.eq.s32.totalorder %s42, 0
      %p483 = por %p481, %p482
      %p484 = scmp.ne.s32.totalorder %s472, %s473
      %p485 = scmp.eq.s32.totalorder %s43, 1
      %p486 = por %p484, %p485
      %p488 = scmp.ne.s32.totalorder %s473, %s487
      %p489 = scmp.eq.s32.totalorder %s43, 0
      %p490 = por %p488, %p489
      %s491 = ssub.s32 %s37, %s44
      %p492 = scmp.eq.s32.totalorder %s491, 0
      %s494 = sadd.s32 %s493, 1
      %s495 = scalar_select %p492, %s493, %s494
      %p498 = pneg %p492
      %p499 = scmp.eq.s32.totalorder %s37, 1
      %p500 = por %p498, %p499
      %p501 = scmp.ne.s32.totalorder %s493, %s496
      %p502 = scmp.eq.s32.totalorder %s37, 0
      %p503 = por %p501, %p502
      %p504 = scmp.ne.s32.totalorder %s493, %s496
      %p505 = scmp.eq.s32.totalorder %s42, 1
      %p506 = por %p504, %p505
      %p507 = scmp.ne.s32.totalorder %s496, %s497
      %p508 = scmp.eq.s32.totalorder %s42, 0
      %p509 = por %p507, %p508
      %p510 = scmp.ne.s32.totalorder %s496, %s497
      %p511 = scmp.eq.s32.totalorder %s43, 1
      %p512 = por %p510, %p511
      %p514 = scmp.ne.s32.totalorder %s497, %s513
      %p515 = scmp.eq.s32.totalorder %s43, 0
      %p516 = por %p514, %p515
      %p517 = scmp.le.s32.totalorder 1, %s37
      %p518 = scmp.lt.s32.totalorder %s37, 3
      %p519 = pnand %p517, %p518
      %p520 = pneg %p519
      // Predicated region
      $region9: #{tpu_custom_call.1} parent=5 // pred_check
        _
      $region10: #{tpu_custom_call.1} parent=5 // pred_check_branch
        %522 = sbr.rel (%p519) target = $region12
      $region11: #{tpu_custom_call.1} parent=5 // pred_region
        %s523 = ssub.s32 %s37, 1
        // Predicated region
        $region13: #{tpu_custom_call.1} parent=11 // pred_check
          %p524 = pneg %p84
        $region14: #{tpu_custom_call.1} parent=11 // pred_check_branch
          %526 = sbr.rel (%p524) target = $region16
        $region15: #{tpu_custom_call.1} parent=11 // pred_region
          %s528 = ssub.s32 128, 128
          %529 = vsyncadd [#allocation7], %s528
          %s530 = sshll.u32 [#allocation6], 4
          %s531 = int_to_ptr.vmem [resolvable:$true] %s530
          %536 = dma.hbm_to_vmem [thread:$0]  %s1, 128, %s531, [#allocation7], 64, 64, 4
        $region16: #{tpu_custom_call.1} parent=11 // pred_fallthru
          _
        // Predicated region
        $region17: #{tpu_custom_call.1} parent=11 // pred_check
          %p537 = pneg %p105
        $region18: #{tpu_custom_call.1} parent=11 // pred_check_branch
          %539 = sbr.rel (%p537) target = $region20
        $region19: #{tpu_custom_call.1} parent=11 // pred_region
          _
        $region20: #{tpu_custom_call.1} parent=11 // pred_fallthru
          _
        // Predicated region
        $region21: #{tpu_custom_call.1} parent=11 // pred_check
          %p540 = pneg %p126
        $region22: #{tpu_custom_call.1} parent=11 // pred_check_branch
          %542 = sbr.rel (%p540) target = $region24
        $region23: #{tpu_custom_call.1} parent=11 // pred_region
          %s544 = ssub.s32 256, 256
          %545 = vsyncadd [#allocation7], %s544
          %s546 = sshll.u32 [#allocation8], 4
          %s547 = int_to_ptr.vmem [resolvable:$true] %s546
          %552 = dma.hbm_to_vmem [thread:$0]  %s3, 256, %s547, [#allocation7], 128, 128, 8
        $region24: #{tpu_custom_call.1} parent=11 // pred_fallthru
          _
        // Predicated region
        $region25: #{tpu_custom_call.1} parent=11 // pred_check
          %p553 = pneg %p147
        $region26: #{tpu_custom_call.1} parent=11 // pred_check_branch
          %555 = sbr.rel (%p553) target = $region28
        $region27: #{tpu_custom_call.1} parent=11 // pred_region
          _
        $region28: #{tpu_custom_call.1} parent=11 // pred_fallthru
          _
        // Predicated region
        $region29: #{tpu_custom_call.1} parent=11 // pred_check
          %p556 = pneg %p168
        $region30: #{tpu_custom_call.1} parent=11 // pred_check_branch
          %558 = sbr.rel (%p556) target = $region32
        $region31: #{tpu_custom_call.1} parent=11 // pred_region
          %s560 = ssub.s32 512, 512
          %561 = vsyncadd [#allocation10], %s560
          %s562 = sshll.u32 [#allocation9], 4
          %s563 = int_to_ptr.vmem [resolvable:$true] %s562
          %568 = dma.hbm_to_vmem [thread:$0]  %s5, 512, %s563, [#allocation10], 128, 128, 8
        $region32: #{tpu_custom_call.1} parent=11 // pred_fallthru
          _
        // Predicated region
        $region33: #{tpu_custom_call.1} parent=11 // pred_check
          %p569 = pneg %p189
        $region34: #{tpu_custom_call.1} parent=11 // pred_check_branch
          %571 = sbr.rel (%p569) target = $region36
        $region35: #{tpu_custom_call.1} parent=11 // pred_region
          _
        $region36: #{tpu_custom_call.1} parent=11 // pred_fallthru
          _
        // Predicated region
        $region37: #{tpu_custom_call.1} parent=11 // pred_check
          %p572 = pneg %p210
        $region38: #{tpu_custom_call.1} parent=11 // pred_check_branch
          %574 = sbr.rel (%p572) target = $region40
        $region39: #{tpu_custom_call.1} parent=11 // pred_region
          %s576 = ssub.s32 768, 768
          %577 = vsyncadd [#allocation10], %s576
          %s578 = sshll.u32 [#allocation11], 4
          %s579 = int_to_ptr.vmem [resolvable:$true] %s578
          %584 = dma.hbm_to_vmem [thread:$0]  %s7, 768, %s579, [#allocation10], 192, 192, 12
        $region40: #{tpu_custom_call.1} parent=11 // pred_fallthru
          _
        // Predicated region
        $region41: #{tpu_custom_call.1} parent=11 // pred_check
          %p585 = pneg %p231
        $region42: #{tpu_custom_call.1} parent=11 // pred_check_branch
          %587 = sbr.rel (%p585) target = $region44
        $region43: #{tpu_custom_call.1} parent=11 // pred_region
          _
        $region44: #{tpu_custom_call.1} parent=11 // pred_fallthru
          _
        // Predicated region
        $region45: #{tpu_custom_call.1} parent=11 // pred_check
          %p588 = pneg %p252
        $region46: #{tpu_custom_call.1} parent=11 // pred_check_branch
          %590 = sbr.rel (%p588) target = $region48
        $region47: #{tpu_custom_call.1} parent=11 // pred_region
          %s592 = ssub.s32 1536, 1536
          %593 = vsyncadd [#allocation13], %s592
          %s594 = sshll.u32 [#allocation12], 4
          %s595 = int_to_ptr.vmem [resolvable:$true] %s594
          %600 = dma.hbm_to_vmem [thread:$0]  %s9, 1536, %s595, [#allocation13], 192, 192, 12
        $region48: #{tpu_custom_call.1} parent=11 // pred_fallthru
          _
        // Predicated region
        $region49: #{tpu_custom_call.1} parent=11 // pred_check
          %p601 = pneg %p273
        $region50: #{tpu_custom_call.1} parent=11 // pred_check_branch
          %603 = sbr.rel (%p601) target = $region52
        $region51: #{tpu_custom_call.1} parent=11 // pred_region
          _
        $region52: #{tpu_custom_call.1} parent=11 // pred_fallthru
          _
        // Predicated region
        $region53: #{tpu_custom_call.1} parent=11 // pred_check
          %p604 = pneg %p294
        $region54: #{tpu_custom_call.1} parent=11 // pred_check_branch
          %606 = sbr.rel (%p604) target = $region56
        $region55: #{tpu_custom_call.1} parent=11 // pred_region
          _
        $region56: #{tpu_custom_call.1} parent=11 // pred_fallthru
          _
        // Predicated region
        $region57: #{tpu_custom_call.1} parent=11 // pred_check
          %p607 = pneg %p315
        $region58: #{tpu_custom_call.1} parent=11 // pred_check_branch
          %609 = sbr.rel (%p607) target = $region60
        $region59: #{tpu_custom_call.1} parent=11 // pred_region
          _
        $region60: #{tpu_custom_call.1} parent=11 // pred_fallthru
          _
        // Predicated region
        $region61: #{tpu_custom_call.1} parent=11 // pred_check
          %p610 = pneg %p336
        $region62: #{tpu_custom_call.1} parent=11 // pred_check_branch
          %612 = sbr.rel (%p610) target = $region64
        $region63: #{tpu_custom_call.1} parent=11 // pred_region
          %s614 = ssub.s32 6912, 6912
          %615 = vsyncadd [#allocation13], %s614
          %s616 = sshll.u32 [#allocation14], 4
          %s617 = int_to_ptr.vmem [resolvable:$true] %s616
          %622 = dma.hbm_to_vmem [thread:$0]  %s13, 6912, %s617, [#allocation13], 192, 192, 12
        $region64: #{tpu_custom_call.1} parent=11 // pred_fallthru
          _
        // Predicated region
        $region65: #{tpu_custom_call.1} parent=11 // pred_check
          %p623 = pneg %p357
        $region66: #{tpu_custom_call.1} parent=11 // pred_check_branch
          %625 = sbr.rel (%p623) target = $region68
        $region67: #{tpu_custom_call.1} parent=11 // pred_region
          _
        $region68: #{tpu_custom_call.1} parent=11 // pred_fallthru
          _
        // Predicated region
        $region69: #{tpu_custom_call.1} parent=11 // pred_check
          %p626 = pneg %p378
        $region70: #{tpu_custom_call.1} parent=11 // pred_check_branch
          %628 = sbr.rel (%p626) target = $region72
        $region71: #{tpu_custom_call.1} parent=11 // pred_region
          %s630 = ssub.s32 192, 192
          %631 = vsyncadd [#allocation16], %s630
          %s632 = sshll.u32 [#allocation15], 4
          %s633 = int_to_ptr.vmem [resolvable:$true] %s632
          %638 = dma.hbm_to_vmem [thread:$0]  %s15, 192, %s633, [#allocation16], 64, 64, 4
        $region72: #{tpu_custom_call.1} parent=11 // pred_fallthru
          _
        // Predicated region
        $region73: #{tpu_custom_call.1} parent=11 // pred_check
          %p639 = pneg %p399
        $region74: #{tpu_custom_call.1} parent=11 // pred_check_branch
          %641 = sbr.rel (%p639) target = $region76
        $region75: #{tpu_custom_call.1} parent=11 // pred_region
          _
        $region76: #{tpu_custom_call.1} parent=11 // pred_fallthru
          _
        // Predicated region
        $region77: #{tpu_custom_call.1} parent=11 // pred_check
          %p642 = pneg %p420
        $region78: #{tpu_custom_call.1} parent=11 // pred_check_branch
          %644 = sbr.rel (%p642) target = $region80
        $region79: #{tpu_custom_call.1} parent=11 // pred_region
          _
        $region80: #{tpu_custom_call.1} parent=11 // pred_fallthru
          _
        // Predicated region
        $region81: #{tpu_custom_call.1} parent=11 // pred_check
          %p645 = pneg %p441
        $region82: #{tpu_custom_call.1} parent=11 // pred_check_branch
          %647 = sbr.rel (%p645) target = $region84
        $region83: #{tpu_custom_call.1} parent=11 // pred_region
          %s649 = ssub.s32 128, 128
          %650 = vsyncadd [#allocation16], %s649
          %s651 = sshll.u32 [#allocation17], 4
          %s652 = int_to_ptr.vmem [resolvable:$true] %s651
          %657 = dma.hbm_to_vmem [thread:$0]  %s18, 128, %s652, [#allocation16], 64, 64, 4
        $region84: #{tpu_custom_call.1} parent=11 // pred_fallthru
          _
        // Predicated region
        $region85: #{tpu_custom_call.1} parent=11 // pred_check
          %p658 = pneg %p462
        $region86: #{tpu_custom_call.1} parent=11 // pred_check_branch
          %660 = sbr.rel (%p658) target = $region88
        $region87: #{tpu_custom_call.1} parent=11 // pred_region
          _
        $region88: #{tpu_custom_call.1} parent=11 // pred_fallthru
          _
        // Predicated region
        $region89: #{tpu_custom_call.1} parent=11 // pred_check
          %p661 = pneg %p483
        $region90: #{tpu_custom_call.1} parent=11 // pred_check_branch
          %663 = sbr.rel (%p661) target = $region92
        $region91: #{tpu_custom_call.1} parent=11 // pred_region
          _
        $region92: #{tpu_custom_call.1} parent=11 // pred_fallthru
          _
      $region12: #{tpu_custom_call.1} parent=5 // pred_fallthru
        _
      %p664 = scmp.lt.s32.totalorder %s37, 2
      // Predicated region
      $region93: #{tpu_custom_call.1} parent=5 // pred_check
        %p665 = pneg %p664
      $region94: #{tpu_custom_call.1} parent=5 // pred_check_branch
        %667 = sbr.rel (%p665) target = $region96
      $region95: #{tpu_custom_call.1} parent=5 // pred_region
        // Predicated region
        $region97: #{tpu_custom_call.1} parent=95 // pred_check
          %p668 = pneg %p57
        $region98: #{tpu_custom_call.1} parent=95 // pred_check_branch
          %670 = sbr.rel (%p668) target = $region100
        $region99: #{tpu_custom_call.1} parent=95 // pred_region
          %s671 = sand.u32 %s47, 1
          %s672 = scalar_lea.sflag [#allocation4], %s671
          %s673 = sand.u32 %s47, 1
          %s674 = smul.addr %s673, 24
          %s675 = scalar_lea.vmem [#allocation3], %s674
          %s677 = ssub.s32 384, 384
          %678 = vsyncadd %s672, %s677
          %s679 = smul.addr %s37, 3
          %s680 = smul.addr %s679, 128
          %s681 = scalar_lea.hbm %s0, %s680
          %s683 = sshll.u32 %s675, 4
          %s684 = int_to_ptr.vmem [resolvable:$true] %s683
          %686 = dma.hbm_to_vmem [thread:$0]  %s681, 384, %s684, %s672
        $region100: #{tpu_custom_call.1} parent=95 // pred_fallthru
          _
      $region96: #{tpu_custom_call.1} parent=5 // pred_fallthru
        _
      %p687 = scmp.le.s32.totalorder 1, %s37
      %p688 = scmp.lt.s32.totalorder %s37, 3
      %p689 = pnand %p687, %p688
      %p690 = pneg %p689
      // Predicated region
      $region101: #{tpu_custom_call.1} parent=5 // pred_check
        _
      $region102: #{tpu_custom_call.1} parent=5 // pred_check_branch
        %692 = sbr.rel (%p689) target = $region104
      $region103: #{tpu_custom_call.1} parent=5 // pred_region
        %s693 = ssub.s32 %s37, 1
        %s694 = sand.u32 %s50, 1
        %s695 = scalar_lea.sflag [#allocation4], %s694
        %s696 = sand.u32 %s50, 1
        %s697 = smul.addr %s696, 24
        %s698 = scalar_lea.vmem [#allocation3], %s697
        // Predicated region
        $region105: #{tpu_custom_call.1} parent=103 // pred_check
          %p699 = pneg %p63
        $region106: #{tpu_custom_call.1} parent=103 // pred_check_branch
          %701 = sbr.rel (%p699) target = $region108
        $region107: #{tpu_custom_call.1} parent=103 // pred_region
          %702 = dma.done %s695, 384
        $region108: #{tpu_custom_call.1} parent=103 // pred_fallthru
          _
        // Predicated region
        $region109: #{tpu_custom_call.1} parent=103 // pred_check
          %p703 = pneg %p84
        $region110: #{tpu_custom_call.1} parent=103 // pred_check_branch
          %705 = sbr.rel (%p703) target = $region112
        $region111: #{tpu_custom_call.1} parent=103 // pred_region
          %706 = dma.done [#allocation7], 128
        $region112: #{tpu_custom_call.1} parent=103 // pred_fallthru
          _
        // Predicated region
        $region113: #{tpu_custom_call.1} parent=103 // pred_check
          %p707 = pneg %p126
        $region114: #{tpu_custom_call.1} parent=103 // pred_check_branch
          %709 = sbr.rel (%p707) target = $region116
        $region115: #{tpu_custom_call.1} parent=103 // pred_region
          %710 = dma.done [#allocation7], 256
        $region116: #{tpu_custom_call.1} parent=103 // pred_fallthru
          _
        // Predicated region
        $region117: #{tpu_custom_call.1} parent=103 // pred_check
          %p711 = pneg %p168
        $region118: #{tpu_custom_call.1} parent=103 // pred_check_branch
          %713 = sbr.rel (%p711) target = $region120
        $region119: #{tpu_custom_call.1} parent=103 // pred_region
          %714 = dma.done [#allocation10], 512
        $region120: #{tpu_custom_call.1} parent=103 // pred_fallthru
          _
        // Predicated region
        $region121: #{tpu_custom_call.1} parent=103 // pred_check
          %p715 = pneg %p210
        $region122: #{tpu_custom_call.1} parent=103 // pred_check_branch
          %717 = sbr.rel (%p715) target = $region124
        $region123: #{tpu_custom_call.1} parent=103 // pred_region
          %718 = dma.done [#allocation10], 768
        $region124: #{tpu_custom_call.1} parent=103 // pred_fallthru
          _
        // Predicated region
        $region125: #{tpu_custom_call.1} parent=103 // pred_check
          %p719 = pneg %p252
        $region126: #{tpu_custom_call.1} parent=103 // pred_check_branch
          %721 = sbr.rel (%p719) target = $region128
        $region127: #{tpu_custom_call.1} parent=103 // pred_region
          %722 = dma.done [#allocation13], 1536
        $region128: #{tpu_custom_call.1} parent=103 // pred_fallthru
          _
        // Predicated region
        $region129: #{tpu_custom_call.1} parent=103 // pred_check
          %p723 = pneg %p336
        $region130: #{tpu_custom_call.1} parent=103 // pred_check_branch
          %725 = sbr.rel (%p723) target = $region132
        $region131: #{tpu_custom_call.1} parent=103 // pred_region
          %726 = dma.done [#allocation13], 6912
        $region132: #{tpu_custom_call.1} parent=103 // pred_fallthru
          _
        // Predicated region
        $region133: #{tpu_custom_call.1} parent=103 // pred_check
          %p727 = pneg %p378
        $region134: #{tpu_custom_call.1} parent=103 // pred_check_branch
          %729 = sbr.rel (%p727) target = $region136
        $region135: #{tpu_custom_call.1} parent=103 // pred_region
          %730 = dma.done [#allocation16], 192
        $region136: #{tpu_custom_call.1} parent=103 // pred_fallthru
          _
        // Predicated region
        $region137: #{tpu_custom_call.1} parent=103 // pred_check
          %p731 = pneg %p441
        $region138: #{tpu_custom_call.1} parent=103 // pred_check_branch
          %733 = sbr.rel (%p731) target = $region140
        $region139: #{tpu_custom_call.1} parent=103 // pred_region
          %734 = dma.done [#allocation16], 128
        $region140: #{tpu_custom_call.1} parent=103 // pred_fallthru
          _
        %s735 = sand.u32 %s50, 1
        %s736 = scalar_lea.sflag [#allocation4], %s735
        %s737 = sand.u32 %s50, 1
        %s738 = smul.addr %s737, 24
        %s739 = scalar_lea.vmem [#allocation3], %s738
        %p740 = pneg %p63
        %p741 = pneg %p60
        %p742 = pneg %p84
        %p743 = pneg %p81
        %p744 = pneg %p105
        %p745 = pneg %p102
        %p746 = pneg %p126
        %p747 = pneg %p123
        %p748 = pneg %p147
        %p749 = pneg %p144
        %p750 = pneg %p168
        %p751 = pneg %p165
        %p752 = pneg %p189
        %p753 = pneg %p186
        %p754 = pneg %p210
        %p755 = pneg %p207
        %p756 = pneg %p231
        %p757 = pneg %p228
        %p758 = pneg %p252
        %p759 = pneg %p249
        %p760 = pneg %p273
        %p761 = pneg %p270
        %p762 = pneg %p294
        %p763 = pneg %p291
        %p764 = pneg %p315
        %p765 = pneg %p312
        %p766 = pneg %p336
        %p767 = pneg %p333
        %p768 = pneg %p357
        %p769 = pneg %p354
        %p770 = pneg %p378
        %p771 = pneg %p375
        %p772 = pneg %p399
        %p773 = pneg %p396
        %p774 = pneg %p420
        %p775 = pneg %p417
        %p776 = pneg %p441
        %p777 = pneg %p438
        %p778 = pneg %p462
        %p779 = pneg %p459
        %p780 = pneg %p483
        %p781 = pneg %p480
        %p782 = pneg %p509
        %p783 = pneg %p506
        %s784 = sand.u32 %s496, 1
        %s785 = scalar_lea.sflag [#allocation5], %s784
        %s786 = sand.u32 %s496, 1
        %s787 = smul.addr %s786, 8
        %s788 = scalar_lea.vmem [#allocation18], %s787
        %v790 = vld [vmem:[%s698] sm:$0xff]
        %v791 = vld [vmem:[%s698 + $0x8] sm:$0xff]
        %v792 = vld [vmem:[%s698 + $0x10] sm:$0xff]
        %793 = vst [vmem:[#allocation2] sm:$0xff] %v790
        %794 = vst [vmem:[#allocation2 + $0x8] sm:$0xff] %v791
        %vm795 = vcmask 556032
        %796 = vst.msk [vmem:[#allocation2 + $0x10] sm:$0xff] %vm795, %v792
        %v797 = vld [vmem:[#allocation2] sm:$0xff]
        %v798 = vld [vmem:[#allocation2 + $0x8] sm:$0xff]
        %v799 = vld [vmem:[#allocation2 + $0x10] sm:$0xff]
        %803 = vrot.lane.b32.xlu0 %v797, 127
        %v804 = vpop.permute.xlu0 %803
        %805 = vrot.lane.b32.xlu0 %v798, 127
        %v806 = vpop.permute.xlu0 %805
        %807 = vrot.lane.b32.xlu0 %v799, 127
        %v808 = vpop.permute.xlu0 %807
        %vm809 = vcmask 1039360
        %v810 = vsel %vm809, %v804, %v806
        %v811 = vsel %vm809, %v806, %v808
        %815 = vrot.lane.b32.xlu0 %v797, 126
        %v816 = vpop.permute.xlu0 %815
        %817 = vrot.lane.b32.xlu0 %v798, 126
        %v818 = vpop.permute.xlu0 %817
        %819 = vrot.lane.b32.xlu0 %v799, 126
        %v820 = vpop.permute.xlu0 %819
        %vm821 = vcmask 1031168
        %v822 = vsel %vm821, %v816, %v818
        %v823 = vsel %vm821, %v818, %v820
        %827 = vrot.lane.b32.xlu0 %v797, 110
        %v828 = vpop.permute.xlu0 %827
        %829 = vrot.lane.b32.xlu0 %v798, 110
        %v830 = vpop.permute.xlu0 %829
        %831 = vrot.lane.b32.xlu0 %v799, 110
        %v832 = vpop.permute.xlu0 %831
        %vm833 = vcmask 900096
        %v834 = vsel %vm833, %v828, %v830
        %v835 = vsel %vm833, %v830, %v832
        %839 = vrot.lane.b32.xlu0 %v797, 109
        %v840 = vpop.permute.xlu0 %839
        %841 = vrot.lane.b32.xlu0 %v798, 109
        %v842 = vpop.permute.xlu0 %841
        %843 = vrot.lane.b32.xlu0 %v799, 109
        %v844 = vpop.permute.xlu0 %843
        %vm845 = vcmask 891904
        %v846 = vsel %vm845, %v840, %v842
        %v847 = vsel %vm845, %v842, %v844
        %851 = vrot.lane.b32.xlu0 %v797, 108
        %v852 = vpop.permute.xlu0 %851
        %853 = vrot.lane.b32.xlu0 %v798, 108
        %v854 = vpop.permute.xlu0 %853
        %855 = vrot.lane.b32.xlu0 %v799, 108
        %v856 = vpop.permute.xlu0 %855
        %vm857 = vcmask 883712
        %v858 = vsel %vm857, %v852, %v854
        %v859 = vsel %vm857, %v854, %v856
        %863 = vrot.lane.b32.xlu0 %v797, 92
        %v864 = vpop.permute.xlu0 %863
        %865 = vrot.lane.b32.xlu0 %v798, 92
        %v866 = vpop.permute.xlu0 %865
        %867 = vrot.lane.b32.xlu0 %v799, 92
        %v868 = vpop.permute.xlu0 %867
        %vm869 = vcmask 752640
        %v870 = vsel %vm869, %v864, %v866
        %v871 = vsel %vm869, %v866, %v868
        %875 = vrot.lane.b32.xlu0 %v797, 91
        %v876 = vpop.permute.xlu0 %875
        %877 = vrot.lane.b32.xlu0 %v798, 91
        %v878 = vpop.permute.xlu0 %877
        %879 = vrot.lane.b32.xlu0 %v799, 91
        %v880 = vpop.permute.xlu0 %879
        %vm881 = vcmask 744448
        %v882 = vsel %vm881, %v876, %v878
        %v883 = vsel %vm881, %v878, %v880
        %887 = vrot.lane.b32.xlu0 %v797, 90
        %v888 = vpop.permute.xlu0 %887
        %889 = vrot.lane.b32.xlu0 %v798, 90
        %v890 = vpop.permute.xlu0 %889
        %891 = vrot.lane.b32.xlu0 %v799, 90
        %v892 = vpop.permute.xlu0 %891
        %vm893 = vcmask 736256
        %v894 = vsel %vm893, %v888, %v890
        %v895 = vsel %vm893, %v890, %v892
        %v899 = vpack.c.bf16 %v810, %v797
        %v900 = vpack.c.bf16 %v811, %v798
        %v901 = vpack.c.bf16 %v808, %v799
        %v902 = vpack.c.bf16 %v834, %v822
        %v903 = vpack.c.bf16 %v835, %v823
        %v904 = vpack.c.bf16 %v832, %v820
        %v905 = vpack.c.bf16 %v858, %v846
        %v906 = vpack.c.bf16 %v859, %v847
        %v907 = vpack.c.bf16 %v856, %v844
        %v908 = vpack.c.bf16 %v882, %v870
        %v909 = vpack.c.bf16 %v883, %v871
        %v910 = vpack.c.bf16 %v880, %v868
        %v911 = vpack.c.bf16 %v894, %v894
        %v912 = vpack.c.bf16 %v895, %v895
        %v913 = vpack.c.bf16 %v892, %v892
        %v914 = vld [vmem:[#allocation6] sm:$0xf]
        %v915 = vld [vmem:[#allocation6 + $0x4] sm:$0xf]
        %v916 = vld [vmem:[%s2] sm:$0xff]
        %v917 = vld [vmem:[%s2 + $0x8] sm:$0xff]
        %919 = vset.pattern.permute.xlu0 0
        %920 = vperm.xlu0 %919, %v916
        %v921 = vpop.permute.xlu0 %920
        %924 = vset.pattern.permute.xlu0 0
        %925 = vperm.xlu0 %924, %v917
        %v926 = vpop.permute.xlu0 %925
        %v930 = vunpack.c.l.b16 %v914
        %v931 = vunpack.c.l.b16 %v915
        %v932 = vpack.c.b16 %v931, %v930
        %vm933 = vcmask 588800
        %v935 = vsel %vm933, %v932, 0
        %vm937 = vcmask 1043456
        %v939 = vsel %vm937, %v911, 0
        %v942 = vsel %vm937, %v912, 0
        %v945 = vsel %vm937, %v913, 0
        %947 = vmatprep.subr.bf16.mxu0 %v900
        %948 = vmatpush1.bf16.msra.mxu0 %v899
        %949 = vmatprep.subr.bf16.mxu0 %v903
        %950 = vmatpush1.bf16.msra.mxu0 %v902
        %951 = vmatprep.subr.bf16.mxu0 %v906
        %952 = vmatpush1.bf16.msra.mxu0 %v905
        %953 = vmatprep.subr.bf16.mxu0 %v909
        %954 = vmatpush1.bf16.msra.mxu0 %v908
        %955 = vmatprep.subr.bf16.mxu0 %v942
        %956 = vmatpush1.bf16.msra.mxu0 %v939
        %957 = vmatprep.subr.bf16.mxu0 0
        %958 = vmatpush1.bf16.msra.mxu0 0
        %959 = vmatprep.subr.bf16.mxu0 0
        %960 = vmatpush1.bf16.msra.mxu0 0
        %961 = vmatprep.subr.bf16.mxu0 0
        %962 = vmatpush1.bf16.msra.mxu0 0
        %963 = vmatprep.subr.bf16.mxu0 0
        %964 = vmatpush1.bf16.msra.mxu0 0
        %965 = vmatprep.subr.bf16.mxu0 0
        %966 = vmatpush1.bf16.msra.mxu0 0
        %967 = vmatprep.subr.bf16.mxu0 0
        %968 = vmatpush1.bf16.msra.mxu0 0
        %969 = vmatprep.subr.bf16.mxu0 0
        %970 = vmatpush1.bf16.msra.mxu0 0
        %971 = vmatprep.subr.bf16.mxu0 0
        %972 = vmatpush1.bf16.msra.mxu0 0
        %973 = vmatprep.subr.bf16.mxu0 0
        %974 = vmatpush1.bf16.msra.mxu0 0
        %975 = vmatprep.subr.bf16.mxu0 0
        %976 = vmatpush1.bf16.msra.mxu0 0
        %977 = vmatprep.subr.bf16.mxu0 0
        %978 = vmatpush1.bf16.msra.mxu0 0
        %979 = vmatprep.mubr.bf16.mxu0 0
        %980 = vmatmul.mubr.bf16.gmra.mrb[0].mxu0 %v935
        %v981 = vpop.f32.mrb[0].mxu0
        %v982 = vadd.f32 %v921, %v981
        %v983 = vpop.f32.mrb[0].mxu0
        %v984 = vadd.f32 %v921, %v983
        %v985 = vpop.f32.mrb[0].mxu0
        %v986 = vadd.f32 %v926, %v985
        %v987 = vpop.f32.mrb[0].mxu0
        %v988 = vadd.f32 %v926, %v987
        %989 = vdwg.mxu0
        %990 = vmatprep.subr.bf16.mxu0 0
        %991 = vmatpush1.bf16.msra.mxu0 %v901
        %992 = vmatprep.subr.bf16.mxu0 0
        %993 = vmatpush1.bf16.msra.mxu0 %v904
        %994 = vmatprep.subr.bf16.mxu0 0
        %995 = vmatpush1.bf16.msra.mxu0 %v907
        %996 = vmatprep.subr.bf16.mxu0 0
        %997 = vmatpush1.bf16.msra.mxu0 %v910
        %998 = vmatprep.subr.bf16.mxu0 0
        %999 = vmatpush1.bf16.msra.mxu0 %v945
        %1000 = vmatprep.subr.bf16.mxu0 0
        %1001 = vmatpush1.bf16.msra.mxu0 0
        %1002 = vmatprep.subr.bf16.mxu0 0
        %1003 = vmatpush1.bf16.msra.mxu0 0
        %1004 = vmatprep.subr.bf16.mxu0 0
        %1005 = vmatpush1.bf16.msra.mxu0 0
        %1006 = vmatprep.subr.bf16.mxu0 0
        %1007 = vmatpush1.bf16.msra.mxu0 0
        %1008 = vmatprep.subr.bf16.mxu0 0
        %1009 = vmatpush1.bf16.msra.mxu0 0
        %1010 = vmatprep.subr.bf16.mxu0 0
        %1011 = vmatpush1.bf16.msra.mxu0 0
        %1012 = vmatprep.subr.bf16.mxu0 0
        %1013 = vmatpush1.bf16.msra.mxu0 0
        %1014 = vmatprep.subr.bf16.mxu0 0
        %1015 = vmatpush1.bf16.msra.mxu0 0
        %1016 = vmatprep.subr.bf16.mxu0 0
        %1017 = vmatpush1.bf16.msra.mxu0 0
        %1018 = vmatprep.subr.bf16.mxu0 0
        %1019 = vmatpush1.bf16.msra.mxu0 0
        %1020 = vmatprep.subr.bf16.mxu0 0
        %1021 = vmatpush1.bf16.msra.mxu0 0
        %1022 = vmatprep.mubr.bf16.mxu0 0
        %1023 = vmatmul.mubr.bf16.gmra.mrb[0].mxu0 %v935
        %v1024 = vpop.f32.mrb[0].mxu0
        %v1025 = vadd.f32 %v921, %v1024
        %v1026 = vpop.f32.mrb[0].mxu0
        %v1027 = vpop.f32.mrb[0].mxu0
        %v1028 = vadd.f32 %v926, %v1027
        %v1029 = vpop.f32.mrb[0].mxu0
        %1030 = vdwg.mxu0
        %v1031 = vmax.f32 %v982, 0.0
        %v1032 = vmax.f32 %v984, 0.0
        %v1033 = vmax.f32 %v1025, 0.0
        %v1034 = vmax.f32 %v986, 0.0
        %v1035 = vmax.f32 %v988, 0.0
        %v1036 = vmax.f32 %v1028, 0.0
        %v1037 = vpack.c.bf16 %v1034, %v1031
        %v1038 = vpack.c.bf16 %v1035, %v1032
        %v1039 = vpack.c.bf16 %v1036, %v1033
        %v1040 = vld [vmem:[#allocation14] sm:$0xff]
        %v1041 = vld [vmem:[#allocation14 + $0x8] sm:$0xf]
        %v1042 = vld [vmem:[#allocation14 + $0xc] sm:$0xff]
        %v1043 = vld [vmem:[#allocation14 + $0x14] sm:$0xf]
        %v1044 = vld [vmem:[#allocation14 + $0x18] sm:$0xff]
        %v1045 = vld [vmem:[#allocation14 + $0x20] sm:$0xf]
        %v1046 = vld [vmem:[#allocation14 + $0x24] sm:$0xff]
        %v1047 = vld [vmem:[#allocation14 + $0x2c] sm:$0xf]
        %v1048 = vld [vmem:[#allocation14 + $0x30] sm:$0xff]
        %v1049 = vld [vmem:[#allocation14 + $0x38] sm:$0xf]
        %v1050 = vld [vmem:[#allocation14 + $0x3c] sm:$0xff]
        %v1051 = vld [vmem:[#allocation14 + $0x44] sm:$0xf]
        %v1052 = vld [vmem:[#allocation14 + $0x48] sm:$0xff]
        %v1053 = vld [vmem:[#allocation14 + $0x50] sm:$0xf]
        %v1054 = vld [vmem:[#allocation14 + $0x54] sm:$0xff]
        %v1055 = vld [vmem:[#allocation14 + $0x5c] sm:$0xf]
        %v1056 = vld [vmem:[#allocation14 + $0x60] sm:$0xff]
        %v1057 = vld [vmem:[#allocation14 + $0x68] sm:$0xf]
        %v1058 = vld [vmem:[#allocation14 + $0x6c] sm:$0xff]
        %v1059 = vld [vmem:[#allocation14 + $0x74] sm:$0xf]
        %v1060 = vld [vmem:[#allocation14 + $0x78] sm:$0xff]
        %v1061 = vld [vmem:[#allocation14 + $0x80] sm:$0xf]
        %v1062 = vld [vmem:[#allocation14 + $0x84] sm:$0xff]
        %v1063 = vld [vmem:[#allocation14 + $0x8c] sm:$0xf]
        %v1064 = vld [vmem:[#allocation14 + $0x90] sm:$0xff]
        %v1065 = vld [vmem:[#allocation14 + $0x98] sm:$0xf]
        %v1066 = vld [vmem:[#allocation14 + $0x9c] sm:$0xff]
        %v1067 = vld [vmem:[#allocation14 + $0xa4] sm:$0xf]
        %v1068 = vld [vmem:[#allocation14 + $0xa8] sm:$0xff]
        %v1069 = vld [vmem:[#allocation14 + $0xb0] sm:$0xf]
        %v1070 = vld [vmem:[#allocation14 + $0xb4] sm:$0xff]
        %v1071 = vld [vmem:[#allocation14 + $0xbc] sm:$0xf]
        %v1072 = vld [vmem:[#allocation14 + $0xc0] sm:$0xff]
        %v1073 = vld [vmem:[#allocation14 + $0xc8] sm:$0xf]
        %v1074 = vld [vmem:[#allocation14 + $0xcc] sm:$0xff]
        %v1075 = vld [vmem:[#allocation14 + $0xd4] sm:$0xf]
        %v1076 = vld [vmem:[#allocation14 + $0xd8] sm:$0xff]
        %v1077 = vld [vmem:[#allocation14 + $0xe0] sm:$0xf]
        %v1078 = vld [vmem:[#allocation14 + $0xe4] sm:$0xff]
        %v1079 = vld [vmem:[#allocation14 + $0xec] sm:$0xf]
        %v1080 = vld [vmem:[#allocation14 + $0xf0] sm:$0xff]
        %v1081 = vld [vmem:[#allocation14 + $0xf8] sm:$0xf]
        %v1082 = vld [vmem:[#allocation14 + $0xfc] sm:$0xff]
        %v1083 = vld [vmem:[#allocation14 + $0x104] sm:$0xf]
        %v1084 = vld [vmem:[#allocation14 + $0x108] sm:$0xff]
        %v1085 = vld [vmem:[#allocation14 + $0x110] sm:$0xf]
        %v1086 = vld [vmem:[#allocation14 + $0x114] sm:$0xff]
        %v1087 = vld [vmem:[#allocation14 + $0x11c] sm:$0xf]
        %v1088 = vld [vmem:[#allocation14 + $0x120] sm:$0xff]
        %v1089 = vld [vmem:[#allocation14 + $0x128] sm:$0xf]
        %v1090 = vld [vmem:[#allocation14 + $0x12c] sm:$0xff]
        %v1091 = vld [vmem:[#allocation14 + $0x134] sm:$0xf]
        %v1092 = vld [vmem:[#allocation14 + $0x138] sm:$0xff]
        %v1093 = vld [vmem:[#allocation14 + $0x140] sm:$0xf]
        %v1094 = vld [vmem:[#allocation14 + $0x144] sm:$0xff]
        %v1095 = vld [vmem:[#allocation14 + $0x14c] sm:$0xf]
        %v1096 = vld [vmem:[#allocation14 + $0x150] sm:$0xff]
        %v1097 = vld [vmem:[#allocation14 + $0x158] sm:$0xf]
        %v1098 = vld [vmem:[#allocation14 + $0x15c] sm:$0xff]
        %v1099 = vld [vmem:[#allocation14 + $0x164] sm:$0xf]
        %v1100 = vld [vmem:[#allocation14 + $0x168] sm:$0xff]
        %v1101 = vld [vmem:[#allocation14 + $0x170] sm:$0xf]
        %v1102 = vld [vmem:[#allocation14 + $0x174] sm:$0xff]
        %v1103 = vld [vmem:[#allocation14 + $0x17c] sm:$0xf]
        %v1104 = vld [vmem:[#allocation14 + $0x180] sm:$0xff]
        %v1105 = vld [vmem:[#allocation14 + $0x188] sm:$0xf]
        %v1106 = vld [vmem:[#allocation14 + $0x18c] sm:$0xff]
        %v1107 = vld [vmem:[#allocation14 + $0x194] sm:$0xf]
        %v1108 = vld [vmem:[#allocation14 + $0x198] sm:$0xff]
        %v1109 = vld [vmem:[#allocation14 + $0x1a0] sm:$0xf]
        %v1110 = vld [vmem:[#allocation14 + $0x1a4] sm:$0x77]
        %v1111 = vld [vmem:[#allocation14 + $0x1ac] sm:$0x7]
        %v1184 = vunpack.c.l.b16 %v1040
        %v1185 = vunpack.c.h.b16 %v1040
        %v1186 = vunpack.c.l.b16 %v1041
        %v1187 = vunpack.c.l.b16 %v1042
        %v1188 = vunpack.c.h.b16 %v1042
        %v1189 = vunpack.c.l.b16 %v1043
        %v1190 = vunpack.c.l.b16 %v1044
        %v1191 = vunpack.c.h.b16 %v1044
        %v1192 = vunpack.c.l.b16 %v1045
        %v1193 = vunpack.c.l.b16 %v1046
        %v1194 = vunpack.c.h.b16 %v1046
        %v1195 = vunpack.c.l.b16 %v1047
        %v1196 = vunpack.c.l.b16 %v1048
        %v1197 = vunpack.c.h.b16 %v1048
        %v1198 = vunpack.c.l.b16 %v1049
        %v1199 = vunpack.c.l.b16 %v1050
        %v1200 = vunpack.c.h.b16 %v1050
        %v1201 = vunpack.c.l.b16 %v1051
        %v1202 = vunpack.c.l.b16 %v1052
        %v1203 = vunpack.c.h.b16 %v1052
        %v1204 = vunpack.c.l.b16 %v1053
        %v1205 = vunpack.c.l.b16 %v1054
        %v1206 = vunpack.c.h.b16 %v1054
        %v1207 = vunpack.c.l.b16 %v1055
        %v1208 = vunpack.c.l.b16 %v1056
        %v1209 = vunpack.c.h.b16 %v1056
        %v1210 = vunpack.c.l.b16 %v1057
        %v1211 = vunpack.c.l.b16 %v1058
        %v1212 = vunpack.c.h.b16 %v1058
        %v1213 = vunpack.c.l.b16 %v1059
        %v1214 = vunpack.c.l.b16 %v1060
        %v1215 = vunpack.c.h.b16 %v1060
        %v1216 = vunpack.c.l.b16 %v1061
        %v1217 = vunpack.c.l.b16 %v1062
        %v1218 = vunpack.c.h.b16 %v1062
        %v1219 = vunpack.c.l.b16 %v1063
        %v1220 = vunpack.c.l.b16 %v1064
        %v1221 = vunpack.c.h.b16 %v1064
        %v1222 = vunpack.c.l.b16 %v1065
        %v1223 = vunpack.c.l.b16 %v1066
        %v1224 = vunpack.c.h.b16 %v1066
        %v1225 = vunpack.c.l.b16 %v1067
        %v1226 = vunpack.c.l.b16 %v1068
        %v1227 = vunpack.c.h.b16 %v1068
        %v1228 = vunpack.c.l.b16 %v1069
        %v1229 = vunpack.c.l.b16 %v1070
        %v1230 = vunpack.c.h.b16 %v1070
        %v1231 = vunpack.c.l.b16 %v1071
        %v1232 = vunpack.c.l.b16 %v1072
        %v1233 = vunpack.c.h.b16 %v1072
        %v1234 = vunpack.c.l.b16 %v1073
        %v1235 = vunpack.c.l.b16 %v1074
        %v1236 = vunpack.c.h.b16 %v1074
        %v1237 = vunpack.c.l.b16 %v1075
        %v1238 = vunpack.c.l.b16 %v1076
        %v1239 = vunpack.c.h.b16 %v1076
        %v1240 = vunpack.c.l.b16 %v1077
        %v1241 = vunpack.c.l.b16 %v1078
        %v1242 = vunpack.c.h.b16 %v1078
        %v1243 = vunpack.c.l.b16 %v1079
        %v1244 = vunpack.c.l.b16 %v1080
        %v1245 = vunpack.c.h.b16 %v1080
        %v1246 = vunpack.c.l.b16 %v1081
        %v1247 = vunpack.c.l.b16 %v1082
        %v1248 = vunpack.c.h.b16 %v1082
        %v1249 = vunpack.c.l.b16 %v1083
        %v1250 = vunpack.c.l.b16 %v1084
        %v1251 = vunpack.c.h.b16 %v1084
        %v1252 = vunpack.c.l.b16 %v1085
        %v1253 = vunpack.c.l.b16 %v1086
        %v1254 = vunpack.c.h.b16 %v1086
        %v1255 = vunpack.c.l.b16 %v1087
        %v1256 = vunpack.c.l.b16 %v1088
        %v1257 = vunpack.c.h.b16 %v1088
        %v1258 = vunpack.c.l.b16 %v1089
        %v1259 = vunpack.c.l.b16 %v1090
        %v1260 = vunpack.c.h.b16 %v1090
        %v1261 = vunpack.c.l.b16 %v1091
        %v1262 = vunpack.c.l.b16 %v1092
        %v1263 = vunpack.c.h.b16 %v1092
        %v1264 = vunpack.c.l.b16 %v1093
        %v1265 = vunpack.c.l.b16 %v1094
        %v1266 = vunpack.c.h.b16 %v1094
        %v1267 = vunpack.c.l.b16 %v1095
        %v1268 = vunpack.c.l.b16 %v1096
        %v1269 = vunpack.c.h.b16 %v1096
        %v1270 = vunpack.c.l.b16 %v1097
        %v1271 = vunpack.c.l.b16 %v1098
        %v1272 = vunpack.c.h.b16 %v1098
        %v1273 = vunpack.c.l.b16 %v1099
        %v1274 = vunpack.c.l.b16 %v1100
        %v1275 = vunpack.c.h.b16 %v1100
        %v1276 = vunpack.c.l.b16 %v1101
        %v1277 = vunpack.c.l.b16 %v1102
        %v1278 = vunpack.c.h.b16 %v1102
        %v1279 = vunpack.c.l.b16 %v1103
        %v1280 = vunpack.c.l.b16 %v1104
        %v1281 = vunpack.c.h.b16 %v1104
        %v1282 = vunpack.c.l.b16 %v1105
        %v1283 = vunpack.c.l.b16 %v1106
        %v1284 = vunpack.c.h.b16 %v1106
        %v1285 = vunpack.c.l.b16 %v1107
        %v1286 = vunpack.c.l.b16 %v1108
        %v1287 = vunpack.c.h.b16 %v1108
        %v1288 = vunpack.c.l.b16 %v1109
        %v1289 = vunpack.c.l.b16 %v1110
        %v1290 = vunpack.c.h.b16 %v1110
        %v1291 = vunpack.c.l.b16 %v1111
        %v1292 = vpack.c.b16 %v1187, %v1184
        %v1293 = vpack.c.b16 %v1188, %v1185
        %v1294 = vpack.c.b16 %v1189, %v1186
        %v1295 = vpack.c.b16 %v1193, %v1190
        %v1296 = vpack.c.b16 %v1194, %v1191
        %v1297 = vpack.c.b16 %v1195, %v1192
        %v1298 = vpack.c.b16 %v1199, %v1196
        %v1299 = vpack.c.b16 %v1200, %v1197
        %v1300 = vpack.c.b16 %v1201, %v1198
        %v1301 = vpack.c.b16 %v1205, %v1202
        %v1302 = vpack.c.b16 %v1206, %v1203
        %v1303 = vpack.c.b16 %v1207, %v1204
        %v1304 = vpack.c.b16 %v1211, %v1208
        %v1305 = vpack.c.b16 %v1212, %v1209
        %v1306 = vpack.c.b16 %v1213, %v1210
        %v1307 = vpack.c.b16 %v1217, %v1214
        %v1308 = vpack.c.b16 %v1218, %v1215
        %v1309 = vpack.c.b16 %v1219, %v1216
        %v1310 = vpack.c.b16 %v1223, %v1220
        %v1311 = vpack.c.b16 %v1224, %v1221
        %v1312 = vpack.c.b16 %v1225, %v1222
        %v1313 = vpack.c.b16 %v1229, %v1226
        %v1314 = vpack.c.b16 %v1230, %v1227
        %v1315 = vpack.c.b16 %v1231, %v1228
        %v1316 = vpack.c.b16 %v1235, %v1232
        %v1317 = vpack.c.b16 %v1236, %v1233
        %v1318 = vpack.c.b16 %v1237, %v1234
        %v1319 = vpack.c.b16 %v1241, %v1238
        %v1320 = vpack.c.b16 %v1242, %v1239
        %v1321 = vpack.c.b16 %v1243, %v1240
        %v1322 = vpack.c.b16 %v1247, %v1244
        %v1323 = vpack.c.b16 %v1248, %v1245
        %v1324 = vpack.c.b16 %v1249, %v1246
        %v1325 = vpack.c.b16 %v1253, %v1250
        %v1326 = vpack.c.b16 %v1254, %v1251
        %v1327 = vpack.c.b16 %v1255, %v1252
        %v1328 = vpack.c.b16 %v1259, %v1256
        %v1329 = vpack.c.b16 %v1260, %v1257
        %v1330 = vpack.c.b16 %v1261, %v1258
        %v1331 = vpack.c.b16 %v1265, %v1262
        %v1332 = vpack.c.b16 %v1266, %v1263
        %v1333 = vpack.c.b16 %v1267, %v1264
        %v1334 = vpack.c.b16 %v1271, %v1268
        %v1335 = vpack.c.b16 %v1272, %v1269
        %v1336 = vpack.c.b16 %v1273, %v1270
        %v1337 = vpack.c.b16 %v1277, %v1274
        %v1338 = vpack.c.b16 %v1278, %v1275
        %v1339 = vpack.c.b16 %v1279, %v1276
        %v1340 = vpack.c.b16 %v1283, %v1280
        %v1341 = vpack.c.b16 %v1284, %v1281
        %v1342 = vpack.c.b16 %v1285, %v1282
        %v1343 = vpack.c.b16 %v1289, %v1286
        %v1344 = vpack.c.b16 %v1290, %v1287
        %v1345 = vpack.c.b16 %v1291, %v1288
        %vm1397 = vcmask 244736
        %v1399 = vsel %vm1397, %v1039, 0
        %vm1401 = vcmask 1046528
        %v1403 = vsel %vm1401, %v1343, 0
        %v1406 = vsel %vm1401, %v1344, 0
        %v1409 = vsel %vm1401, %v1345, 0
        %1411 = vmatprep.subr.bf16.mxu0 %v1293
        %1412 = vmatpush1.bf16.msra.mxu0 %v1292
        %1413 = vmatprep.subr.bf16.mxu0 %v1296
        %1414 = vmatpush1.bf16.msra.mxu0 %v1295
        %1415 = vmatprep.subr.bf16.mxu0 %v1299
        %1416 = vmatpush1.bf16.msra.mxu0 %v1298
        %1417 = vmatprep.subr.bf16.mxu0 %v1302
        %1418 = vmatpush1.bf16.msra.mxu0 %v1301
        %1419 = vmatprep.subr.bf16.mxu0 %v1305
        %1420 = vmatpush1.bf16.msra.mxu0 %v1304
        %1421 = vmatprep.subr.bf16.mxu0 %v1308
        %1422 = vmatpush1.bf16.msra.mxu0 %v1307
        %1423 = vmatprep.subr.bf16.mxu0 %v1311
        %1424 = vmatpush1.bf16.msra.mxu0 %v1310
        %1425 = vmatprep.subr.bf16.mxu0 %v1314
        %1426 = vmatpush1.bf16.msra.mxu0 %v1313
        %1427 = vmatprep.subr.bf16.mxu0 %v1317
        %1428 = vmatpush1.bf16.msra.mxu0 %v1316
        %1429 = vmatprep.subr.bf16.mxu0 %v1320
        %1430 = vmatpush1.bf16.msra.mxu0 %v1319
        %1431 = vmatprep.subr.bf16.mxu0 %v1323
        %1432 = vmatpush1.bf16.msra.mxu0 %v1322
        %1433 = vmatprep.subr.bf16.mxu0 %v1326
        %1434 = vmatpush1.bf16.msra.mxu0 %v1325
        %1435 = vmatprep.subr.bf16.mxu0 %v1329
        %1436 = vmatpush1.bf16.msra.mxu0 %v1328
        %1437 = vmatprep.subr.bf16.mxu0 %v1332
        %1438 = vmatpush1.bf16.msra.mxu0 %v1331
        %1439 = vmatprep.subr.bf16.mxu0 %v1335
        %1440 = vmatpush1.bf16.msra.mxu0 %v1334
        %1441 = vmatprep.subr.bf16.mxu0 %v1338
        %1442 = vmatpush1.bf16.msra.mxu0 %v1337
        %1443 = vmatprep.mubr.bf16.mxu0 %v1038
        %1444 = vmatmul.mubr.bf16.gmra.mrb[0].mxu0 %v1037
        %v1445 = vpop.f32.mrb[0].mxu0
        %v1446 = vadd.f32 0.0, %v1445
        %v1447 = vpop.f32.mrb[0].mxu0
        %v1448 = vadd.f32 0.0, %v1447
        %v1449 = vpop.f32.mrb[0].mxu0
        %v1450 = vadd.f32 0.0, %v1449
        %v1451 = vpop.f32.mrb[0].mxu0
        %v1452 = vadd.f32 0.0, %v1451
        %1453 = vdwg.mxu0
        %1454 = vmatprep.subr.bf16.mxu0 %v1341
        %1455 = vmatpush1.bf16.msra.mxu0 %v1340
        %1456 = vmatprep.subr.bf16.mxu0 %v1406
        %1457 = vmatpush1.bf16.msra.mxu0 %v1403
        %1458 = vmatprep.subr.bf16.mxu0 0
        %1459 = vmatpush1.bf16.msra.mxu0 0
        %1460 = vmatprep.subr.bf16.mxu0 0
        %1461 = vmatpush1.bf16.msra.mxu0 0
        %1462 = vmatprep.subr.bf16.mxu0 0
        %1463 = vmatpush1.bf16.msra.mxu0 0
        %1464 = vmatprep.subr.bf16.mxu0 0
        %1465 = vmatpush1.bf16.msra.mxu0 0
        %1466 = vmatprep.subr.bf16.mxu0 0
        %1467 = vmatpush1.bf16.msra.mxu0 0
        %1468 = vmatprep.subr.bf16.mxu0 0
        %1469 = vmatpush1.bf16.msra.mxu0 0
        %1470 = vmatprep.subr.bf16.mxu0 0
        %1471 = vmatpush1.bf16.msra.mxu0 0
        %1472 = vmatprep.subr.bf16.mxu0 0
        %1473 = vmatpush1.bf16.msra.mxu0 0
        %1474 = vmatprep.subr.bf16.mxu0 0
        %1475 = vmatpush1.bf16.msra.mxu0 0
        %1476 = vmatprep.subr.bf16.mxu0 0
        %1477 = vmatpush1.bf16.msra.mxu0 0
        %1478 = vmatprep.subr.bf16.mxu0 0
        %1479 = vmatpush1.bf16.msra.mxu0 0
        %1480 = vmatprep.subr.bf16.mxu0 0
        %1481 = vmatpush1.bf16.msra.mxu0 0
        %1482 = vmatprep.subr.bf16.mxu0 0
        %1483 = vmatpush1.bf16.msra.mxu0 0
        %1484 = vmatprep.subr.bf16.mxu0 0
        %1485 = vmatpush1.bf16.msra.mxu0 0
        %1486 = vmatprep.mubr.bf16.mxu0 0
        %1487 = vmatmul.mubr.bf16.gmra.mrb[0].mxu0 %v1399
        %v1488 = vpop.f32.mrb[0].mxu0
        %v1489 = vadd.f32 %v1446, %v1488
        %v1490 = vpop.f32.mrb[0].mxu0
        %v1491 = vadd.f32 %v1448, %v1490
        %v1492 = vpop.f32.mrb[0].mxu0
        %v1493 = vadd.f32 %v1450, %v1492
        %v1494 = vpop.f32.mrb[0].mxu0
        %v1495 = vadd.f32 %v1452, %v1494
        %1496 = vdwg.mxu0
        %1497 = vmatprep.subr.bf16.mxu0 0
        %1498 = vmatpush1.bf16.msra.mxu0 %v1294
        %1499 = vmatprep.subr.bf16.mxu0 0
        %1500 = vmatpush1.bf16.msra.mxu0 %v1297
        %1501 = vmatprep.subr.bf16.mxu0 0
        %1502 = vmatpush1.bf16.msra.mxu0 %v1300
        %1503 = vmatprep.subr.bf16.mxu0 0
        %1504 = vmatpush1.bf16.msra.mxu0 %v1303
        %1505 = vmatprep.subr.bf16.mxu0 0
        %1506 = vmatpush1.bf16.msra.mxu0 %v1306
        %1507 = vmatprep.subr.bf16.mxu0 0
        %1508 = vmatpush1.bf16.msra.mxu0 %v1309
        %1509 = vmatprep.subr.bf16.mxu0 0
        %1510 = vmatpush1.bf16.msra.mxu0 %v1312
        %1511 = vmatprep.subr.bf16.mxu0 0
        %1512 = vmatpush1.bf16.msra.mxu0 %v1315
        %1513 = vmatprep.subr.bf16.mxu0 0
        %1514 = vmatpush1.bf16.msra.mxu0 %v1318
        %1515 = vmatprep.subr.bf16.mxu0 0
        %1516 = vmatpush1.bf16.msra.mxu0 %v1321
        %1517 = vmatprep.subr.bf16.mxu0 0
        %1518 = vmatpush1.bf16.msra.mxu0 %v1324
        %1519 = vmatprep.subr.bf16.mxu0 0
        %1520 = vmatpush1.bf16.msra.mxu0 %v1327
        %1521 = vmatprep.subr.bf16.mxu0 0
        %1522 = vmatpush1.bf16.msra.mxu0 %v1330
        %1523 = vmatprep.subr.bf16.mxu0 0
        %1524 = vmatpush1.bf16.msra.mxu0 %v1333
        %1525 = vmatprep.subr.bf16.mxu0 0
        %1526 = vmatpush1.bf16.msra.mxu0 %v1336
        %1527 = vmatprep.subr.bf16.mxu0 0
        %1528 = vmatpush1.bf16.msra.mxu0 %v1339
        %1529 = vmatprep.mubr.bf16.mxu0 %v1038
        %1530 = vmatmul.mubr.bf16.gmra.mrb[0].mxu0 %v1037
        %v1531 = vpop.f32.mrb[0].mxu0
        %v1532 = vadd.f32 0.0, %v1531
        %v1533 = vpop.f32.mrb[0].mxu0
        %v1534 = vpop.f32.mrb[0].mxu0
        %v1535 = vadd.f32 0.0, %v1534
        %v1536 = vpop.f32.mrb[0].mxu0
        %1537 = vdwg.mxu0
        %1538 = vmatprep.subr.bf16.mxu0 0
        %1539 = vmatpush1.bf16.msra.mxu0 %v1342
        %1540 = vmatprep.subr.bf16.mxu0 0
        %1541 = vmatpush1.bf16.msra.mxu0 %v1409
        %1542 = vmatprep.subr.bf16.mxu0 0
        %1543 = vmatpush1.bf16.msra.mxu0 0
        %1544 = vmatprep.subr.bf16.mxu0 0
        %1545 = vmatpush1.bf16.msra.mxu0 0
        %1546 = vmatprep.subr.bf16.mxu0 0
        %1547 = vmatpush1.bf16.msra.mxu0 0
        %1548 = vmatprep.subr.bf16.mxu0 0
        %1549 = vmatpush1.bf16.msra.mxu0 0
        %1550 = vmatprep.subr.bf16.mxu0 0
        %1551 = vmatpush1.bf16.msra.mxu0 0
        %1552 = vmatprep.subr.bf16.mxu0 0
        %1553 = vmatpush1.bf16.msra.mxu0 0
        %1554 = vmatprep.subr.bf16.mxu0 0
        %1555 = vmatpush1.bf16.msra.mxu0 0
        %1556 = vmatprep.subr.bf16.mxu0 0
        %1557 = vmatpush1.bf16.msra.mxu0 0
        %1558 = vmatprep.subr.bf16.mxu0 0
        %1559 = vmatpush1.bf16.msra.mxu0 0
        %1560 = vmatprep.subr.bf16.mxu0 0
        %1561 = vmatpush1.bf16.msra.mxu0 0
        %1562 = vmatprep.subr.bf16.mxu0 0
        %1563 = vmatpush1.bf16.msra.mxu0 0
        %1564 = vmatprep.subr.bf16.mxu0 0
        %1565 = vmatpush1.bf16.msra.mxu0 0
        %1566 = vmatprep.subr.bf16.mxu0 0
        %1567 = vmatpush1.bf16.msra.mxu0 0
        %1568 = vmatprep.subr.bf16.mxu0 0
        %1569 = vmatpush1.bf16.msra.mxu0 0
        %1570 = vmatprep.mubr.bf16.mxu0 0
        %1571 = vmatmul.mubr.bf16.gmra.mrb[0].mxu0 %v1399
        %v1572 = vpop.f32.mrb[0].mxu0
        %v1573 = vadd.f32 %v1532, %v1572
        %v1574 = vpop.f32.mrb[0].mxu0
        %v1575 = vpop.f32.mrb[0].mxu0
        %v1576 = vadd.f32 %v1535, %v1575
        %v1577 = vpop.f32.mrb[0].mxu0
        %1578 = vdwg.mxu0
        %1579 = vst [vmem:[#allocation2] sm:$0xff] %v1489
        %1580 = vst [vmem:[#allocation2 + $0x8] sm:$0xff] %v1491
        %1581 = vst.msk [vmem:[#allocation2 + $0x10] sm:$0xff] %vm795, %v1573
        %1582 = vst [vmem:[#allocation2 + $0x18] sm:$0xff] %v1493
        %1583 = vst [vmem:[#allocation2 + $0x20] sm:$0xff] %v1495
        %1584 = vst.msk [vmem:[#allocation2 + $0x28] sm:$0xff] %vm795, %v1576
        %v1585 = vld [vmem:[#allocation2] sm:$0xff]
        %v1586 = vld [vmem:[#allocation2 + $0x8] sm:$0xff]
        %v1587 = vld [vmem:[#allocation2 + $0x10] sm:$0xff]
        %v1588 = vld [vmem:[#allocation2 + $0x18] sm:$0xff]
        %v1589 = vld [vmem:[#allocation2 + $0x20] sm:$0xff]
        %v1590 = vld [vmem:[#allocation2 + $0x28] sm:$0xff]
        %1597 = vrot.lane.b32.xlu0 %v1585, 127
        %v1598 = vpop.permute.xlu0 %1597
        %1599 = vrot.lane.b32.xlu0 %v1586, 127
        %v1600 = vpop.permute.xlu0 %1599
        %1601 = vrot.lane.b32.xlu0 %v1587, 127
        %v1602 = vpop.permute.xlu0 %1601
        %1603 = vrot.lane.b32.xlu0 %v1588, 127
        %v1604 = vpop.permute.xlu0 %1603
        %1605 = vrot.lane.b32.xlu0 %v1589, 127
        %v1606 = vpop.permute.xlu0 %1605
        %1607 = vrot.lane.b32.xlu0 %v1590, 127
        %v1608 = vpop.permute.xlu0 %1607
        %v1609 = vsel %vm809, %v1598, %v1600
        %v1610 = vsel %vm809, %v1600, %v1602
        %v1611 = vsel %vm809, %v1604, %v1606
        %v1612 = vsel %vm809, %v1606, %v1608
        %1619 = vrot.lane.b32.xlu0 %v1585, 126
        %v1620 = vpop.permute.xlu0 %1619
        %1621 = vrot.lane.b32.xlu0 %v1586, 126
        %v1622 = vpop.permute.xlu0 %1621
        %1623 = vrot.lane.b32.xlu0 %v1587, 126
        %v1624 = vpop.permute.xlu0 %1623
        %1625 = vrot.lane.b32.xlu0 %v1588, 126
        %v1626 = vpop.permute.xlu0 %1625
        %1627 = vrot.lane.b32.xlu0 %v1589, 126
        %v1628 = vpop.permute.xlu0 %1627
        %1629 = vrot.lane.b32.xlu0 %v1590, 126
        %v1630 = vpop.permute.xlu0 %1629
        %v1631 = vsel %vm821, %v1620, %v1622
        %v1632 = vsel %vm821, %v1622, %v1624
        %v1633 = vsel %vm821, %v1626, %v1628
        %v1634 = vsel %vm821, %v1628, %v1630
        %1641 = vrot.lane.b32.xlu0 %v1585, 110
        %v1642 = vpop.permute.xlu0 %1641
        %1643 = vrot.lane.b32.xlu0 %v1586, 110
        %v1644 = vpop.permute.xlu0 %1643
        %1645 = vrot.lane.b32.xlu0 %v1587, 110
        %v1646 = vpop.permute.xlu0 %1645
        %1647 = vrot.lane.b32.xlu0 %v1588, 110
        %v1648 = vpop.permute.xlu0 %1647
        %1649 = vrot.lane.b32.xlu0 %v1589, 110
        %v1650 = vpop.permute.xlu0 %1649
        %1651 = vrot.lane.b32.xlu0 %v1590, 110
        %v1652 = vpop.permute.xlu0 %1651
        %v1653 = vsel %vm833, %v1642, %v1644
        %v1654 = vsel %vm833, %v1644, %v1646
        %v1655 = vsel %vm833, %v1648, %v1650
        %v1656 = vsel %vm833, %v1650, %v1652
        %1663 = vrot.lane.b32.xlu0 %v1585, 109
        %v1664 = vpop.permute.xlu0 %1663
        %1665 = vrot.lane.b32.xlu0 %v1586, 109
        %v1666 = vpop.permute.xlu0 %1665
        %1667 = vrot.lane.b32.xlu0 %v1587, 109
        %v1668 = vpop.permute.xlu0 %1667
        %1669 = vrot.lane.b32.xlu0 %v1588, 109
        %v1670 = vpop.permute.xlu0 %1669
        %1671 = vrot.lane.b32.xlu0 %v1589, 109
        %v1672 = vpop.permute.xlu0 %1671
        %1673 = vrot.lane.b32.xlu0 %v1590, 109
        %v1674 = vpop.permute.xlu0 %1673
        %v1675 = vsel %vm845, %v1664, %v1666
        %v1676 = vsel %vm845, %v1666, %v1668
        %v1677 = vsel %vm845, %v1670, %v1672
        %v1678 = vsel %vm845, %v1672, %v1674
        %1685 = vrot.lane.b32.xlu0 %v1585, 108
        %v1686 = vpop.permute.xlu0 %1685
        %1687 = vrot.lane.b32.xlu0 %v1586, 108
        %v1688 = vpop.permute.xlu0 %1687
        %1689 = vrot.lane.b32.xlu0 %v1587, 108
        %v1690 = vpop.permute.xlu0 %1689
        %1691 = vrot.lane.b32.xlu0 %v1588, 108
        %v1692 = vpop.permute.xlu0 %1691
        %1693 = vrot.lane.b32.xlu0 %v1589, 108
        %v1694 = vpop.permute.xlu0 %1693
        %1695 = vrot.lane.b32.xlu0 %v1590, 108
        %v1696 = vpop.permute.xlu0 %1695
        %v1697 = vsel %vm857, %v1686, %v1688
        %v1698 = vsel %vm857, %v1688, %v1690
        %v1699 = vsel %vm857, %v1692, %v1694
        %v1700 = vsel %vm857, %v1694, %v1696
        %1707 = vrot.lane.b32.xlu0 %v1585, 92
        %v1708 = vpop.permute.xlu0 %1707
        %1709 = vrot.lane.b32.xlu0 %v1586, 92
        %v1710 = vpop.permute.xlu0 %1709
        %1711 = vrot.lane.b32.xlu0 %v1587, 92
        %v1712 = vpop.permute.xlu0 %1711
        %1713 = vrot.lane.b32.xlu0 %v1588, 92
        %v1714 = vpop.permute.xlu0 %1713
        %1715 = vrot.lane.b32.xlu0 %v1589, 92
        %v1716 = vpop.permute.xlu0 %1715
        %1717 = vrot.lane.b32.xlu0 %v1590, 92
        %v1718 = vpop.permute.xlu0 %1717
        %v1719 = vsel %vm869, %v1708, %v1710
        %v1720 = vsel %vm869, %v1710, %v1712
        %v1721 = vsel %vm869, %v1714, %v1716
        %v1722 = vsel %vm869, %v1716, %v1718
        %1729 = vrot.lane.b32.xlu0 %v1585, 91
        %v1730 = vpop.permute.xlu0 %1729
        %1731 = vrot.lane.b32.xlu0 %v1586, 91
        %v1732 = vpop.permute.xlu0 %1731
        %1733 = vrot.lane.b32.xlu0 %v1587, 91
        %v1734 = vpop.permute.xlu0 %1733
        %1735 = vrot.lane.b32.xlu0 %v1588, 91
        %v1736 = vpop.permute.xlu0 %1735
        %1737 = vrot.lane.b32.xlu0 %v1589, 91
        %v1738 = vpop.permute.xlu0 %1737
        %1739 = vrot.lane.b32.xlu0 %v1590, 91
        %v1740 = vpop.permute.xlu0 %1739
        %v1741 = vsel %vm881, %v1730, %v1732
        %v1742 = vsel %vm881, %v1732, %v1734
        %v1743 = vsel %vm881, %v1736, %v1738
        %v1744 = vsel %vm881, %v1738, %v1740
        %1751 = vrot.lane.b32.xlu0 %v1585, 90
        %v1752 = vpop.permute.xlu0 %1751
        %1753 = vrot.lane.b32.xlu0 %v1586, 90
        %v1754 = vpop.permute.xlu0 %1753
        %1755 = vrot.lane.b32.xlu0 %v1587, 90
        %v1756 = vpop.permute.xlu0 %1755
        %1757 = vrot.lane.b32.xlu0 %v1588, 90
        %v1758 = vpop.permute.xlu0 %1757
        %1759 = vrot.lane.b32.xlu0 %v1589, 90
        %v1760 = vpop.permute.xlu0 %1759
        %1761 = vrot.lane.b32.xlu0 %v1590, 90
        %v1762 = vpop.permute.xlu0 %1761
        %v1763 = vsel %vm893, %v1752, %v1754
        %v1764 = vsel %vm893, %v1754, %v1756
        %v1765 = vsel %vm893, %v1758, %v1760
        %v1766 = vsel %vm893, %v1760, %v1762
        %v1773 = vpack.c.bf16 %v1588, %v1585
        %v1774 = vpack.c.bf16 %v1589, %v1586
        %v1775 = vpack.c.bf16 %v1590, %v1587
        %v1776 = vpack.c.bf16 %v1611, %v1609
        %v1777 = vpack.c.bf16 %v1612, %v1610
        %v1778 = vpack.c.bf16 %v1608, %v1602
        %v1779 = vpack.c.bf16 %v1633, %v1631
        %v1780 = vpack.c.bf16 %v1634, %v1632
        %v1781 = vpack.c.bf16 %v1630, %v1624
        %v1782 = vpack.c.bf16 %v1655, %v1653
        %v1783 = vpack.c.bf16 %v1656, %v1654
        %v1784 = vpack.c.bf16 %v1652, %v1646
        %v1785 = vpack.c.bf16 %v1677, %v1675
        %v1786 = vpack.c.bf16 %v1678, %v1676
        %v1787 = vpack.c.bf16 %v1674, %v1668
        %v1788 = vpack.c.bf16 %v1699, %v1697
        %v1789 = vpack.c.bf16 %v1700, %v1698
        %v1790 = vpack.c.bf16 %v1696, %v1690
        %v1791 = vpack.c.bf16 %v1721, %v1719
        %v1792 = vpack.c.bf16 %v1722, %v1720
        %v1793 = vpack.c.bf16 %v1718, %v1712
        %v1794 = vpack.c.bf16 %v1743, %v1741
        %v1795 = vpack.c.bf16 %v1744, %v1742
        %v1796 = vpack.c.bf16 %v1740, %v1734
        %v1797 = vpack.c.bf16 %v1765, %v1763
        %v1798 = vpack.c.bf16 %v1766, %v1764
        %v1799 = vpack.c.bf16 %v1762, %v1756
        %v1800 = vld [vmem:[#allocation8] sm:$0xff]
        %v1801 = vld [vmem:[#allocation8 + $0x8] sm:$0xff]
        %v1802 = vld [vmem:[%s4] sm:$0xff]
        %v1803 = vld [vmem:[%s4 + $0x8] sm:$0xff]
        %1805 = vset.pattern.permute.xlu0 0
        %1806 = vperm.xlu0 %1805, %v1802
        %v1807 = vpop.permute.xlu0 %1806
        %1810 = vset.pattern.permute.xlu0 0
        %1811 = vperm.xlu0 %1810, %v1803
        %v1812 = vpop.permute.xlu0 %1811
        %v1816 = vunpack.c.l.b16 %v1800
        %v1817 = vunpack.c.h.b16 %v1800
        %v1818 = vunpack.c.l.b16 %v1801
        %v1819 = vunpack.c.h.b16 %v1801
        %v1820 = vpack.c.b16 %v1818, %v1816
        %v1821 = vpack.c.b16 %v1819, %v1817
        %vm1823 = vcmask 130048
        %v1825 = vsel %vm1823, %v1821, 0
        %1827 = vmatprep.subr.bf16.mxu0 %v1774
        %1828 = vmatpush1.bf16.msra.mxu0 %v1773
        %1829 = vmatprep.subr.bf16.mxu0 %v1777
        %1830 = vmatpush1.bf16.msra.mxu0 %v1776
        %1831 = vmatprep.subr.bf16.mxu0 %v1780
        %1832 = vmatpush1.bf16.msra.mxu0 %v1779
        %1833 = vmatprep.subr.bf16.mxu0 %v1783
        %1834 = vmatpush1.bf16.msra.mxu0 %v1782
        %1835 = vmatprep.subr.bf16.mxu0 %v1786
        %1836 = vmatpush1.bf16.msra.mxu0 %v1785
        %1837 = vmatprep.subr.bf16.mxu0 %v1789
        %1838 = vmatpush1.bf16.msra.mxu0 %v1788
        %1839 = vmatprep.subr.bf16.mxu0 %v1792
        %1840 = vmatpush1.bf16.msra.mxu0 %v1791
        %1841 = vmatprep.subr.bf16.mxu0 %v1795
        %1842 = vmatpush1.bf16.msra.mxu0 %v1794
        %1843 = vmatprep.subr.bf16.mxu0 %v1798
        %1844 = vmatpush1.bf16.msra.mxu0 %v1797
        %1845 = vmatprep.subr.bf16.mxu0 0
        %1846 = vmatpush1.bf16.msra.mxu0 0
        %1847 = vmatprep.subr.bf16.mxu0 0
        %1848 = vmatpush1.bf16.msra.mxu0 0
        %1849 = vmatprep.subr.bf16.mxu0 0
        %1850 = vmatpush1.bf16.msra.mxu0 0
        %1851 = vmatprep.subr.bf16.mxu0 0
        %1852 = vmatpush1.bf16.msra.mxu0 0
        %1853 = vmatprep.subr.bf16.mxu0 0
        %1854 = vmatpush1.bf16.msra.mxu0 0
        %1855 = vmatprep.subr.bf16.mxu0 0
        %1856 = vmatpush1.bf16.msra.mxu0 0
        %1857 = vmatprep.subr.bf16.mxu0 0
        %1858 = vmatpush1.bf16.msra.mxu0 0
        %1859 = vmatprep.mubr.bf16.mxu0 %v1825
        %1860 = vmatmul.mubr.bf16.gmra.mrb[0].mxu0 %v1820
        %v1861 = vpop.f32.mrb[0].mxu0
        %v1862 = vadd.f32 %v1807, %v1861
        %v1863 = vpop.f32.mrb[0].mxu0
        %v1864 = vadd.f32 %v1807, %v1863
        %v1865 = vpop.f32.mrb[0].mxu0
        %v1866 = vadd.f32 %v1812, %v1865
        %v1867 = vpop.f32.mrb[0].mxu0
        %v1868 = vadd.f32 %v1812, %v1867
        %1869 = vdwg.mxu0
        %1870 = vmatprep.subr.bf16.mxu0 0
        %1871 = vmatpush1.bf16.msra.mxu0 %v1775
        %1872 = vmatprep.subr.bf16.mxu0 0
        %1873 = vmatpush1.bf16.msra.mxu0 %v1778
        %1874 = vmatprep.subr.bf16.mxu0 0
        %1875 = vmatpush1.bf16.msra.mxu0 %v1781
        %1876 = vmatprep.subr.bf16.mxu0 0
        %1877 = vmatpush1.bf16.msra.mxu0 %v1784
        %1878 = vmatprep.subr.bf16.mxu0 0
        %1879 = vmatpush1.bf16.msra.mxu0 %v1787
        %1880 = vmatprep.subr.bf16.mxu0 0
        %1881 = vmatpush1.bf16.msra.mxu0 %v1790
        %1882 = vmatprep.subr.bf16.mxu0 0
        %1883 = vmatpush1.bf16.msra.mxu0 %v1793
        %1884 = vmatprep.subr.bf16.mxu0 0
        %1885 = vmatpush1.bf16.msra.mxu0 %v1796
        %1886 = vmatprep.subr.bf16.mxu0 0
        %1887 = vmatpush1.bf16.msra.mxu0 %v1799
        %1888 = vmatprep.subr.bf16.mxu0 0
        %1889 = vmatpush1.bf16.msra.mxu0 0
        %1890 = vmatprep.subr.bf16.mxu0 0
        %1891 = vmatpush1.bf16.msra.mxu0 0
        %1892 = vmatprep.subr.bf16.mxu0 0
        %1893 = vmatpush1.bf16.msra.mxu0 0
        %1894 = vmatprep.subr.bf16.mxu0 0
        %1895 = vmatpush1.bf16.msra.mxu0 0
        %1896 = vmatprep.subr.bf16.mxu0 0
        %1897 = vmatpush1.bf16.msra.mxu0 0
        %1898 = vmatprep.subr.bf16.mxu0 0
        %1899 = vmatpush1.bf16.msra.mxu0 0
        %1900 = vmatprep.subr.bf16.mxu0 0
        %1901 = vmatpush1.bf16.msra.mxu0 0
        %1902 = vmatprep.mubr.bf16.mxu0 %v1825
        %1903 = vmatmul.mubr.bf16.gmra.mrb[0].mxu0 %v1820
        %v1904 = vpop.f32.mrb[0].mxu0
        %v1905 = vadd.f32 %v1807, %v1904
        %v1906 = vpop.f32.mrb[0].mxu0
        %v1907 = vpop.f32.mrb[0].mxu0
        %v1908 = vadd.f32 %v1812, %v1907
        %v1909 = vpop.f32.mrb[0].mxu0
        %1910 = vdwg.mxu0
        %v1911 = vmax.f32 %v1862, 0.0
        %v1912 = vmax.f32 %v1864, 0.0
        %v1913 = vmax.f32 %v1905, 0.0
        %v1914 = vmax.f32 %v1866, 0.0
        %v1915 = vmax.f32 %v1868, 0.0
        %v1916 = vmax.f32 %v1908, 0.0
        %1917 = vst [vmem:[#allocation2] sm:$0xff] %v1911
        %1918 = vst [vmem:[#allocation2 + $0x8] sm:$0xff] %v1912
        %1919 = vst.msk [vmem:[#allocation2 + $0x10] sm:$0xff] %vm1397, %v1913
        %1920 = vst [vmem:[#allocation2 + $0x18] sm:$0xff] %v1914
        %1921 = vst [vmem:[#allocation2 + $0x20] sm:$0xff] %v1915
        %1922 = vst.msk [vmem:[#allocation2 + $0x28] sm:$0xff] %vm1397, %v1916
        %v1923 = vld [vmem:[#allocation2] sm:$0xff]
        %v1924 = vld [vmem:[#allocation2 + $0x8] sm:$0xff]
        %v1925 = vld [vmem:[#allocation2 + $0x10] sm:$0xff]
        %v1926 = vld [vmem:[#allocation2 + $0x18] sm:$0xff]
        %v1927 = vld [vmem:[#allocation2 + $0x20] sm:$0xff]
        %v1928 = vld [vmem:[#allocation2 + $0x28] sm:$0xff]
        %1935 = vrot.lane.b32.xlu0 %v1923, 127
        %v1936 = vpop.permute.xlu0 %1935
        %1937 = vrot.lane.b32.xlu0 %v1924, 127
        %v1938 = vpop.permute.xlu0 %1937
        %1939 = vrot.lane.b32.xlu0 %v1925, 127
        %v1940 = vpop.permute.xlu0 %1939
        %1941 = vrot.lane.b32.xlu0 %v1926, 127
        %v1942 = vpop.permute.xlu0 %1941
        %1943 = vrot.lane.b32.xlu0 %v1927, 127
        %v1944 = vpop.permute.xlu0 %1943
        %1945 = vrot.lane.b32.xlu0 %v1928, 127
        %v1946 = vpop.permute.xlu0 %1945
        %v1947 = vsel %vm809, %v1936, %v1938
        %v1948 = vsel %vm809, %v1938, %v1940
        %v1949 = vsel %vm809, %v1942, %v1944
        %v1950 = vsel %vm809, %v1944, %v1946
        %v1957 = vmax.f32 %v1923, %v1947
        %v1958 = vmax.f32 %v1924, %v1948
        %v1959 = vmax.f32 %v1925, %v1940
        %v1960 = vmax.f32 %v1926, %v1949
        %v1961 = vmax.f32 %v1927, %v1950
        %v1962 = vmax.f32 %v1928, %v1946
        %1963 = vrot.lane.b32.xlu0 %v1923, 110
        %v1964 = vpop.permute.xlu0 %1963
        %1965 = vrot.lane.b32.xlu0 %v1924, 110
        %v1966 = vpop.permute.xlu0 %1965
        %1967 = vrot.lane.b32.xlu0 %v1925, 110
        %v1968 = vpop.permute.xlu0 %1967
        %1969 = vrot.lane.b32.xlu0 %v1926, 110
        %v1970 = vpop.permute.xlu0 %1969
        %1971 = vrot.lane.b32.xlu0 %v1927, 110
        %v1972 = vpop.permute.xlu0 %1971
        %1973 = vrot.lane.b32.xlu0 %v1928, 110
        %v1974 = vpop.permute.xlu0 %1973
        %v1975 = vsel %vm833, %v1964, %v1966
        %v1976 = vsel %vm833, %v1966, %v1968
        %v1977 = vsel %vm833, %v1970, %v1972
        %v1978 = vsel %vm833, %v1972, %v1974
        %v1985 = vmax.f32 %v1957, %v1975
        %v1986 = vmax.f32 %v1958, %v1976
        %v1987 = vmax.f32 %v1959, %v1968
        %v1988 = vmax.f32 %v1960, %v1977
        %v1989 = vmax.f32 %v1961, %v1978
        %v1990 = vmax.f32 %v1962, %v1974
        %1991 = vrot.lane.b32.xlu0 %v1923, 109
        %v1992 = vpop.permute.xlu0 %1991
        %1993 = vrot.lane.b32.xlu0 %v1924, 109
        %v1994 = vpop.permute.xlu0 %1993
        %1995 = vrot.lane.b32.xlu0 %v1925, 109
        %v1996 = vpop.permute.xlu0 %1995
        %1997 = vrot.lane.b32.xlu0 %v1926, 109
        %v1998 = vpop.permute.xlu0 %1997
        %1999 = vrot.lane.b32.xlu0 %v1927, 109
        %v2000 = vpop.permute.xlu0 %1999
        %2001 = vrot.lane.b32.xlu0 %v1928, 109
        %v2002 = vpop.permute.xlu0 %2001
        %v2003 = vsel %vm845, %v1992, %v1994
        %v2004 = vsel %vm845, %v1994, %v1996
        %v2005 = vsel %vm845, %v1998, %v2000
        %v2006 = vsel %vm845, %v2000, %v2002
        %v2013 = vmax.f32 %v1985, %v2003
        %v2014 = vmax.f32 %v1986, %v2004
        %v2015 = vmax.f32 %v1987, %v1996
        %v2016 = vmax.f32 %v1988, %v2005
        %v2017 = vmax.f32 %v1989, %v2006
        %v2018 = vmax.f32 %v1990, %v2002
        %v2019 = vpack.c.bf16 %v2016, %v2013
        %v2020 = vpack.c.bf16 %v2017, %v2014
        %v2021 = vpack.c.bf16 %v2018, %v2015
        %v2022 = vld [vmem:[%s16] sm:$0xf]
        %v2023 = vld [vmem:[%s16 + $0x4] sm:$0xf]
        %v2024 = vld [vmem:[%s16 + $0x8] sm:$0xf]
        %v2025 = vld [vmem:[%s16 + $0xc] sm:$0xf]
        %v2026 = vld [vmem:[%s16 + $0x10] sm:$0xf]
        %v2027 = vld [vmem:[%s16 + $0x14] sm:$0xf]
        %v2028 = vld [vmem:[%s16 + $0x18] sm:$0xf]
        %v2029 = vld [vmem:[%s16 + $0x1c] sm:$0xf]
        %v2030 = vld [vmem:[%s16 + $0x20] sm:$0xf]
        %v2031 = vld [vmem:[%s16 + $0x24] sm:$0xf]
        %v2032 = vld [vmem:[%s16 + $0x28] sm:$0xf]
        %v2033 = vld [vmem:[%s16 + $0x2c] sm:$0xf]
        %v2034 = vld [vmem:[%s16 + $0x30] sm:$0xf]
        %v2035 = vld [vmem:[%s16 + $0x34] sm:$0xf]
        %v2036 = vld [vmem:[%s16 + $0x38] sm:$0xf]
        %v2037 = vld [vmem:[%s16 + $0x3c] sm:$0xf]
        %v2038 = vld [vmem:[%s16 + $0x40] sm:$0xf]
        %v2039 = vld [vmem:[%s16 + $0x44] sm:$0xf]
        %v2040 = vld [vmem:[%s16 + $0x48] sm:$0xf]
        %v2041 = vld [vmem:[%s16 + $0x4c] sm:$0xf]
        %v2042 = vld [vmem:[%s16 + $0x50] sm:$0xf]
        %v2043 = vld [vmem:[%s16 + $0x54] sm:$0xf]
        %v2044 = vld [vmem:[%s16 + $0x58] sm:$0xf]
        %v2045 = vld [vmem:[%s16 + $0x5c] sm:$0xf]
        %v2046 = vld [vmem:[%s16 + $0x60] sm:$0xf]
        %v2047 = vld [vmem:[%s16 + $0x64] sm:$0xf]
        %v2048 = vld [vmem:[%s16 + $0x68] sm:$0xf]
        %v2049 = vld [vmem:[%s16 + $0x6c] sm:$0xf]
        %v2050 = vld [vmem:[%s16 + $0x70] sm:$0xf]
        %v2051 = vld [vmem:[%s16 + $0x74] sm:$0xf]
        %v2052 = vld [vmem:[%s16 + $0x78] sm:$0xf]
        %v2053 = vld [vmem:[%s16 + $0x7c] sm:$0xf]
        %v2054 = vld [vmem:[%s16 + $0x80] sm:$0xf]
        %v2055 = vld [vmem:[%s16 + $0x84] sm:$0x3]
        %v2090 = vunpack.c.l.b16 %v2022
        %v2091 = vunpack.c.l.b16 %v2023
        %v2092 = vunpack.c.l.b16 %v2024
        %v2093 = vunpack.c.l.b16 %v2025
        %v2094 = vunpack.c.l.b16 %v2026
        %v2095 = vunpack.c.l.b16 %v2027
        %v2096 = vunpack.c.l.b16 %v2028
        %v2097 = vunpack.c.l.b16 %v2029
        %v2098 = vunpack.c.l.b16 %v2030
        %v2099 = vunpack.c.l.b16 %v2031
        %v2100 = vunpack.c.l.b16 %v2032
        %v2101 = vunpack.c.l.b16 %v2033
        %v2102 = vunpack.c.l.b16 %v2034
        %v2103 = vunpack.c.l.b16 %v2035
        %v2104 = vunpack.c.l.b16 %v2036
        %v2105 = vunpack.c.l.b16 %v2037
        %v2106 = vunpack.c.l.b16 %v2038
        %v2107 = vunpack.c.l.b16 %v2039
        %v2108 = vunpack.c.l.b16 %v2040
        %v2109 = vunpack.c.l.b16 %v2041
        %v2110 = vunpack.c.l.b16 %v2042
        %v2111 = vunpack.c.l.b16 %v2043
        %v2112 = vunpack.c.l.b16 %v2044
        %v2113 = vunpack.c.l.b16 %v2045
        %v2114 = vunpack.c.l.b16 %v2046
        %v2115 = vunpack.c.l.b16 %v2047
        %v2116 = vunpack.c.l.b16 %v2048
        %v2117 = vunpack.c.l.b16 %v2049
        %v2118 = vunpack.c.l.b16 %v2050
        %v2119 = vunpack.c.l.b16 %v2051
        %v2120 = vunpack.c.l.b16 %v2052
        %v2121 = vunpack.c.l.b16 %v2053
        %v2122 = vunpack.c.l.b16 %v2054
        %v2123 = vunpack.c.l.b16 %v2055
        %v2124 = vpack.c.b16 %v2091, %v2090
        %v2125 = vpack.c.b16 %v2093, %v2092
        %v2126 = vpack.c.b16 %v2095, %v2094
        %v2127 = vpack.c.b16 %v2097, %v2096
        %v2128 = vpack.c.b16 %v2099, %v2098
        %v2129 = vpack.c.b16 %v2101, %v2100
        %v2130 = vpack.c.b16 %v2103, %v2102
        %v2131 = vpack.c.b16 %v2105, %v2104
        %v2132 = vpack.c.b16 %v2107, %v2106
        %v2133 = vpack.c.b16 %v2109, %v2108
        %v2134 = vpack.c.b16 %v2111, %v2110
        %v2135 = vpack.c.b16 %v2113, %v2112
        %v2136 = vpack.c.b16 %v2115, %v2114
        %v2137 = vpack.c.b16 %v2117, %v2116
        %v2138 = vpack.c.b16 %v2119, %v2118
        %v2139 = vpack.c.b16 %v2121, %v2120
        %v2140 = vpack.c.b16 %v2123, %v2122
        %vm2157 = vcmask 89088
        %v2159 = vsel %vm2157, %v2021, 0
        %vm2161 = vcmask 1044480
        %vm2162 = vcmask 1045504
        %v2163 = vsel %vm2161, 4294967295, 65535
        %v2164 = vsel %vm2162, %v2163, 0
        %v2166 = vand.u32 %v2140, %v2164
        %2168 = vmatprep.subr.bf16.mxu0 0
        %2169 = vmatpush1.bf16.msra.mxu0 %v2124
        %2170 = vmatprep.subr.bf16.mxu0 0
        %2171 = vmatpush1.bf16.msra.mxu0 %v2125
        %2172 = vmatprep.subr.bf16.mxu0 0
        %2173 = vmatpush1.bf16.msra.mxu0 %v2126
        %2174 = vmatprep.subr.bf16.mxu0 0
        %2175 = vmatpush1.bf16.msra.mxu0 %v2127
        %2176 = vmatprep.subr.bf16.mxu0 0
        %2177 = vmatpush1.bf16.msra.mxu0 %v2128
        %2178 = vmatprep.subr.bf16.mxu0 0
        %2179 = vmatpush1.bf16.msra.mxu0 %v2129
        %2180 = vmatprep.subr.bf16.mxu0 0
        %2181 = vmatpush1.bf16.msra.mxu0 %v2130
        %2182 = vmatprep.subr.bf16.mxu0 0
        %2183 = vmatpush1.bf16.msra.mxu0 %v2131
        %2184 = vmatprep.subr.bf16.mxu0 0
        %2185 = vmatpush1.bf16.msra.mxu0 %v2132
        %2186 = vmatprep.subr.bf16.mxu0 0
        %2187 = vmatpush1.bf16.msra.mxu0 %v2133
        %2188 = vmatprep.subr.bf16.mxu0 0
        %2189 = vmatpush1.bf16.msra.mxu0 %v2134
        %2190 = vmatprep.subr.bf16.mxu0 0
        %2191 = vmatpush1.bf16.msra.mxu0 %v2135
        %2192 = vmatprep.subr.bf16.mxu0 0
        %2193 = vmatpush1.bf16.msra.mxu0 %v2136
        %2194 = vmatprep.subr.bf16.mxu0 0
        %2195 = vmatpush1.bf16.msra.mxu0 %v2137
        %2196 = vmatprep.subr.bf16.mxu0 0
        %2197 = vmatpush1.bf16.msra.mxu0 %v2138
        %2198 = vmatprep.subr.bf16.mxu0 0
        %2199 = vmatpush1.bf16.msra.mxu0 %v2139
        %2200 = vmatprep.mubr.bf16.mxu0 %v2020
        %2201 = vmatmul.mubr.bf16.gmra.mrb[0].mxu0 %v2019
        %v2202 = vpop.f32.mrb[0].mxu0
        %v2203 = vadd.f32 0.0, %v2202
        %v2204 = vpop.f32.mrb[0].mxu0
        %v2205 = vpop.f32.mrb[0].mxu0
        %v2206 = vadd.f32 0.0, %v2205
        %v2207 = vpop.f32.mrb[0].mxu0
        %2208 = vdwg.mxu0
        %2209 = vmatprep.subr.bf16.mxu0 0
        %2210 = vmatpush1.bf16.msra.mxu0 %v2166
        %2211 = vmatprep.subr.bf16.mxu0 0
        %2212 = vmatpush1.bf16.msra.mxu0 0
        %2213 = vmatprep.subr.bf16.mxu0 0
        %2214 = vmatpush1.bf16.msra.mxu0 0
        %2215 = vmatprep.subr.bf16.mxu0 0
        %2216 = vmatpush1.bf16.msra.mxu0 0
        %2217 = vmatprep.subr.bf16.mxu0 0
        %2218 = vmatpush1.bf16.msra.mxu0 0
        %2219 = vmatprep.subr.bf16.mxu0 0
        %2220 = vmatpush1.bf16.msra.mxu0 0
        %2221 = vmatprep.subr.bf16.mxu0 0
        %2222 = vmatpush1.bf16.msra.mxu0 0
        %2223 = vmatprep.subr.bf16.mxu0 0
        %2224 = vmatpush1.bf16.msra.mxu0 0
        %2225 = vmatprep.subr.bf16.mxu0 0
        %2226 = vmatpush1.bf16.msra.mxu0 0
        %2227 = vmatprep.subr.bf16.mxu0 0
        %2228 = vmatpush1.bf16.msra.mxu0 0
        %2229 = vmatprep.subr.bf16.mxu0 0
        %2230 = vmatpush1.bf16.msra.mxu0 0
        %2231 = vmatprep.subr.bf16.mxu0 0
        %2232 = vmatpush1.bf16.msra.mxu0 0
        %2233 = vmatprep.subr.bf16.mxu0 0
        %2234 = vmatpush1.bf16.msra.mxu0 0
        %2235 = vmatprep.subr.bf16.mxu0 0
        %2236 = vmatpush1.bf16.msra.mxu0 0
        %2237 = vmatprep.subr.bf16.mxu0 0
        %2238 = vmatpush1.bf16.msra.mxu0 0
        %2239 = vmatprep.subr.bf16.mxu0 0
        %2240 = vmatpush1.bf16.msra.mxu0 0
        %2241 = vmatprep.mubr.bf16.mxu0 0
        %2242 = vmatmul.mubr.bf16.gmra.mrb[0].mxu0 %v2159
        %v2243 = vpop.f32.mrb[0].mxu0
        %v2244 = vadd.f32 %v2203, %v2243
        %v2245 = vpop.f32.mrb[0].mxu0
        %v2246 = vpop.f32.mrb[0].mxu0
        %v2247 = vadd.f32 %v2206, %v2246
        %v2248 = vpop.f32.mrb[0].mxu0
        %2249 = vdwg.mxu0
        %vm2250 = vcmask 818176
        %2251 = vst.msk [vmem:[#allocation2] sm:$0xff] %vm2250, %v2244
        %2252 = vst.msk [vmem:[#allocation2 + $0x18] sm:$0xff] %vm2250, %v2247
        %v2253 = vld [vmem:[#allocation2] sm:$0xff]
        %v2254 = vld [vmem:[#allocation2 + $0x18] sm:$0xff]
        %2257 = vrot.lane.b32.xlu0 %v2253, 127
        %v2258 = vpop.permute.xlu0 %2257
        %2259 = vrot.lane.b32.xlu0 %v2254, 127
        %v2260 = vpop.permute.xlu0 %2259
        %2263 = vrot.lane.b32.xlu0 %v2253, 126
        %v2264 = vpop.permute.xlu0 %2263
        %2265 = vrot.lane.b32.xlu0 %v2254, 126
        %v2266 = vpop.permute.xlu0 %2265
        %2269 = vrot.lane.b32.xlu0 %v2253, 118
        %v2270 = vpop.permute.xlu0 %2269
        %2271 = vrot.lane.b32.xlu0 %v2254, 118
        %v2272 = vpop.permute.xlu0 %2271
        %2275 = vrot.lane.b32.xlu0 %v2253, 117
        %v2276 = vpop.permute.xlu0 %2275
        %2277 = vrot.lane.b32.xlu0 %v2254, 117
        %v2278 = vpop.permute.xlu0 %2277
        %2281 = vrot.lane.b32.xlu0 %v2253, 116
        %v2282 = vpop.permute.xlu0 %2281
        %2283 = vrot.lane.b32.xlu0 %v2254, 116
        %v2284 = vpop.permute.xlu0 %2283
        %2287 = vrot.lane.b32.xlu0 %v2253, 108
        %v2288 = vpop.permute.xlu0 %2287
        %2289 = vrot.lane.b32.xlu0 %v2254, 108
        %v2290 = vpop.permute.xlu0 %2289
        %2293 = vrot.lane.b32.xlu0 %v2253, 107
        %v2294 = vpop.permute.xlu0 %2293
        %2295 = vrot.lane.b32.xlu0 %v2254, 107
        %v2296 = vpop.permute.xlu0 %2295
        %2299 = vrot.lane.b32.xlu0 %v2253, 106
        %v2300 = vpop.permute.xlu0 %2299
        %2301 = vrot.lane.b32.xlu0 %v2254, 106
        %v2302 = vpop.permute.xlu0 %2301
        %v2305 = vpack.c.bf16 %v2254, %v2253
        %v2306 = vpack.c.bf16 %v2260, %v2258
        %v2307 = vpack.c.bf16 %v2266, %v2264
        %v2308 = vpack.c.bf16 %v2272, %v2270
        %v2309 = vpack.c.bf16 %v2278, %v2276
        %v2310 = vpack.c.bf16 %v2284, %v2282
        %v2311 = vpack.c.bf16 %v2290, %v2288
        %v2312 = vpack.c.bf16 %v2296, %v2294
        %v2313 = vpack.c.bf16 %v2302, %v2300
        %v2314 = vld [vmem:[#allocation9] sm:$0xff]
        %v2315 = vld [vmem:[#allocation9 + $0x8] sm:$0xff]
        %v2316 = vld [vmem:[#allocation9 + $0x10] sm:$0xff]
        %v2317 = vld [vmem:[#allocation9 + $0x18] sm:$0xff]
        %v2318 = vld [vmem:[%s6] sm:$0xff]
        %v2319 = vld [vmem:[%s6 + $0x8] sm:$0xff]
        %v2320 = vld [vmem:[%s6 + $0x10] sm:$0xff]
        %v2321 = vld [vmem:[%s6 + $0x18] sm:$0xff]
        %2323 = vset.pattern.permute.xlu0 0
        %2324 = vperm.xlu0 %2323, %v2318
        %v2325 = vpop.permute.xlu0 %2324
        %2328 = vset.pattern.permute.xlu0 0
        %2329 = vperm.xlu0 %2328, %v2319
        %v2330 = vpop.permute.xlu0 %2329
        %2333 = vset.pattern.permute.xlu0 0
        %2334 = vperm.xlu0 %2333, %v2320
        %v2335 = vpop.permute.xlu0 %2334
        %2338 = vset.pattern.permute.xlu0 0
        %2339 = vperm.xlu0 %2338, %v2321
        %v2340 = vpop.permute.xlu0 %2339
        %v2346 = vunpack.c.l.b16 %v2314
        %v2347 = vunpack.c.h.b16 %v2314
        %v2348 = vunpack.c.l.b16 %v2315
        %v2349 = vunpack.c.h.b16 %v2315
        %v2350 = vunpack.c.l.b16 %v2316
        %v2351 = vunpack.c.h.b16 %v2316
        %v2352 = vunpack.c.l.b16 %v2317
        %v2353 = vunpack.c.h.b16 %v2317
        %v2354 = vpack.c.b16 %v2348, %v2346
        %v2355 = vpack.c.b16 %v2349, %v2347
        %v2356 = vpack.c.b16 %v2352, %v2350
        %v2357 = vpack.c.b16 %v2353, %v2351
        %v2361 = vsel %vm1823, %v2355, 0
        %v2364 = vsel %vm1823, %v2357, 0
        %2366 = vmatprep.subr.bf16.mxu0 0
        %2367 = vmatpush1.bf16.msra.mxu0 %v2305
        %2368 = vmatprep.subr.bf16.mxu0 0
        %2369 = vmatpush1.bf16.msra.mxu0 %v2306
        %2370 = vmatprep.subr.bf16.mxu0 0
        %2371 = vmatpush1.bf16.msra.mxu0 %v2307
        %2372 = vmatprep.subr.bf16.mxu0 0
        %2373 = vmatpush1.bf16.msra.mxu0 %v2308
        %2374 = vmatprep.subr.bf16.mxu0 0
        %2375 = vmatpush1.bf16.msra.mxu0 %v2309
        %2376 = vmatprep.subr.bf16.mxu0 0
        %2377 = vmatpush1.bf16.msra.mxu0 %v2310
        %2378 = vmatprep.subr.bf16.mxu0 0
        %2379 = vmatpush1.bf16.msra.mxu0 %v2311
        %2380 = vmatprep.subr.bf16.mxu0 0
        %2381 = vmatpush1.bf16.msra.mxu0 %v2312
        %2382 = vmatprep.subr.bf16.mxu0 0
        %2383 = vmatpush1.bf16.msra.mxu0 %v2313
        %2384 = vmatprep.subr.bf16.mxu0 0
        %2385 = vmatpush1.bf16.msra.mxu0 0
        %2386 = vmatprep.subr.bf16.mxu0 0
        %2387 = vmatpush1.bf16.msra.mxu0 0
        %2388 = vmatprep.subr.bf16.mxu0 0
        %2389 = vmatpush1.bf16.msra.mxu0 0
        %2390 = vmatprep.subr.bf16.mxu0 0
        %2391 = vmatpush1.bf16.msra.mxu0 0
        %2392 = vmatprep.subr.bf16.mxu0 0
        %2393 = vmatpush1.bf16.msra.mxu0 0
        %2394 = vmatprep.subr.bf16.mxu0 0
        %2395 = vmatpush1.bf16.msra.mxu0 0
        %2396 = vmatprep.subr.bf16.mxu0 0
        %2397 = vmatpush1.bf16.msra.mxu0 0
        %2398 = vmatprep.mubr.bf16.mxu0 %v2361
        %2399 = vmatmul.mubr.bf16.gmra.mrb[0].mxu0 %v2354
        %v2400 = vpop.f32.mrb[0].mxu0
        %v2401 = vadd.f32 %v2325, %v2400
        %v2402 = vpop.f32.mrb[0].mxu0
        %v2403 = vpop.f32.mrb[0].mxu0
        %v2404 = vadd.f32 %v2330, %v2403
        %v2405 = vpop.f32.mrb[0].mxu0
        %2406 = vmatprep.mubr.bf16.mxu0 %v2364
        %2407 = vmatmul.mubr.bf16.gmra.mrb[0].mxu0 %v2356
        %v2408 = vpop.f32.mrb[0].mxu0
        %v2409 = vadd.f32 %v2335, %v2408
        %v2410 = vpop.f32.mrb[0].mxu0
        %v2411 = vpop.f32.mrb[0].mxu0
        %v2412 = vadd.f32 %v2340, %v2411
        %v2413 = vpop.f32.mrb[0].mxu0
        %2414 = vdwg.mxu0
        %v2415 = vmax.f32 %v2401, 0.0
        %v2416 = vmax.f32 %v2404, 0.0
        %v2417 = vmax.f32 %v2409, 0.0
        %v2418 = vmax.f32 %v2412, 0.0
        %v2419 = vpack.c.bf16 %v2416, %v2415
        %v2420 = vpack.c.bf16 %v2418, %v2417
        %v2421 = vld [vmem:[%s14] sm:$0xf]
        %v2422 = vld [vmem:[%s14 + $0x4] sm:$0xf]
        %v2423 = vld [vmem:[%s14 + $0x8] sm:$0xf]
        %v2424 = vld [vmem:[%s14 + $0xc] sm:$0xf]
        %v2425 = vld [vmem:[%s14 + $0x10] sm:$0xf]
        %v2426 = vld [vmem:[%s14 + $0x14] sm:$0xf]
        %v2427 = vld [vmem:[%s14 + $0x18] sm:$0xf]
        %v2428 = vld [vmem:[%s14 + $0x1c] sm:$0xf]
        %v2429 = vld [vmem:[%s14 + $0x20] sm:$0xf]
        %v2430 = vld [vmem:[%s14 + $0x24] sm:$0x7]
        %v2441 = vunpack.c.l.b16 %v2421
        %v2442 = vunpack.c.l.b16 %v2422
        %v2443 = vunpack.c.l.b16 %v2423
        %v2444 = vunpack.c.l.b16 %v2424
        %v2445 = vunpack.c.l.b16 %v2425
        %v2446 = vunpack.c.l.b16 %v2426
        %v2447 = vunpack.c.l.b16 %v2427
        %v2448 = vunpack.c.l.b16 %v2428
        %v2449 = vunpack.c.l.b16 %v2429
        %v2450 = vunpack.c.l.b16 %v2430
        %v2451 = vpack.c.b16 %v2442, %v2441
        %v2452 = vpack.c.b16 %v2444, %v2443
        %v2453 = vpack.c.b16 %v2446, %v2445
        %v2454 = vpack.c.b16 %v2448, %v2447
        %v2455 = vpack.c.b16 %v2450, %v2449
        %vm2460 = vcmask 637952
        %v2462 = vsel %vm2460, %v2419, 0
        %v2465 = vsel %vm2460, %v2420, 0
        %v2468 = vsel %vm1401, %v2455, 0
        %2470 = vmatprep.subr.bf16.mxu0 0
        %2471 = vmatpush1.bf16.msra.mxu0 %v2451
        %2472 = vmatprep.subr.bf16.mxu0 0
        %2473 = vmatpush1.bf16.msra.mxu0 %v2452
        %2474 = vmatprep.subr.bf16.mxu0 0
        %2475 = vmatpush1.bf16.msra.mxu0 %v2453
        %2476 = vmatprep.subr.bf16.mxu0 0
        %2477 = vmatpush1.bf16.msra.mxu0 %v2454
        %2478 = vmatprep.subr.bf16.mxu0 0
        %2479 = vmatpush1.bf16.msra.mxu0 %v2468
        %2480 = vmatprep.subr.bf16.mxu0 0
        %2481 = vmatpush1.bf16.msra.mxu0 0
        %2482 = vmatprep.subr.bf16.mxu0 0
        %2483 = vmatpush1.bf16.msra.mxu0 0
        %2484 = vmatprep.subr.bf16.mxu0 0
        %2485 = vmatpush1.bf16.msra.mxu0 0
        %2486 = vmatprep.subr.bf16.mxu0 0
        %2487 = vmatpush1.bf16.msra.mxu0 0
        %2488 = vmatprep.subr.bf16.mxu0 0
        %2489 = vmatpush1.bf16.msra.mxu0 0
        %2490 = vmatprep.subr.bf16.mxu0 0
        %2491 = vmatpush1.bf16.msra.mxu0 0
        %2492 = vmatprep.subr.bf16.mxu0 0
        %2493 = vmatpush1.bf16.msra.mxu0 0
        %2494 = vmatprep.subr.bf16.mxu0 0
        %2495 = vmatpush1.bf16.msra.mxu0 0
        %2496 = vmatprep.subr.bf16.mxu0 0
        %2497 = vmatpush1.bf16.msra.mxu0 0
        %2498 = vmatprep.subr.bf16.mxu0 0
        %2499 = vmatpush1.bf16.msra.mxu0 0
        %2500 = vmatprep.subr.bf16.mxu0 0
        %2501 = vmatpush1.bf16.msra.mxu0 0
        %2502 = vmatprep.mubr.bf16.mxu0 0
        %2503 = vmatmul.mubr.bf16.gmra.mrb[0].mxu0 %v2462
        %v2504 = vpop.f32.mrb[0].mxu0
        %v2505 = vadd.f32 0.0, %v2504
        %v2506 = vpop.f32.mrb[0].mxu0
        %v2507 = vpop.f32.mrb[0].mxu0
        %v2508 = vadd.f32 0.0, %v2507
        %v2509 = vpop.f32.mrb[0].mxu0
        %2510 = vmatprep.mubr.bf16.mxu0 0
        %2511 = vmatmul.mubr.bf16.gmra.mrb[0].mxu0 %v2465
        %v2512 = vpop.f32.mrb[0].mxu0
        %v2513 = vadd.f32 0.0, %v2512
        %v2514 = vpop.f32.mrb[0].mxu0
        %v2515 = vpop.f32.mrb[0].mxu0
        %v2516 = vadd.f32 0.0, %v2515
        %v2517 = vpop.f32.mrb[0].mxu0
        %2518 = vdwg.mxu0
        %2519 = vst.msk [vmem:[#allocation2] sm:$0xff] %vm2250, %v2505
        %2520 = vst.msk [vmem:[#allocation2 + $0x18] sm:$0xff] %vm2250, %v2508
        %2521 = vst.msk [vmem:[#allocation2 + $0x30] sm:$0xff] %vm2250, %v2513
        %2522 = vst.msk [vmem:[#allocation2 + $0x48] sm:$0xff] %vm2250, %v2516
        %v2523 = vld [vmem:[#allocation2] sm:$0xff]
        %v2524 = vld [vmem:[#allocation2 + $0x18] sm:$0xff]
        %v2525 = vld [vmem:[#allocation2 + $0x30] sm:$0xff]
        %v2526 = vld [vmem:[#allocation2 + $0x48] sm:$0xff]
        %2531 = vrot.lane.b32.xlu0 %v2523, 127
        %v2532 = vpop.permute.xlu0 %2531
        %2533 = vrot.lane.b32.xlu0 %v2524, 127
        %v2534 = vpop.permute.xlu0 %2533
        %2535 = vrot.lane.b32.xlu0 %v2525, 127
        %v2536 = vpop.permute.xlu0 %2535
        %2537 = vrot.lane.b32.xlu0 %v2526, 127
        %v2538 = vpop.permute.xlu0 %2537
        %2543 = vrot.lane.b32.xlu0 %v2523, 126
        %v2544 = vpop.permute.xlu0 %2543
        %2545 = vrot.lane.b32.xlu0 %v2524, 126
        %v2546 = vpop.permute.xlu0 %2545
        %2547 = vrot.lane.b32.xlu0 %v2525, 126
        %v2548 = vpop.permute.xlu0 %2547
        %2549 = vrot.lane.b32.xlu0 %v2526, 126
        %v2550 = vpop.permute.xlu0 %2549
        %2555 = vrot.lane.b32.xlu0 %v2523, 118
        %v2556 = vpop.permute.xlu0 %2555
        %2557 = vrot.lane.b32.xlu0 %v2524, 118
        %v2558 = vpop.permute.xlu0 %2557
        %2559 = vrot.lane.b32.xlu0 %v2525, 118
        %v2560 = vpop.permute.xlu0 %2559
        %2561 = vrot.lane.b32.xlu0 %v2526, 118
        %v2562 = vpop.permute.xlu0 %2561
        %2567 = vrot.lane.b32.xlu0 %v2523, 117
        %v2568 = vpop.permute.xlu0 %2567
        %2569 = vrot.lane.b32.xlu0 %v2524, 117
        %v2570 = vpop.permute.xlu0 %2569
        %2571 = vrot.lane.b32.xlu0 %v2525, 117
        %v2572 = vpop.permute.xlu0 %2571
        %2573 = vrot.lane.b32.xlu0 %v2526, 117
        %v2574 = vpop.permute.xlu0 %2573
        %2579 = vrot.lane.b32.xlu0 %v2523, 116
        %v2580 = vpop.permute.xlu0 %2579
        %2581 = vrot.lane.b32.xlu0 %v2524, 116
        %v2582 = vpop.permute.xlu0 %2581
        %2583 = vrot.lane.b32.xlu0 %v2525, 116
        %v2584 = vpop.permute.xlu0 %2583
        %2585 = vrot.lane.b32.xlu0 %v2526, 116
        %v2586 = vpop.permute.xlu0 %2585
        %2591 = vrot.lane.b32.xlu0 %v2523, 108
        %v2592 = vpop.permute.xlu0 %2591
        %2593 = vrot.lane.b32.xlu0 %v2524, 108
        %v2594 = vpop.permute.xlu0 %2593
        %2595 = vrot.lane.b32.xlu0 %v2525, 108
        %v2596 = vpop.permute.xlu0 %2595
        %2597 = vrot.lane.b32.xlu0 %v2526, 108
        %v2598 = vpop.permute.xlu0 %2597
        %2603 = vrot.lane.b32.xlu0 %v2523, 107
        %v2604 = vpop.permute.xlu0 %2603
        %2605 = vrot.lane.b32.xlu0 %v2524, 107
        %v2606 = vpop.permute.xlu0 %2605
        %2607 = vrot.lane.b32.xlu0 %v2525, 107
        %v2608 = vpop.permute.xlu0 %2607
        %2609 = vrot.lane.b32.xlu0 %v2526, 107
        %v2610 = vpop.permute.xlu0 %2609
        %2615 = vrot.lane.b32.xlu0 %v2523, 106
        %v2616 = vpop.permute.xlu0 %2615
        %2617 = vrot.lane.b32.xlu0 %v2524, 106
        %v2618 = vpop.permute.xlu0 %2617
        %2619 = vrot.lane.b32.xlu0 %v2525, 106
        %v2620 = vpop.permute.xlu0 %2619
        %2621 = vrot.lane.b32.xlu0 %v2526, 106
        %v2622 = vpop.permute.xlu0 %2621
        %v2627 = vpack.c.bf16 %v2524, %v2523
        %v2628 = vpack.c.bf16 %v2526, %v2525
        %v2629 = vpack.c.bf16 %v2534, %v2532
        %v2630 = vpack.c.bf16 %v2538, %v2536
        %v2631 = vpack.c.bf16 %v2546, %v2544
        %v2632 = vpack.c.bf16 %v2550, %v2548
        %v2633 = vpack.c.bf16 %v2558, %v2556
        %v2634 = vpack.c.bf16 %v2562, %v2560
        %v2635 = vpack.c.bf16 %v2570, %v2568
        %v2636 = vpack.c.bf16 %v2574, %v2572
        %v2637 = vpack.c.bf16 %v2582, %v2580
        %v2638 = vpack.c.bf16 %v2586, %v2584
        %v2639 = vpack.c.bf16 %v2594, %v2592
        %v2640 = vpack.c.bf16 %v2598, %v2596
        %v2641 = vpack.c.bf16 %v2606, %v2604
        %v2642 = vpack.c.bf16 %v2610, %v2608
        %v2643 = vpack.c.bf16 %v2618, %v2616
        %v2644 = vpack.c.bf16 %v2622, %v2620
        %v2645 = vld [vmem:[#allocation11] sm:$0xff]
        %v2646 = vld [vmem:[#allocation11 + $0x8] sm:$0xf]
        %v2647 = vld [vmem:[#allocation11 + $0xc] sm:$0xff]
        %v2648 = vld [vmem:[#allocation11 + $0x14] sm:$0xf]
        %v2649 = vld [vmem:[#allocation11 + $0x18] sm:$0xff]
        %v2650 = vld [vmem:[#allocation11 + $0x20] sm:$0xf]
        %v2651 = vld [vmem:[#allocation11 + $0x24] sm:$0xff]
        %v2652 = vld [vmem:[#allocation11 + $0x2c] sm:$0xf]
        %v2653 = vld [vmem:[%s8] sm:$0xff]
        %v2654 = vld [vmem:[%s8 + $0x8] sm:$0xff]
        %v2655 = vld [vmem:[%s8 + $0x10] sm:$0xff]
        %v2656 = vld [vmem:[%s8 + $0x18] sm:$0xff]
        %2658 = vset.pattern.permute.xlu0 0
        %2659 = vperm.xlu0 %2658, %v2653
        %v2660 = vpop.permute.xlu0 %2659
        %2663 = vset.pattern.permute.xlu0 0
        %2664 = vperm.xlu0 %2663, %v2654
        %v2665 = vpop.permute.xlu0 %2664
        %2668 = vset.pattern.permute.xlu0 0
        %2669 = vperm.xlu0 %2668, %v2655
        %v2670 = vpop.permute.xlu0 %2669
        %2673 = vset.pattern.permute.xlu0 0
        %2674 = vperm.xlu0 %2673, %v2656
        %v2675 = vpop.permute.xlu0 %2674
        %v2685 = vunpack.c.l.b16 %v2645
        %v2686 = vunpack.c.h.b16 %v2645
        %v2687 = vunpack.c.l.b16 %v2646
        %v2688 = vunpack.c.l.b16 %v2647
        %v2689 = vunpack.c.h.b16 %v2647
        %v2690 = vunpack.c.l.b16 %v2648
        %v2691 = vunpack.c.l.b16 %v2649
        %v2692 = vunpack.c.h.b16 %v2649
        %v2693 = vunpack.c.l.b16 %v2650
        %v2694 = vunpack.c.l.b16 %v2651
        %v2695 = vunpack.c.h.b16 %v2651
        %v2696 = vunpack.c.l.b16 %v2652
        %v2697 = vpack.c.b16 %v2688, %v2685
        %v2698 = vpack.c.b16 %v2689, %v2686
        %v2699 = vpack.c.b16 %v2690, %v2687
        %v2700 = vpack.c.b16 %v2694, %v2691
        %v2701 = vpack.c.b16 %v2695, %v2692
        %v2702 = vpack.c.b16 %v2696, %v2693
        %vm2707 = vcmask 261120
        %v2709 = vsel %vm2707, %v2699, 0
        %v2712 = vsel %vm2707, %v2702, 0
        %2714 = vmatprep.subr.bf16.mxu0 0
        %2715 = vmatpush1.bf16.msra.mxu0 %v2627
        %2716 = vmatprep.subr.bf16.mxu0 0
        %2717 = vmatpush1.bf16.msra.mxu0 %v2628
        %2718 = vmatprep.subr.bf16.mxu0 0
        %2719 = vmatpush1.bf16.msra.mxu0 %v2629
        %2720 = vmatprep.subr.bf16.mxu0 0
        %2721 = vmatpush1.bf16.msra.mxu0 %v2630
        %2722 = vmatprep.subr.bf16.mxu0 0
        %2723 = vmatpush1.bf16.msra.mxu0 %v2631
        %2724 = vmatprep.subr.bf16.mxu0 0
        %2725 = vmatpush1.bf16.msra.mxu0 %v2632
        %2726 = vmatprep.subr.bf16.mxu0 0
        %2727 = vmatpush1.bf16.msra.mxu0 %v2633
        %2728 = vmatprep.subr.bf16.mxu0 0
        %2729 = vmatpush1.bf16.msra.mxu0 %v2634
        %2730 = vmatprep.subr.bf16.mxu0 0
        %2731 = vmatpush1.bf16.msra.mxu0 %v2635
        %2732 = vmatprep.subr.bf16.mxu0 0
        %2733 = vmatpush1.bf16.msra.mxu0 %v2636
        %2734 = vmatprep.subr.bf16.mxu0 0
        %2735 = vmatpush1.bf16.msra.mxu0 %v2637
        %2736 = vmatprep.subr.bf16.mxu0 0
        %2737 = vmatpush1.bf16.msra.mxu0 %v2638
        %2738 = vmatprep.subr.bf16.mxu0 0
        %2739 = vmatpush1.bf16.msra.mxu0 %v2639
        %2740 = vmatprep.subr.bf16.mxu0 0
        %2741 = vmatpush1.bf16.msra.mxu0 %v2640
        %2742 = vmatprep.subr.bf16.mxu0 0
        %2743 = vmatpush1.bf16.msra.mxu0 %v2641
        %2744 = vmatprep.subr.bf16.mxu0 0
        %2745 = vmatpush1.bf16.msra.mxu0 %v2642
        %2746 = vmatprep.mubr.bf16.mxu0 %v2698
        %2747 = vmatmul.mubr.bf16.gmra.mrb[0].mxu0 %v2697
        %v2748 = vpop.f32.mrb[0].mxu0
        %v2749 = vadd.f32 %v2660, %v2748
        %v2750 = vpop.f32.mrb[0].mxu0
        %v2751 = vpop.f32.mrb[0].mxu0
        %v2752 = vadd.f32 %v2665, %v2751
        %v2753 = vpop.f32.mrb[0].mxu0
        %2754 = vmatprep.mubr.bf16.mxu0 %v2701
        %2755 = vmatmul.mubr.bf16.gmra.mrb[0].mxu0 %v2700
        %v2756 = vpop.f32.mrb[0].mxu0
        %v2757 = vadd.f32 %v2670, %v2756
        %v2758 = vpop.f32.mrb[0].mxu0
        %v2759 = vpop.f32.mrb[0].mxu0
        %v2760 = vadd.f32 %v2675, %v2759
        %v2761 = vpop.f32.mrb[0].mxu0
        %2762 = vdwg.mxu0
        %2763 = vmatprep.subr.bf16.mxu0 0
        %2764 = vmatpush1.bf16.msra.mxu0 %v2643
        %2765 = vmatprep.subr.bf16.mxu0 0
        %2766 = vmatpush1.bf16.msra.mxu0 %v2644
        %2767 = vmatprep.subr.bf16.mxu0 0
        %2768 = vmatpush1.bf16.msra.mxu0 0
        %2769 = vmatprep.subr.bf16.mxu0 0
        %2770 = vmatpush1.bf16.msra.mxu0 0
        %2771 = vmatprep.subr.bf16.mxu0 0
        %2772 = vmatpush1.bf16.msra.mxu0 0
        %2773 = vmatprep.subr.bf16.mxu0 0
        %2774 = vmatpush1.bf16.msra.mxu0 0
        %2775 = vmatprep.subr.bf16.mxu0 0
        %2776 = vmatpush1.bf16.msra.mxu0 0
        %2777 = vmatprep.subr.bf16.mxu0 0
        %2778 = vmatpush1.bf16.msra.mxu0 0
        %2779 = vmatprep.subr.bf16.mxu0 0
        %2780 = vmatpush1.bf16.msra.mxu0 0
        %2781 = vmatprep.subr.bf16.mxu0 0
        %2782 = vmatpush1.bf16.msra.mxu0 0
        %2783 = vmatprep.subr.bf16.mxu0 0
        %2784 = vmatpush1.bf16.msra.mxu0 0
        %2785 = vmatprep.subr.bf16.mxu0 0
        %2786 = vmatpush1.bf16.msra.mxu0 0
        %2787 = vmatprep.subr.bf16.mxu0 0
        %2788 = vmatpush1.bf16.msra.mxu0 0
        %2789 = vmatprep.subr.bf16.mxu0 0
        %2790 = vmatpush1.bf16.msra.mxu0 0
        %2791 = vmatprep.subr.bf16.mxu0 0
        %2792 = vmatpush1.bf16.msra.mxu0 0
        %2793 = vmatprep.subr.bf16.mxu0 0
        %2794 = vmatpush1.bf16.msra.mxu0 0
        %2795 = vmatprep.mubr.bf16.mxu0 0
        %2796 = vmatmul.mubr.bf16.gmra.mrb[0].mxu0 %v2709
        %v2797 = vpop.f32.mrb[0].mxu0
        %v2798 = vadd.f32 %v2749, %v2797
        %v2799 = vpop.f32.mrb[0].mxu0
        %v2800 = vpop.f32.mrb[0].mxu0
        %v2801 = vadd.f32 %v2752, %v2800
        %v2802 = vpop.f32.mrb[0].mxu0
        %2803 = vmatprep.mubr.bf16.mxu0 0
        %2804 = vmatmul.mubr.bf16.gmra.mrb[0].mxu0 %v2712
        %v2805 = vpop.f32.mrb[0].mxu0
        %v2806 = vadd.f32 %v2757, %v2805
        %v2807 = vpop.f32.mrb[0].mxu0
        %v2808 = vpop.f32.mrb[0].mxu0
        %v2809 = vadd.f32 %v2760, %v2808
        %v2810 = vpop.f32.mrb[0].mxu0
        %2811 = vdwg.mxu0
        %v2812 = vmax.f32 %v2798, 0.0
        %v2813 = vmax.f32 %v2801, 0.0
        %v2814 = vmax.f32 %v2806, 0.0
        %v2815 = vmax.f32 %v2809, 0.0
        %2816 = vst.msk [vmem:[#allocation2] sm:$0xff] %vm2460, %v2812
        %2817 = vst.msk [vmem:[#allocation2 + $0x18] sm:$0xff] %vm2460, %v2813
        %2818 = vst.msk [vmem:[#allocation2 + $0x30] sm:$0xff] %vm2460, %v2814
        %2819 = vst.msk [vmem:[#allocation2 + $0x48] sm:$0xff] %vm2460, %v2815
        %v2820 = vld [vmem:[#allocation2] sm:$0xff]
        %v2821 = vld [vmem:[#allocation2 + $0x18] sm:$0xff]
        %v2822 = vld [vmem:[#allocation2 + $0x30] sm:$0xff]
        %v2823 = vld [vmem:[#allocation2 + $0x48] sm:$0xff]
        %2828 = vrot.lane.b32.xlu0 %v2820, 127
        %v2829 = vpop.permute.xlu0 %2828
        %2830 = vrot.lane.b32.xlu0 %v2821, 127
        %v2831 = vpop.permute.xlu0 %2830
        %2832 = vrot.lane.b32.xlu0 %v2822, 127
        %v2833 = vpop.permute.xlu0 %2832
        %2834 = vrot.lane.b32.xlu0 %v2823, 127
        %v2835 = vpop.permute.xlu0 %2834
        %v2840 = vmax.f32 %v2820, %v2829
        %v2841 = vmax.f32 %v2821, %v2831
        %v2842 = vmax.f32 %v2822, %v2833
        %v2843 = vmax.f32 %v2823, %v2835
        %2844 = vrot.lane.b32.xlu0 %v2820, 118
        %v2845 = vpop.permute.xlu0 %2844
        %2846 = vrot.lane.b32.xlu0 %v2821, 118
        %v2847 = vpop.permute.xlu0 %2846
        %2848 = vrot.lane.b32.xlu0 %v2822, 118
        %v2849 = vpop.permute.xlu0 %2848
        %2850 = vrot.lane.b32.xlu0 %v2823, 118
        %v2851 = vpop.permute.xlu0 %2850
        %v2856 = vmax.f32 %v2840, %v2845
        %v2857 = vmax.f32 %v2841, %v2847
        %v2858 = vmax.f32 %v2842, %v2849
        %v2859 = vmax.f32 %v2843, %v2851
        %2860 = vrot.lane.b32.xlu0 %v2820, 117
        %v2861 = vpop.permute.xlu0 %2860
        %2862 = vrot.lane.b32.xlu0 %v2821, 117
        %v2863 = vpop.permute.xlu0 %2862
        %2864 = vrot.lane.b32.xlu0 %v2822, 117
        %v2865 = vpop.permute.xlu0 %2864
        %2866 = vrot.lane.b32.xlu0 %v2823, 117
        %v2867 = vpop.permute.xlu0 %2866
        %v2872 = vmax.f32 %v2856, %v2861
        %v2873 = vmax.f32 %v2857, %v2863
        %v2874 = vmax.f32 %v2858, %v2865
        %v2875 = vmax.f32 %v2859, %v2867
        %v2876 = vpack.c.bf16 %v2873, %v2872
        %v2877 = vpack.c.bf16 %v2875, %v2874
        %v2878 = vld [vmem:[%s17] sm:$0xf]
        %v2879 = vld [vmem:[%s17 + $0x4] sm:$0xf]
        %v2880 = vld [vmem:[%s17 + $0x8] sm:$0xf]
        %v2881 = vld [vmem:[%s17 + $0xc] sm:$0xf]
        %v2882 = vld [vmem:[%s17 + $0x10] sm:$0xf]
        %v2883 = vld [vmem:[%s17 + $0x14] sm:$0xf]
        %v2884 = vld [vmem:[%s17 + $0x18] sm:$0xf]
        %v2885 = vld [vmem:[%s17 + $0x1c] sm:$0xf]
        %v2886 = vld [vmem:[%s17 + $0x20] sm:$0x3]
        %v2896 = vunpack.c.l.b16 %v2878
        %v2897 = vunpack.c.l.b16 %v2879
        %v2898 = vunpack.c.l.b16 %v2880
        %v2899 = vunpack.c.l.b16 %v2881
        %v2900 = vunpack.c.l.b16 %v2882
        %v2901 = vunpack.c.l.b16 %v2883
        %v2902 = vunpack.c.l.b16 %v2884
        %v2903 = vunpack.c.l.b16 %v2885
        %v2904 = vunpack.c.l.b16 %v2886
        %v2905 = vpack.c.b16 %v2897, %v2896
        %v2906 = vpack.c.b16 %v2899, %v2898
        %v2907 = vpack.c.b16 %v2901, %v2900
        %v2908 = vpack.c.b16 %v2903, %v2902
        %v2909 = vpack.c.b16 %v2904, %v2904
        %vm2914 = vcmask 547840
        %v2916 = vsel %vm2914, %v2876, 0
        %v2919 = vsel %vm2914, %v2877, 0
        %vm2921 = vcmask 1040384
        %vm2922 = vcmask 1041408
        %v2923 = vsel %vm2921, 4294967295, 65535
        %v2924 = vsel %vm2922, %v2923, 0
        %v2926 = vand.u32 %v2909, %v2924
        %2928 = vmatprep.subr.bf16.mxu0 0
        %2929 = vmatpush1.bf16.msra.mxu0 %v2905
        %2930 = vmatprep.subr.bf16.mxu0 0
        %2931 = vmatpush1.bf16.msra.mxu0 %v2906
        %2932 = vmatprep.subr.bf16.mxu0 0
        %2933 = vmatpush1.bf16.msra.mxu0 %v2907
        %2934 = vmatprep.subr.bf16.mxu0 0
        %2935 = vmatpush1.bf16.msra.mxu0 %v2908
        %2936 = vmatprep.subr.bf16.mxu0 0
        %2937 = vmatpush1.bf16.msra.mxu0 %v2926
        %2938 = vmatprep.subr.bf16.mxu0 0
        %2939 = vmatpush1.bf16.msra.mxu0 0
        %2940 = vmatprep.subr.bf16.mxu0 0
        %2941 = vmatpush1.bf16.msra.mxu0 0
        %2942 = vmatprep.subr.bf16.mxu0 0
        %2943 = vmatpush1.bf16.msra.mxu0 0
        %2944 = vmatprep.subr.bf16.mxu0 0
        %2945 = vmatpush1.bf16.msra.mxu0 0
        %2946 = vmatprep.subr.bf16.mxu0 0
        %2947 = vmatpush1.bf16.msra.mxu0 0
        %2948 = vmatprep.subr.bf16.mxu0 0
        %2949 = vmatpush1.bf16.msra.mxu0 0
        %2950 = vmatprep.subr.bf16.mxu0 0
        %2951 = vmatpush1.bf16.msra.mxu0 0
        %2952 = vmatprep.subr.bf16.mxu0 0
        %2953 = vmatpush1.bf16.msra.mxu0 0
        %2954 = vmatprep.subr.bf16.mxu0 0
        %2955 = vmatpush1.bf16.msra.mxu0 0
        %2956 = vmatprep.subr.bf16.mxu0 0
        %2957 = vmatpush1.bf16.msra.mxu0 0
        %2958 = vmatprep.subr.bf16.mxu0 0
        %2959 = vmatpush1.bf16.msra.mxu0 0
        %2960 = vmatprep.mubr.bf16.mxu0 0
        %2961 = vmatmul.mubr.bf16.gmra.mrb[0].mxu0 %v2916
        %v2962 = vpop.f32.mrb[0].mxu0
        %v2963 = vadd.f32 0.0, %v2962
        %v2964 = vpop.f32.mrb[0].mxu0
        %v2965 = vpop.f32.mrb[0].mxu0
        %v2966 = vadd.f32 0.0, %v2965
        %v2967 = vpop.f32.mrb[0].mxu0
        %2968 = vmatprep.mubr.bf16.mxu0 0
        %2969 = vmatmul.mubr.bf16.gmra.mrb[0].mxu0 %v2919
        %v2970 = vpop.f32.mrb[0].mxu0
        %v2971 = vadd.f32 0.0, %v2970
        %v2972 = vpop.f32.mrb[0].mxu0
        %v2973 = vpop.f32.mrb[0].mxu0
        %v2974 = vadd.f32 0.0, %v2973
        %v2975 = vpop.f32.mrb[0].mxu0
        %2976 = vdwg.mxu0
        %vm2977 = vcmask 293888
        %2978 = vst.msk [vmem:[#allocation2] sm:$0xff] %vm2977, %v2963
        %2979 = vst.msk [vmem:[#allocation2 + $0x18] sm:$0xff] %vm2977, %v2966
        %2980 = vst.msk [vmem:[#allocation2 + $0x30] sm:$0xff] %vm2977, %v2971
        %2981 = vst.msk [vmem:[#allocation2 + $0x48] sm:$0xff] %vm2977, %v2974
        %v2982 = vld [vmem:[#allocation2] sm:$0xff]
        %v2983 = vld [vmem:[#allocation2 + $0x18] sm:$0xff]
        %v2984 = vld [vmem:[#allocation2 + $0x30] sm:$0xff]
        %v2985 = vld [vmem:[#allocation2 + $0x48] sm:$0xff]
        %2990 = vrot.lane.b32.xlu0 %v2982, 127
        %v2991 = vpop.permute.xlu0 %2990
        %2992 = vrot.lane.b32.xlu0 %v2983, 127
        %v2993 = vpop.permute.xlu0 %2992
        %2994 = vrot.lane.b32.xlu0 %v2984, 127
        %v2995 = vpop.permute.xlu0 %2994
        %2996 = vrot.lane.b32.xlu0 %v2985, 127
        %v2997 = vpop.permute.xlu0 %2996
        %3002 = vrot.lane.b32.xlu0 %v2982, 126
        %v3003 = vpop.permute.xlu0 %3002
        %3004 = vrot.lane.b32.xlu0 %v2983, 126
        %v3005 = vpop.permute.xlu0 %3004
        %3006 = vrot.lane.b32.xlu0 %v2984, 126
        %v3007 = vpop.permute.xlu0 %3006
        %3008 = vrot.lane.b32.xlu0 %v2985, 126
        %v3009 = vpop.permute.xlu0 %3008
        %3014 = vrot.lane.b32.xlu0 %v2982, 122
        %v3015 = vpop.permute.xlu0 %3014
        %3016 = vrot.lane.b32.xlu0 %v2983, 122
        %v3017 = vpop.permute.xlu0 %3016
        %3018 = vrot.lane.b32.xlu0 %v2984, 122
        %v3019 = vpop.permute.xlu0 %3018
        %3020 = vrot.lane.b32.xlu0 %v2985, 122
        %v3021 = vpop.permute.xlu0 %3020
        %3026 = vrot.lane.b32.xlu0 %v2982, 121
        %v3027 = vpop.permute.xlu0 %3026
        %3028 = vrot.lane.b32.xlu0 %v2983, 121
        %v3029 = vpop.permute.xlu0 %3028
        %3030 = vrot.lane.b32.xlu0 %v2984, 121
        %v3031 = vpop.permute.xlu0 %3030
        %3032 = vrot.lane.b32.xlu0 %v2985, 121
        %v3033 = vpop.permute.xlu0 %3032
        %3038 = vrot.lane.b32.xlu0 %v2982, 120
        %v3039 = vpop.permute.xlu0 %3038
        %3040 = vrot.lane.b32.xlu0 %v2983, 120
        %v3041 = vpop.permute.xlu0 %3040
        %3042 = vrot.lane.b32.xlu0 %v2984, 120
        %v3043 = vpop.permute.xlu0 %3042
        %3044 = vrot.lane.b32.xlu0 %v2985, 120
        %v3045 = vpop.permute.xlu0 %3044
        %3050 = vrot.lane.b32.xlu0 %v2982, 116
        %v3051 = vpop.permute.xlu0 %3050
        %3052 = vrot.lane.b32.xlu0 %v2983, 116
        %v3053 = vpop.permute.xlu0 %3052
        %3054 = vrot.lane.b32.xlu0 %v2984, 116
        %v3055 = vpop.permute.xlu0 %3054
        %3056 = vrot.lane.b32.xlu0 %v2985, 116
        %v3057 = vpop.permute.xlu0 %3056
        %3062 = vrot.lane.b32.xlu0 %v2982, 115
        %v3063 = vpop.permute.xlu0 %3062
        %3064 = vrot.lane.b32.xlu0 %v2983, 115
        %v3065 = vpop.permute.xlu0 %3064
        %3066 = vrot.lane.b32.xlu0 %v2984, 115
        %v3067 = vpop.permute.xlu0 %3066
        %3068 = vrot.lane.b32.xlu0 %v2985, 115
        %v3069 = vpop.permute.xlu0 %3068
        %3074 = vrot.lane.b32.xlu0 %v2982, 114
        %v3075 = vpop.permute.xlu0 %3074
        %3076 = vrot.lane.b32.xlu0 %v2983, 114
        %v3077 = vpop.permute.xlu0 %3076
        %3078 = vrot.lane.b32.xlu0 %v2984, 114
        %v3079 = vpop.permute.xlu0 %3078
        %3080 = vrot.lane.b32.xlu0 %v2985, 114
        %v3081 = vpop.permute.xlu0 %3080
        %v3086 = vpack.c.bf16 %v2983, %v2982
        %v3087 = vpack.c.bf16 %v2985, %v2984
        %v3088 = vpack.c.bf16 %v2993, %v2991
        %v3089 = vpack.c.bf16 %v2997, %v2995
        %v3090 = vpack.c.bf16 %v3005, %v3003
        %v3091 = vpack.c.bf16 %v3009, %v3007
        %v3092 = vpack.c.bf16 %v3017, %v3015
        %v3093 = vpack.c.bf16 %v3021, %v3019
        %v3094 = vpack.c.bf16 %v3029, %v3027
        %v3095 = vpack.c.bf16 %v3033, %v3031
        %v3096 = vpack.c.bf16 %v3041, %v3039
        %v3097 = vpack.c.bf16 %v3045, %v3043
        %v3098 = vpack.c.bf16 %v3053, %v3051
        %v3099 = vpack.c.bf16 %v3057, %v3055
        %v3100 = vpack.c.bf16 %v3065, %v3063
        %v3101 = vpack.c.bf16 %v3069, %v3067
        %v3102 = vpack.c.bf16 %v3077, %v3075
        %v3103 = vpack.c.bf16 %v3081, %v3079
        %v3104 = vld [vmem:[#allocation12] sm:$0xff]
        %v3105 = vld [vmem:[#allocation12 + $0x8] sm:$0xf]
        %v3106 = vld [vmem:[#allocation12 + $0xc] sm:$0xff]
        %v3107 = vld [vmem:[#allocation12 + $0x14] sm:$0xf]
        %v3108 = vld [vmem:[#allocation12 + $0x18] sm:$0xff]
        %v3109 = vld [vmem:[#allocation12 + $0x20] sm:$0xf]
        %v3110 = vld [vmem:[#allocation12 + $0x24] sm:$0xff]
        %v3111 = vld [vmem:[#allocation12 + $0x2c] sm:$0xf]
        %v3112 = vld [vmem:[#allocation12 + $0x30] sm:$0xff]
        %v3113 = vld [vmem:[#allocation12 + $0x38] sm:$0xf]
        %v3114 = vld [vmem:[#allocation12 + $0x3c] sm:$0xff]
        %v3115 = vld [vmem:[#allocation12 + $0x44] sm:$0xf]
        %v3116 = vld [vmem:[#allocation12 + $0x48] sm:$0xff]
        %v3117 = vld [vmem:[#allocation12 + $0x50] sm:$0xf]
        %v3118 = vld [vmem:[#allocation12 + $0x54] sm:$0xff]
        %v3119 = vld [vmem:[#allocation12 + $0x5c] sm:$0xf]
        %v3120 = vld [vmem:[%s10] sm:$0xff]
        %v3121 = vld [vmem:[%s10 + $0x8] sm:$0xff]
        %v3122 = vld [vmem:[%s10 + $0x10] sm:$0xff]
        %v3123 = vld [vmem:[%s10 + $0x18] sm:$0xff]
        %v3124 = vld [vmem:[%s10 + $0x20] sm:$0xff]
        %v3125 = vld [vmem:[%s10 + $0x28] sm:$0xff]
        %v3126 = vld [vmem:[%s10 + $0x30] sm:$0xff]
        %v3127 = vld [vmem:[%s10 + $0x38] sm:$0xff]
        %3129 = vset.pattern.permute.xlu0 0
        %3130 = vperm.xlu0 %3129, %v3120
        %v3131 = vpop.permute.xlu0 %3130
        %3134 = vset.pattern.permute.xlu0 0
        %3135 = vperm.xlu0 %3134, %v3121
        %v3136 = vpop.permute.xlu0 %3135
        %3139 = vset.pattern.permute.xlu0 0
        %3140 = vperm.xlu0 %3139, %v3122
        %v3141 = vpop.permute.xlu0 %3140
        %3144 = vset.pattern.permute.xlu0 0
        %3145 = vperm.xlu0 %3144, %v3123
        %v3146 = vpop.permute.xlu0 %3145
        %3149 = vset.pattern.permute.xlu0 0
        %3150 = vperm.xlu0 %3149, %v3124
        %v3151 = vpop.permute.xlu0 %3150
        %3154 = vset.pattern.permute.xlu0 0
        %3155 = vperm.xlu0 %3154, %v3125
        %v3156 = vpop.permute.xlu0 %3155
        %3159 = vset.pattern.permute.xlu0 0
        %3160 = vperm.xlu0 %3159, %v3126
        %v3161 = vpop.permute.xlu0 %3160
        %3164 = vset.pattern.permute.xlu0 0
        %3165 = vperm.xlu0 %3164, %v3127
        %v3166 = vpop.permute.xlu0 %3165
        %v3184 = vunpack.c.l.b16 %v3104
        %v3185 = vunpack.c.h.b16 %v3104
        %v3186 = vunpack.c.l.b16 %v3105
        %v3187 = vunpack.c.l.b16 %v3106
        %v3188 = vunpack.c.h.b16 %v3106
        %v3189 = vunpack.c.l.b16 %v3107
        %v3190 = vunpack.c.l.b16 %v3108
        %v3191 = vunpack.c.h.b16 %v3108
        %v3192 = vunpack.c.l.b16 %v3109
        %v3193 = vunpack.c.l.b16 %v3110
        %v3194 = vunpack.c.h.b16 %v3110
        %v3195 = vunpack.c.l.b16 %v3111
        %v3196 = vunpack.c.l.b16 %v3112
        %v3197 = vunpack.c.h.b16 %v3112
        %v3198 = vunpack.c.l.b16 %v3113
        %v3199 = vunpack.c.l.b16 %v3114
        %v3200 = vunpack.c.h.b16 %v3114
        %v3201 = vunpack.c.l.b16 %v3115
        %v3202 = vunpack.c.l.b16 %v3116
        %v3203 = vunpack.c.h.b16 %v3116
        %v3204 = vunpack.c.l.b16 %v3117
        %v3205 = vunpack.c.l.b16 %v3118
        %v3206 = vunpack.c.h.b16 %v3118
        %v3207 = vunpack.c.l.b16 %v3119
        %v3208 = vpack.c.b16 %v3187, %v3184
        %v3209 = vpack.c.b16 %v3188, %v3185
        %v3210 = vpack.c.b16 %v3189, %v3186
        %v3211 = vpack.c.b16 %v3193, %v3190
        %v3212 = vpack.c.b16 %v3194, %v3191
        %v3213 = vpack.c.b16 %v3195, %v3192
        %v3214 = vpack.c.b16 %v3199, %v3196
        %v3215 = vpack.c.b16 %v3200, %v3197
        %v3216 = vpack.c.b16 %v3201, %v3198
        %v3217 = vpack.c.b16 %v3205, %v3202
        %v3218 = vpack.c.b16 %v3206, %v3203
        %v3219 = vpack.c.b16 %v3207, %v3204
        %v3229 = vsel %vm2707, %v3210, 0
        %v3232 = vsel %vm2707, %v3213, 0
        %v3235 = vsel %vm2707, %v3216, 0
        %v3238 = vsel %vm2707, %v3219, 0
        %3240 = vmatprep.subr.bf16.mxu0 0
        %3241 = vmatpush1.bf16.msra.mxu0 %v3086
        %3242 = vmatprep.subr.bf16.mxu0 0
        %3243 = vmatpush1.bf16.msra.mxu0 %v3087
        %3244 = vmatprep.subr.bf16.mxu0 0
        %3245 = vmatpush1.bf16.msra.mxu0 %v3088
        %3246 = vmatprep.subr.bf16.mxu0 0
        %3247 = vmatpush1.bf16.msra.mxu0 %v3089
        %3248 = vmatprep.subr.bf16.mxu0 0
        %3249 = vmatpush1.bf16.msra.mxu0 %v3090
        %3250 = vmatprep.subr.bf16.mxu0 0
        %3251 = vmatpush1.bf16.msra.mxu0 %v3091
        %3252 = vmatprep.subr.bf16.mxu0 0
        %3253 = vmatpush1.bf16.msra.mxu0 %v3092
        %3254 = vmatprep.subr.bf16.mxu0 0
        %3255 = vmatpush1.bf16.msra.mxu0 %v3093
        %3256 = vmatprep.subr.bf16.mxu0 0
        %3257 = vmatpush1.bf16.msra.mxu0 %v3094
        %3258 = vmatprep.subr.bf16.mxu0 0
        %3259 = vmatpush1.bf16.msra.mxu0 %v3095
        %3260 = vmatprep.subr.bf16.mxu0 0
        %3261 = vmatpush1.bf16.msra.mxu0 %v3096
        %3262 = vmatprep.subr.bf16.mxu0 0
        %3263 = vmatpush1.bf16.msra.mxu0 %v3097
        %3264 = vmatprep.subr.bf16.mxu0 0
        %3265 = vmatpush1.bf16.msra.mxu0 %v3098
        %3266 = vmatprep.subr.bf16.mxu0 0
        %3267 = vmatpush1.bf16.msra.mxu0 %v3099
        %3268 = vmatprep.subr.bf16.mxu0 0
        %3269 = vmatpush1.bf16.msra.mxu0 %v3100
        %3270 = vmatprep.subr.bf16.mxu0 0
        %3271 = vmatpush1.bf16.msra.mxu0 %v3101
        %3272 = vmatprep.mubr.bf16.mxu0 %v3209
        %3273 = vmatmul.mubr.bf16.gmra.mrb[0].mxu0 %v3208
        %v3274 = vpop.f32.mrb[0].mxu0
        %v3275 = vadd.f32 %v3131, %v3274
        %v3276 = vpop.f32.mrb[0].mxu0
        %v3277 = vpop.f32.mrb[0].mxu0
        %v3278 = vadd.f32 %v3136, %v3277
        %v3279 = vpop.f32.mrb[0].mxu0
        %3280 = vmatprep.mubr.bf16.mxu0 %v3212
        %3281 = vmatmul.mubr.bf16.gmra.mrb[0].mxu0 %v3211
        %v3282 = vpop.f32.mrb[0].mxu0
        %v3283 = vadd.f32 %v3141, %v3282
        %v3284 = vpop.f32.mrb[0].mxu0
        %v3285 = vpop.f32.mrb[0].mxu0
        %v3286 = vadd.f32 %v3146, %v3285
        %v3287 = vpop.f32.mrb[0].mxu0
        %3288 = vmatprep.mubr.bf16.mxu0 %v3215
        %3289 = vmatmul.mubr.bf16.gmra.mrb[0].mxu0 %v3214
        %v3290 = vpop.f32.mrb[0].mxu0
        %v3291 = vadd.f32 %v3151, %v3290
        %v3292 = vpop.f32.mrb[0].mxu0
        %v3293 = vpop.f32.mrb[0].mxu0
        %v3294 = vadd.f32 %v3156, %v3293
        %v3295 = vpop.f32.mrb[0].mxu0
        %3296 = vmatprep.mubr.bf16.mxu0 %v3218
        %3297 = vmatmul.mubr.bf16.gmra.mrb[0].mxu0 %v3217
        %v3298 = vpop.f32.mrb[0].mxu0
        %v3299 = vadd.f32 %v3161, %v3298
        %v3300 = vpop.f32.mrb[0].mxu0
        %v3301 = vpop.f32.mrb[0].mxu0
        %v3302 = vadd.f32 %v3166, %v3301
        %v3303 = vpop.f32.mrb[0].mxu0
        %3304 = vdwg.mxu0
        %3305 = vmatprep.subr.bf16.mxu0 0
        %3306 = vmatpush1.bf16.msra.mxu0 %v3102
        %3307 = vmatprep.subr.bf16.mxu0 0
        %3308 = vmatpush1.bf16.msra.mxu0 %v3103
        %3309 = vmatprep.subr.bf16.mxu0 0
        %3310 = vmatpush1.bf16.msra.mxu0 0
        %3311 = vmatprep.subr.bf16.mxu0 0
        %3312 = vmatpush1.bf16.msra.mxu0 0
        %3313 = vmatprep.subr.bf16.mxu0 0
        %3314 = vmatpush1.bf16.msra.mxu0 0
        %3315 = vmatprep.subr.bf16.mxu0 0
        %3316 = vmatpush1.bf16.msra.mxu0 0
        %3317 = vmatprep.subr.bf16.mxu0 0
        %3318 = vmatpush1.bf16.msra.mxu0 0
        %3319 = vmatprep.subr.bf16.mxu0 0
        %3320 = vmatpush1.bf16.msra.mxu0 0
        %3321 = vmatprep.subr.bf16.mxu0 0
        %3322 = vmatpush1.bf16.msra.mxu0 0
        %3323 = vmatprep.subr.bf16.mxu0 0
        %3324 = vmatpush1.bf16.msra.mxu0 0
        %3325 = vmatprep.subr.bf16.mxu0 0
        %3326 = vmatpush1.bf16.msra.mxu0 0
        %3327 = vmatprep.subr.bf16.mxu0 0
        %3328 = vmatpush1.bf16.msra.mxu0 0
        %3329 = vmatprep.subr.bf16.mxu0 0
        %3330 = vmatpush1.bf16.msra.mxu0 0
        %3331 = vmatprep.subr.bf16.mxu0 0
        %3332 = vmatpush1.bf16.msra.mxu0 0
        %3333 = vmatprep.subr.bf16.mxu0 0
        %3334 = vmatpush1.bf16.msra.mxu0 0
        %3335 = vmatprep.subr.bf16.mxu0 0
        %3336 = vmatpush1.bf16.msra.mxu0 0
        %3337 = vmatprep.mubr.bf16.mxu0 0
        %3338 = vmatmul.mubr.bf16.gmra.mrb[0].mxu0 %v3229
        %v3339 = vpop.f32.mrb[0].mxu0
        %v3340 = vadd.f32 %v3275, %v3339
        %v3341 = vpop.f32.mrb[0].mxu0
        %v3342 = vpop.f32.mrb[0].mxu0
        %v3343 = vadd.f32 %v3278, %v3342
        %v3344 = vpop.f32.mrb[0].mxu0
        %3345 = vmatprep.mubr.bf16.mxu0 0
        %3346 = vmatmul.mubr.bf16.gmra.mrb[0].mxu0 %v3232
        %v3347 = vpop.f32.mrb[0].mxu0
        %v3348 = vadd.f32 %v3283, %v3347
        %v3349 = vpop.f32.mrb[0].mxu0
        %v3350 = vpop.f32.mrb[0].mxu0
        %v3351 = vadd.f32 %v3286, %v3350
        %v3352 = vpop.f32.mrb[0].mxu0
        %3353 = vmatprep.mubr.bf16.mxu0 0
        %3354 = vmatmul.mubr.bf16.gmra.mrb[0].mxu0 %v3235
        %v3355 = vpop.f32.mrb[0].mxu0
        %v3356 = vadd.f32 %v3291, %v3355
        %v3357 = vpop.f32.mrb[0].mxu0
        %v3358 = vpop.f32.mrb[0].mxu0
        %v3359 = vadd.f32 %v3294, %v3358
        %v3360 = vpop.f32.mrb[0].mxu0
        %3361 = vmatprep.mubr.bf16.mxu0 0
        %3362 = vmatmul.mubr.bf16.gmra.mrb[0].mxu0 %v3238
        %v3363 = vpop.f32.mrb[0].mxu0
        %v3364 = vadd.f32 %v3299, %v3363
        %v3365 = vpop.f32.mrb[0].mxu0
        %v3366 = vpop.f32.mrb[0].mxu0
        %v3367 = vadd.f32 %v3302, %v3366
        %v3368 = vpop.f32.mrb[0].mxu0
        %3369 = vdwg.mxu0
        %v3370 = vmax.f32 %v3340, 0.0
        %v3371 = vmax.f32 %v3343, 0.0
        %v3372 = vmax.f32 %v3348, 0.0
        %v3373 = vmax.f32 %v3351, 0.0
        %v3374 = vmax.f32 %v3356, 0.0
        %v3375 = vmax.f32 %v3359, 0.0
        %v3376 = vmax.f32 %v3364, 0.0
        %v3377 = vmax.f32 %v3367, 0.0
        %v3378 = vpack.c.bf16 %v3371, %v3370
        %v3379 = vpack.c.bf16 %v3373, %v3372
        %v3380 = vpack.c.bf16 %v3375, %v3374
        %v3381 = vpack.c.bf16 %v3377, %v3376
        %v3382 = vld [vmem:[#allocation15] sm:$0xf]
        %v3383 = vld [vmem:[#allocation15 + $0x4] sm:$0xf]
        %v3384 = vld [vmem:[#allocation15 + $0x8] sm:$0x7]
        %v3388 = vunpack.c.l.b16 %v3382
        %v3389 = vunpack.c.l.b16 %v3383
        %v3390 = vunpack.c.l.b16 %v3384
        %v3391 = vpack.c.b16 %v3389, %v3388
        %v3392 = vpack.c.b16 %v3390, %v3390
        %vm3394 = vcmask 179200
        %v3396 = vsel %vm3394, %v3378, 0
        %v3399 = vsel %vm3394, %v3379, 0
        %v3402 = vsel %vm3394, %v3380, 0
        %v3405 = vsel %vm3394, %v3381, 0
        %vm3407 = vcmask 1042432
        %v3409 = vsel %vm3407, %v3392, 0
        %3411 = vmatprep.subr.bf16.mxu0 0
        %3412 = vmatpush1.bf16.msra.mxu0 %v3391
        %3413 = vmatprep.subr.bf16.mxu0 0
        %3414 = vmatpush1.bf16.msra.mxu0 %v3409
        %3415 = vmatprep.subr.bf16.mxu0 0
        %3416 = vmatpush1.bf16.msra.mxu0 0
        %3417 = vmatprep.subr.bf16.mxu0 0
        %3418 = vmatpush1.bf16.msra.mxu0 0
        %3419 = vmatprep.subr.bf16.mxu0 0
        %3420 = vmatpush1.bf16.msra.mxu0 0
        %3421 = vmatprep.subr.bf16.mxu0 0
        %3422 = vmatpush1.bf16.msra.mxu0 0
        %3423 = vmatprep.subr.bf16.mxu0 0
        %3424 = vmatpush1.bf16.msra.mxu0 0
        %3425 = vmatprep.subr.bf16.mxu0 0
        %3426 = vmatpush1.bf16.msra.mxu0 0
        %3427 = vmatprep.subr.bf16.mxu0 0
        %3428 = vmatpush1.bf16.msra.mxu0 0
        %3429 = vmatprep.subr.bf16.mxu0 0
        %3430 = vmatpush1.bf16.msra.mxu0 0
        %3431 = vmatprep.subr.bf16.mxu0 0
        %3432 = vmatpush1.bf16.msra.mxu0 0
        %3433 = vmatprep.subr.bf16.mxu0 0
        %3434 = vmatpush1.bf16.msra.mxu0 0
        %3435 = vmatprep.subr.bf16.mxu0 0
        %3436 = vmatpush1.bf16.msra.mxu0 0
        %3437 = vmatprep.subr.bf16.mxu0 0
        %3438 = vmatpush1.bf16.msra.mxu0 0
        %3439 = vmatprep.subr.bf16.mxu0 0
        %3440 = vmatpush1.bf16.msra.mxu0 0
        %3441 = vmatprep.subr.bf16.mxu0 0
        %3442 = vmatpush1.bf16.msra.mxu0 0
        %3443 = vmatprep.mubr.bf16.mxu0 0
        %3444 = vmatmul.mubr.bf16.gmra.mrb[0].mxu0 %v3396
        %v3445 = vpop.f32.mrb[0].mxu0
        %v3446 = vadd.f32 0.0, %v3445
        %v3447 = vpop.f32.mrb[0].mxu0
        %v3448 = vpop.f32.mrb[0].mxu0
        %v3449 = vadd.f32 0.0, %v3448
        %v3450 = vpop.f32.mrb[0].mxu0
        %3451 = vmatprep.mubr.bf16.mxu0 0
        %3452 = vmatmul.mubr.bf16.gmra.mrb[0].mxu0 %v3399
        %v3453 = vpop.f32.mrb[0].mxu0
        %v3454 = vadd.f32 0.0, %v3453
        %v3455 = vpop.f32.mrb[0].mxu0
        %v3456 = vpop.f32.mrb[0].mxu0
        %v3457 = vadd.f32 0.0, %v3456
        %v3458 = vpop.f32.mrb[0].mxu0
        %3459 = vmatprep.mubr.bf16.mxu0 0
        %3460 = vmatmul.mubr.bf16.gmra.mrb[0].mxu0 %v3402
        %v3461 = vpop.f32.mrb[0].mxu0
        %v3462 = vadd.f32 0.0, %v3461
        %v3463 = vpop.f32.mrb[0].mxu0
        %v3464 = vpop.f32.mrb[0].mxu0
        %v3465 = vadd.f32 0.0, %v3464
        %v3466 = vpop.f32.mrb[0].mxu0
        %3467 = vmatprep.mubr.bf16.mxu0 0
        %3468 = vmatmul.mubr.bf16.gmra.mrb[0].mxu0 %v3405
        %v3469 = vpop.f32.mrb[0].mxu0
        %v3470 = vadd.f32 0.0, %v3469
        %v3471 = vpop.f32.mrb[0].mxu0
        %v3472 = vpop.f32.mrb[0].mxu0
        %v3473 = vadd.f32 0.0, %v3472
        %v3474 = vpop.f32.mrb[0].mxu0
        %3475 = vdwg.mxu0
        %3476 = vst.msk [vmem:[#allocation2] sm:$0xff] %vm2977, %v3446
        %3477 = vst.msk [vmem:[#allocation2 + $0x18] sm:$0xff] %vm2977, %v3449
        %3478 = vst.msk [vmem:[#allocation2 + $0x30] sm:$0xff] %vm2977, %v3454
        %3479 = vst.msk [vmem:[#allocation2 + $0x48] sm:$0xff] %vm2977, %v3457
        %3480 = vst.msk [vmem:[#allocation2 + $0x60] sm:$0xff] %vm2977, %v3462
        %3481 = vst.msk [vmem:[#allocation2 + $0x78] sm:$0xff] %vm2977, %v3465
        %3482 = vst.msk [vmem:[#allocation2 + $0x90] sm:$0xff] %vm2977, %v3470
        %3483 = vst.msk [vmem:[#allocation2 + $0xa8] sm:$0xff] %vm2977, %v3473
        %v3484 = vld [vmem:[#allocation2] sm:$0xff]
        %v3485 = vld [vmem:[#allocation2 + $0x18] sm:$0xff]
        %v3486 = vld [vmem:[#allocation2 + $0x30] sm:$0xff]
        %v3487 = vld [vmem:[#allocation2 + $0x48] sm:$0xff]
        %v3488 = vld [vmem:[#allocation2 + $0x60] sm:$0xff]
        %v3489 = vld [vmem:[#allocation2 + $0x78] sm:$0xff]
        %v3490 = vld [vmem:[#allocation2 + $0x90] sm:$0xff]
        %v3491 = vld [vmem:[#allocation2 + $0xa8] sm:$0xff]
        %3500 = vrot.lane.b32.xlu0 %v3484, 127
        %v3501 = vpop.permute.xlu0 %3500
        %3502 = vrot.lane.b32.xlu0 %v3485, 127
        %v3503 = vpop.permute.xlu0 %3502
        %3504 = vrot.lane.b32.xlu0 %v3486, 127
        %v3505 = vpop.permute.xlu0 %3504
        %3506 = vrot.lane.b32.xlu0 %v3487, 127
        %v3507 = vpop.permute.xlu0 %3506
        %3508 = vrot.lane.b32.xlu0 %v3488, 127
        %v3509 = vpop.permute.xlu0 %3508
        %3510 = vrot.lane.b32.xlu0 %v3489, 127
        %v3511 = vpop.permute.xlu0 %3510
        %3512 = vrot.lane.b32.xlu0 %v3490, 127
        %v3513 = vpop.permute.xlu0 %3512
        %3514 = vrot.lane.b32.xlu0 %v3491, 127
        %v3515 = vpop.permute.xlu0 %3514
        %3524 = vrot.lane.b32.xlu0 %v3484, 126
        %v3525 = vpop.permute.xlu0 %3524
        %3526 = vrot.lane.b32.xlu0 %v3485, 126
        %v3527 = vpop.permute.xlu0 %3526
        %3528 = vrot.lane.b32.xlu0 %v3486, 126
        %v3529 = vpop.permute.xlu0 %3528
        %3530 = vrot.lane.b32.xlu0 %v3487, 126
        %v3531 = vpop.permute.xlu0 %3530
        %3532 = vrot.lane.b32.xlu0 %v3488, 126
        %v3533 = vpop.permute.xlu0 %3532
        %3534 = vrot.lane.b32.xlu0 %v3489, 126
        %v3535 = vpop.permute.xlu0 %3534
        %3536 = vrot.lane.b32.xlu0 %v3490, 126
        %v3537 = vpop.permute.xlu0 %3536
        %3538 = vrot.lane.b32.xlu0 %v3491, 126
        %v3539 = vpop.permute.xlu0 %3538
        %3548 = vrot.lane.b32.xlu0 %v3484, 122
        %v3549 = vpop.permute.xlu0 %3548
        %3550 = vrot.lane.b32.xlu0 %v3485, 122
        %v3551 = vpop.permute.xlu0 %3550
        %3552 = vrot.lane.b32.xlu0 %v3486, 122
        %v3553 = vpop.permute.xlu0 %3552
        %3554 = vrot.lane.b32.xlu0 %v3487, 122
        %v3555 = vpop.permute.xlu0 %3554
        %3556 = vrot.lane.b32.xlu0 %v3488, 122
        %v3557 = vpop.permute.xlu0 %3556
        %3558 = vrot.lane.b32.xlu0 %v3489, 122
        %v3559 = vpop.permute.xlu0 %3558
        %3560 = vrot.lane.b32.xlu0 %v3490, 122
        %v3561 = vpop.permute.xlu0 %3560
        %3562 = vrot.lane.b32.xlu0 %v3491, 122
        %v3563 = vpop.permute.xlu0 %3562
        %3572 = vrot.lane.b32.xlu0 %v3484, 121
        %v3573 = vpop.permute.xlu0 %3572
        %3574 = vrot.lane.b32.xlu0 %v3485, 121
        %v3575 = vpop.permute.xlu0 %3574
        %3576 = vrot.lane.b32.xlu0 %v3486, 121
        %v3577 = vpop.permute.xlu0 %3576
        %3578 = vrot.lane.b32.xlu0 %v3487, 121
        %v3579 = vpop.permute.xlu0 %3578
        %3580 = vrot.lane.b32.xlu0 %v3488, 121
        %v3581 = vpop.permute.xlu0 %3580
        %3582 = vrot.lane.b32.xlu0 %v3489, 121
        %v3583 = vpop.permute.xlu0 %3582
        %3584 = vrot.lane.b32.xlu0 %v3490, 121
        %v3585 = vpop.permute.xlu0 %3584
        %3586 = vrot.lane.b32.xlu0 %v3491, 121
        %v3587 = vpop.permute.xlu0 %3586
        %3596 = vrot.lane.b32.xlu0 %v3484, 120
        %v3597 = vpop.permute.xlu0 %3596
        %3598 = vrot.lane.b32.xlu0 %v3485, 120
        %v3599 = vpop.permute.xlu0 %3598
        %3600 = vrot.lane.b32.xlu0 %v3486, 120
        %v3601 = vpop.permute.xlu0 %3600
        %3602 = vrot.lane.b32.xlu0 %v3487, 120
        %v3603 = vpop.permute.xlu0 %3602
        %3604 = vrot.lane.b32.xlu0 %v3488, 120
        %v3605 = vpop.permute.xlu0 %3604
        %3606 = vrot.lane.b32.xlu0 %v3489, 120
        %v3607 = vpop.permute.xlu0 %3606
        %3608 = vrot.lane.b32.xlu0 %v3490, 120
        %v3609 = vpop.permute.xlu0 %3608
        %3610 = vrot.lane.b32.xlu0 %v3491, 120
        %v3611 = vpop.permute.xlu0 %3610
        %3620 = vrot.lane.b32.xlu0 %v3484, 116
        %v3621 = vpop.permute.xlu0 %3620
        %3622 = vrot.lane.b32.xlu0 %v3485, 116
        %v3623 = vpop.permute.xlu0 %3622
        %3624 = vrot.lane.b32.xlu0 %v3486, 116
        %v3625 = vpop.permute.xlu0 %3624
        %3626 = vrot.lane.b32.xlu0 %v3487, 116
        %v3627 = vpop.permute.xlu0 %3626
        %3628 = vrot.lane.b32.xlu0 %v3488, 116
        %v3629 = vpop.permute.xlu0 %3628
        %3630 = vrot.lane.b32.xlu0 %v3489, 116
        %v3631 = vpop.permute.xlu0 %3630
        %3632 = vrot.lane.b32.xlu0 %v3490, 116
        %v3633 = vpop.permute.xlu0 %3632
        %3634 = vrot.lane.b32.xlu0 %v3491, 116
        %v3635 = vpop.permute.xlu0 %3634
        %3644 = vrot.lane.b32.xlu0 %v3484, 115
        %v3645 = vpop.permute.xlu0 %3644
        %3646 = vrot.lane.b32.xlu0 %v3485, 115
        %v3647 = vpop.permute.xlu0 %3646
        %3648 = vrot.lane.b32.xlu0 %v3486, 115
        %v3649 = vpop.permute.xlu0 %3648
        %3650 = vrot.lane.b32.xlu0 %v3487, 115
        %v3651 = vpop.permute.xlu0 %3650
        %3652 = vrot.lane.b32.xlu0 %v3488, 115
        %v3653 = vpop.permute.xlu0 %3652
        %3654 = vrot.lane.b32.xlu0 %v3489, 115
        %v3655 = vpop.permute.xlu0 %3654
        %3656 = vrot.lane.b32.xlu0 %v3490, 115
        %v3657 = vpop.permute.xlu0 %3656
        %3658 = vrot.lane.b32.xlu0 %v3491, 115
        %v3659 = vpop.permute.xlu0 %3658
        %3668 = vrot.lane.b32.xlu0 %v3484, 114
        %v3669 = vpop.permute.xlu0 %3668
        %3670 = vrot.lane.b32.xlu0 %v3485, 114
        %v3671 = vpop.permute.xlu0 %3670
        %3672 = vrot.lane.b32.xlu0 %v3486, 114
        %v3673 = vpop.permute.xlu0 %3672
        %3674 = vrot.lane.b32.xlu0 %v3487, 114
        %v3675 = vpop.permute.xlu0 %3674
        %3676 = vrot.lane.b32.xlu0 %v3488, 114
        %v3677 = vpop.permute.xlu0 %3676
        %3678 = vrot.lane.b32.xlu0 %v3489, 114
        %v3679 = vpop.permute.xlu0 %3678
        %3680 = vrot.lane.b32.xlu0 %v3490, 114
        %v3681 = vpop.permute.xlu0 %3680
        %3682 = vrot.lane.b32.xlu0 %v3491, 114
        %v3683 = vpop.permute.xlu0 %3682
        %v3692 = vpack.c.bf16 %v3485, %v3484
        %v3693 = vpack.c.bf16 %v3487, %v3486
        %v3694 = vpack.c.bf16 %v3489, %v3488
        %v3695 = vpack.c.bf16 %v3491, %v3490
        %v3696 = vpack.c.bf16 %v3503, %v3501
        %v3697 = vpack.c.bf16 %v3507, %v3505
        %v3698 = vpack.c.bf16 %v3511, %v3509
        %v3699 = vpack.c.bf16 %v3515, %v3513
        %v3700 = vpack.c.bf16 %v3527, %v3525
        %v3701 = vpack.c.bf16 %v3531, %v3529
        %v3702 = vpack.c.bf16 %v3535, %v3533
        %v3703 = vpack.c.bf16 %v3539, %v3537
        %v3704 = vpack.c.bf16 %v3551, %v3549
        %v3705 = vpack.c.bf16 %v3555, %v3553
        %v3706 = vpack.c.bf16 %v3559, %v3557
        %v3707 = vpack.c.bf16 %v3563, %v3561
        %v3708 = vpack.c.bf16 %v3575, %v3573
        %v3709 = vpack.c.bf16 %v3579, %v3577
        %v3710 = vpack.c.bf16 %v3583, %v3581
        %v3711 = vpack.c.bf16 %v3587, %v3585
        %v3712 = vpack.c.bf16 %v3599, %v3597
        %v3713 = vpack.c.bf16 %v3603, %v3601
        %v3714 = vpack.c.bf16 %v3607, %v3605
        %v3715 = vpack.c.bf16 %v3611, %v3609
        %v3716 = vpack.c.bf16 %v3623, %v3621
        %v3717 = vpack.c.bf16 %v3627, %v3625
        %v3718 = vpack.c.bf16 %v3631, %v3629
        %v3719 = vpack.c.bf16 %v3635, %v3633
        %v3720 = vpack.c.bf16 %v3647, %v3645
        %v3721 = vpack.c.bf16 %v3651, %v3649
        %v3722 = vpack.c.bf16 %v3655, %v3653
        %v3723 = vpack.c.bf16 %v3659, %v3657
        %v3724 = vpack.c.bf16 %v3671, %v3669
        %v3725 = vpack.c.bf16 %v3675, %v3673
        %v3726 = vpack.c.bf16 %v3679, %v3677
        %v3727 = vpack.c.bf16 %v3683, %v3681
        %v3728 = vld [vmem:[%s11] sm:$0xff]
        %v3729 = vld [vmem:[%s11 + $0x8] sm:$0xff]
        %v3730 = vld [vmem:[%s11 + $0x10] sm:$0xf]
        %v3731 = vld [vmem:[%s11 + $0x14] sm:$0xff]
        %v3732 = vld [vmem:[%s11 + $0x1c] sm:$0xff]
        %v3733 = vld [vmem:[%s11 + $0x24] sm:$0xf]
        %v3734 = vld [vmem:[%s11 + $0x28] sm:$0xff]
        %v3735 = vld [vmem:[%s11 + $0x30] sm:$0xff]
        %v3736 = vld [vmem:[%s11 + $0x38] sm:$0xf]
        %v3737 = vld [vmem:[%s11 + $0x3c] sm:$0xff]
        %v3738 = vld [vmem:[%s11 + $0x44] sm:$0xff]
        %v3739 = vld [vmem:[%s11 + $0x4c] sm:$0xf]
        %v3740 = vld [vmem:[%s11 + $0x50] sm:$0xff]
        %v3741 = vld [vmem:[%s11 + $0x58] sm:$0xff]
        %v3742 = vld [vmem:[%s11 + $0x60] sm:$0xf]
        %v3743 = vld [vmem:[%s11 + $0x64] sm:$0xff]
        %v3744 = vld [vmem:[%s11 + $0x6c] sm:$0xff]
        %v3745 = vld [vmem:[%s11 + $0x74] sm:$0xf]
        %v3746 = vld [vmem:[%s11 + $0x78] sm:$0xff]
        %v3747 = vld [vmem:[%s11 + $0x80] sm:$0xff]
        %v3748 = vld [vmem:[%s11 + $0x88] sm:$0xf]
        %v3749 = vld [vmem:[%s11 + $0x8c] sm:$0xff]
        %v3750 = vld [vmem:[%s11 + $0x94] sm:$0xff]
        %v3751 = vld [vmem:[%s11 + $0x9c] sm:$0xf]
        %v3752 = vld [vmem:[%s12] sm:$0xff]
        %v3753 = vld [vmem:[%s12 + $0x8] sm:$0xff]
        %v3754 = vld [vmem:[%s12 + $0x10] sm:$0xff]
        %v3755 = vld [vmem:[%s12 + $0x18] sm:$0xff]
        %v3756 = vld [vmem:[%s12 + $0x20] sm:$0xff]
        %v3757 = vld [vmem:[%s12 + $0x28] sm:$0xff]
        %v3758 = vld [vmem:[%s12 + $0x30] sm:$0xff]
        %v3759 = vld [vmem:[%s12 + $0x38] sm:$0xff]
        %3761 = vset.pattern.permute.xlu0 0
        %3762 = vperm.xlu0 %3761, %v3752
        %v3763 = vpop.permute.xlu0 %3762
        %3766 = vset.pattern.permute.xlu0 0
        %3767 = vperm.xlu0 %3766, %v3753
        %v3768 = vpop.permute.xlu0 %3767
        %3771 = vset.pattern.permute.xlu0 0
        %3772 = vperm.xlu0 %3771, %v3754
        %v3773 = vpop.permute.xlu0 %3772
        %3776 = vset.pattern.permute.xlu0 0
        %3777 = vperm.xlu0 %3776, %v3755
        %v3778 = vpop.permute.xlu0 %3777
        %3781 = vset.pattern.permute.xlu0 0
        %3782 = vperm.xlu0 %3781, %v3756
        %v3783 = vpop.permute.xlu0 %3782
        %3786 = vset.pattern.permute.xlu0 0
        %3787 = vperm.xlu0 %3786, %v3757
        %v3788 = vpop.permute.xlu0 %3787
        %3791 = vset.pattern.permute.xlu0 0
        %3792 = vperm.xlu0 %3791, %v3758
        %v3793 = vpop.permute.xlu0 %3792
        %3796 = vset.pattern.permute.xlu0 0
        %3797 = vperm.xlu0 %3796, %v3759
        %v3798 = vpop.permute.xlu0 %3797
        %v3824 = vunpack.c.l.b16 %v3728
        %v3825 = vunpack.c.h.b16 %v3728
        %v3826 = vunpack.c.l.b16 %v3729
        %v3827 = vunpack.c.h.b16 %v3729
        %v3828 = vunpack.c.l.b16 %v3730
        %v3829 = vunpack.c.l.b16 %v3731
        %v3830 = vunpack.c.h.b16 %v3731
        %v3831 = vunpack.c.l.b16 %v3732
        %v3832 = vunpack.c.h.b16 %v3732
        %v3833 = vunpack.c.l.b16 %v3733
        %v3834 = vunpack.c.l.b16 %v3734
        %v3835 = vunpack.c.h.b16 %v3734
        %v3836 = vunpack.c.l.b16 %v3735
        %v3837 = vunpack.c.h.b16 %v3735
        %v3838 = vunpack.c.l.b16 %v3736
        %v3839 = vunpack.c.l.b16 %v3737
        %v3840 = vunpack.c.h.b16 %v3737
        %v3841 = vunpack.c.l.b16 %v3738
        %v3842 = vunpack.c.h.b16 %v3738
        %v3843 = vunpack.c.l.b16 %v3739
        %v3844 = vunpack.c.l.b16 %v3740
        %v3845 = vunpack.c.h.b16 %v3740
        %v3846 = vunpack.c.l.b16 %v3741
        %v3847 = vunpack.c.h.b16 %v3741
        %v3848 = vunpack.c.l.b16 %v3742
        %v3849 = vunpack.c.l.b16 %v3743
        %v3850 = vunpack.c.h.b16 %v3743
        %v3851 = vunpack.c.l.b16 %v3744
        %v3852 = vunpack.c.h.b16 %v3744
        %v3853 = vunpack.c.l.b16 %v3745
        %v3854 = vunpack.c.l.b16 %v3746
        %v3855 = vunpack.c.h.b16 %v3746
        %v3856 = vunpack.c.l.b16 %v3747
        %v3857 = vunpack.c.h.b16 %v3747
        %v3858 = vunpack.c.l.b16 %v3748
        %v3859 = vunpack.c.l.b16 %v3749
        %v3860 = vunpack.c.h.b16 %v3749
        %v3861 = vunpack.c.l.b16 %v3750
        %v3862 = vunpack.c.h.b16 %v3750
        %v3863 = vunpack.c.l.b16 %v3751
        %v3864 = vpack.c.b16 %v3829, %v3824
        %v3865 = vpack.c.b16 %v3830, %v3825
        %v3866 = vpack.c.b16 %v3831, %v3826
        %v3867 = vpack.c.b16 %v3832, %v3827
        %v3868 = vpack.c.b16 %v3833, %v3828
        %v3869 = vpack.c.b16 %v3839, %v3834
        %v3870 = vpack.c.b16 %v3840, %v3835
        %v3871 = vpack.c.b16 %v3841, %v3836
        %v3872 = vpack.c.b16 %v3842, %v3837
        %v3873 = vpack.c.b16 %v3843, %v3838
        %v3874 = vpack.c.b16 %v3849, %v3844
        %v3875 = vpack.c.b16 %v3850, %v3845
        %v3876 = vpack.c.b16 %v3851, %v3846
        %v3877 = vpack.c.b16 %v3852, %v3847
        %v3878 = vpack.c.b16 %v3853, %v3848
        %v3879 = vpack.c.b16 %v3859, %v3854
        %v3880 = vpack.c.b16 %v3860, %v3855
        %v3881 = vpack.c.b16 %v3861, %v3856
        %v3882 = vpack.c.b16 %v3862, %v3857
        %v3883 = vpack.c.b16 %v3863, %v3858
        %vm3900 = vcmask 523264
        %v3902 = vsel %vm3900, %v3868, 0
        %v3905 = vsel %vm3900, %v3873, 0
        %v3908 = vsel %vm3900, %v3878, 0
        %v3911 = vsel %vm3900, %v3883, 0
        %3913 = vmatprep.subr.bf16.mxu0 0
        %3914 = vmatpush1.bf16.msra.mxu0 %v3692
        %3915 = vmatprep.subr.bf16.mxu0 0
        %3916 = vmatpush1.bf16.msra.mxu0 %v3693
        %3917 = vmatprep.subr.bf16.mxu0 0
        %3918 = vmatpush1.bf16.msra.mxu0 %v3694
        %3919 = vmatprep.subr.bf16.mxu0 0
        %3920 = vmatpush1.bf16.msra.mxu0 %v3695
        %3921 = vmatprep.subr.bf16.mxu0 0
        %3922 = vmatpush1.bf16.msra.mxu0 %v3696
        %3923 = vmatprep.subr.bf16.mxu0 0
        %3924 = vmatpush1.bf16.msra.mxu0 %v3697
        %3925 = vmatprep.subr.bf16.mxu0 0
        %3926 = vmatpush1.bf16.msra.mxu0 %v3698
        %3927 = vmatprep.subr.bf16.mxu0 0
        %3928 = vmatpush1.bf16.msra.mxu0 %v3699
        %3929 = vmatprep.subr.bf16.mxu0 0
        %3930 = vmatpush1.bf16.msra.mxu0 %v3700
        %3931 = vmatprep.subr.bf16.mxu0 0
        %3932 = vmatpush1.bf16.msra.mxu0 %v3701
        %3933 = vmatprep.subr.bf16.mxu0 0
        %3934 = vmatpush1.bf16.msra.mxu0 %v3702
        %3935 = vmatprep.subr.bf16.mxu0 0
        %3936 = vmatpush1.bf16.msra.mxu0 %v3703
        %3937 = vmatprep.subr.bf16.mxu0 0
        %3938 = vmatpush1.bf16.msra.mxu0 %v3704
        %3939 = vmatprep.subr.bf16.mxu0 0
        %3940 = vmatpush1.bf16.msra.mxu0 %v3705
        %3941 = vmatprep.subr.bf16.mxu0 0
        %3942 = vmatpush1.bf16.msra.mxu0 %v3706
        %3943 = vmatprep.subr.bf16.mxu0 0
        %3944 = vmatpush1.bf16.msra.mxu0 %v3707
        %3945 = vmatprep.mubr.bf16.mxu0 %v3865
        %3946 = vmatmul.mubr.bf16.gmra.mrb[0].mxu0 %v3864
        %v3947 = vpop.f32.mrb[0].mxu0
        %v3948 = vadd.f32 %v3763, %v3947
        %v3949 = vpop.f32.mrb[0].mxu0
        %v3950 = vpop.f32.mrb[0].mxu0
        %v3951 = vadd.f32 %v3768, %v3950
        %v3952 = vpop.f32.mrb[0].mxu0
        %3953 = vmatprep.mubr.bf16.mxu0 %v3870
        %3954 = vmatmul.mubr.bf16.gmra.mrb[0].mxu0 %v3869
        %v3955 = vpop.f32.mrb[0].mxu0
        %v3956 = vadd.f32 %v3773, %v3955
        %v3957 = vpop.f32.mrb[0].mxu0
        %v3958 = vpop.f32.mrb[0].mxu0
        %v3959 = vadd.f32 %v3778, %v3958
        %v3960 = vpop.f32.mrb[0].mxu0
        %3961 = vmatprep.mubr.bf16.mxu0 %v3875
        %3962 = vmatmul.mubr.bf16.gmra.mrb[0].mxu0 %v3874
        %v3963 = vpop.f32.mrb[0].mxu0
        %v3964 = vadd.f32 %v3783, %v3963
        %v3965 = vpop.f32.mrb[0].mxu0
        %v3966 = vpop.f32.mrb[0].mxu0
        %v3967 = vadd.f32 %v3788, %v3966
        %v3968 = vpop.f32.mrb[0].mxu0
        %3969 = vmatprep.mubr.bf16.mxu0 %v3880
        %3970 = vmatmul.mubr.bf16.gmra.mrb[0].mxu0 %v3879
        %v3971 = vpop.f32.mrb[0].mxu0
        %v3972 = vadd.f32 %v3793, %v3971
        %v3973 = vpop.f32.mrb[0].mxu0
        %v3974 = vpop.f32.mrb[0].mxu0
        %v3975 = vadd.f32 %v3798, %v3974
        %v3976 = vpop.f32.mrb[0].mxu0
        %3977 = vdwg.mxu0
        %3978 = vmatprep.subr.bf16.mxu0 0
        %3979 = vmatpush1.bf16.msra.mxu0 %v3708
        %3980 = vmatprep.subr.bf16.mxu0 0
        %3981 = vmatpush1.bf16.msra.mxu0 %v3709
        %3982 = vmatprep.subr.bf16.mxu0 0
        %3983 = vmatpush1.bf16.msra.mxu0 %v3710
        %3984 = vmatprep.subr.bf16.mxu0 0
        %3985 = vmatpush1.bf16.msra.mxu0 %v3711
        %3986 = vmatprep.subr.bf16.mxu0 0
        %3987 = vmatpush1.bf16.msra.mxu0 %v3712
        %3988 = vmatprep.subr.bf16.mxu0 0
        %3989 = vmatpush1.bf16.msra.mxu0 %v3713
        %3990 = vmatprep.subr.bf16.mxu0 0
        %3991 = vmatpush1.bf16.msra.mxu0 %v3714
        %3992 = vmatprep.subr.bf16.mxu0 0
        %3993 = vmatpush1.bf16.msra.mxu0 %v3715
        %3994 = vmatprep.subr.bf16.mxu0 0
        %3995 = vmatpush1.bf16.msra.mxu0 %v3716
        %3996 = vmatprep.subr.bf16.mxu0 0
        %3997 = vmatpush1.bf16.msra.mxu0 %v3717
        %3998 = vmatprep.subr.bf16.mxu0 0
        %3999 = vmatpush1.bf16.msra.mxu0 %v3718
        %4000 = vmatprep.subr.bf16.mxu0 0
        %4001 = vmatpush1.bf16.msra.mxu0 %v3719
        %4002 = vmatprep.subr.bf16.mxu0 0
        %4003 = vmatpush1.bf16.msra.mxu0 %v3720
        %4004 = vmatprep.subr.bf16.mxu0 0
        %4005 = vmatpush1.bf16.msra.mxu0 %v3721
        %4006 = vmatprep.subr.bf16.mxu0 0
        %4007 = vmatpush1.bf16.msra.mxu0 %v3722
        %4008 = vmatprep.subr.bf16.mxu0 0
        %4009 = vmatpush1.bf16.msra.mxu0 %v3723
        %4010 = vmatprep.mubr.bf16.mxu0 %v3867
        %4011 = vmatmul.mubr.bf16.gmra.mrb[0].mxu0 %v3866
        %v4012 = vpop.f32.mrb[0].mxu0
        %v4013 = vadd.f32 %v3948, %v4012
        %v4014 = vpop.f32.mrb[0].mxu0
        %v4015 = vpop.f32.mrb[0].mxu0
        %v4016 = vadd.f32 %v3951, %v4015
        %v4017 = vpop.f32.mrb[0].mxu0
        %4018 = vmatprep.mubr.bf16.mxu0 %v3872
        %4019 = vmatmul.mubr.bf16.gmra.mrb[0].mxu0 %v3871
        %v4020 = vpop.f32.mrb[0].mxu0
        %v4021 = vadd.f32 %v3956, %v4020
        %v4022 = vpop.f32.mrb[0].mxu0
        %v4023 = vpop.f32.mrb[0].mxu0
        %v4024 = vadd.f32 %v3959, %v4023
        %v4025 = vpop.f32.mrb[0].mxu0
        %4026 = vmatprep.mubr.bf16.mxu0 %v3877
        %4027 = vmatmul.mubr.bf16.gmra.mrb[0].mxu0 %v3876
        %v4028 = vpop.f32.mrb[0].mxu0
        %v4029 = vadd.f32 %v3964, %v4028
        %v4030 = vpop.f32.mrb[0].mxu0
        %v4031 = vpop.f32.mrb[0].mxu0
        %v4032 = vadd.f32 %v3967, %v4031
        %v4033 = vpop.f32.mrb[0].mxu0
        %4034 = vmatprep.mubr.bf16.mxu0 %v3882
        %4035 = vmatmul.mubr.bf16.gmra.mrb[0].mxu0 %v3881
        %v4036 = vpop.f32.mrb[0].mxu0
        %v4037 = vadd.f32 %v3972, %v4036
        %v4038 = vpop.f32.mrb[0].mxu0
        %v4039 = vpop.f32.mrb[0].mxu0
        %v4040 = vadd.f32 %v3975, %v4039
        %v4041 = vpop.f32.mrb[0].mxu0
        %4042 = vdwg.mxu0
        %4043 = vmatprep.subr.bf16.mxu0 0
        %4044 = vmatpush1.bf16.msra.mxu0 %v3724
        %4045 = vmatprep.subr.bf16.mxu0 0
        %4046 = vmatpush1.bf16.msra.mxu0 %v3725
        %4047 = vmatprep.subr.bf16.mxu0 0
        %4048 = vmatpush1.bf16.msra.mxu0 %v3726
        %4049 = vmatprep.subr.bf16.mxu0 0
        %4050 = vmatpush1.bf16.msra.mxu0 %v3727
        %4051 = vmatprep.subr.bf16.mxu0 0
        %4052 = vmatpush1.bf16.msra.mxu0 0
        %4053 = vmatprep.subr.bf16.mxu0 0
        %4054 = vmatpush1.bf16.msra.mxu0 0
        %4055 = vmatprep.subr.bf16.mxu0 0
        %4056 = vmatpush1.bf16.msra.mxu0 0
        %4057 = vmatprep.subr.bf16.mxu0 0
        %4058 = vmatpush1.bf16.msra.mxu0 0
        %4059 = vmatprep.subr.bf16.mxu0 0
        %4060 = vmatpush1.bf16.msra.mxu0 0
        %4061 = vmatprep.subr.bf16.mxu0 0
        %4062 = vmatpush1.bf16.msra.mxu0 0
        %4063 = vmatprep.subr.bf16.mxu0 0
        %4064 = vmatpush1.bf16.msra.mxu0 0
        %4065 = vmatprep.subr.bf16.mxu0 0
        %4066 = vmatpush1.bf16.msra.mxu0 0
        %4067 = vmatprep.subr.bf16.mxu0 0
        %4068 = vmatpush1.bf16.msra.mxu0 0
        %4069 = vmatprep.subr.bf16.mxu0 0
        %4070 = vmatpush1.bf16.msra.mxu0 0
        %4071 = vmatprep.subr.bf16.mxu0 0
        %4072 = vmatpush1.bf16.msra.mxu0 0
        %4073 = vmatprep.subr.bf16.mxu0 0
        %4074 = vmatpush1.bf16.msra.mxu0 0
        %4075 = vmatprep.mubr.bf16.mxu0 0
        %4076 = vmatmul.mubr.bf16.gmra.mrb[0].mxu0 %v3902
        %v4077 = vpop.f32.mrb[0].mxu0
        %v4078 = vadd.f32 %v4013, %v4077
        %v4079 = vpop.f32.mrb[0].mxu0
        %v4080 = vpop.f32.mrb[0].mxu0
        %v4081 = vadd.f32 %v4016, %v4080
        %v4082 = vpop.f32.mrb[0].mxu0
        %4083 = vmatprep.mubr.bf16.mxu0 0
        %4084 = vmatmul.mubr.bf16.gmra.mrb[0].mxu0 %v3905
        %v4085 = vpop.f32.mrb[0].mxu0
        %v4086 = vadd.f32 %v4021, %v4085
        %v4087 = vpop.f32.mrb[0].mxu0
        %v4088 = vpop.f32.mrb[0].mxu0
        %v4089 = vadd.f32 %v4024, %v4088
        %v4090 = vpop.f32.mrb[0].mxu0
        %4091 = vmatprep.mubr.bf16.mxu0 0
        %4092 = vmatmul.mubr.bf16.gmra.mrb[0].mxu0 %v3908
        %v4093 = vpop.f32.mrb[0].mxu0
        %v4094 = vadd.f32 %v4029, %v4093
        %v4095 = vpop.f32.mrb[0].mxu0
        %v4096 = vpop.f32.mrb[0].mxu0
        %v4097 = vadd.f32 %v4032, %v4096
        %v4098 = vpop.f32.mrb[0].mxu0
        %4099 = vmatprep.mubr.bf16.mxu0 0
        %4100 = vmatmul.mubr.bf16.gmra.mrb[0].mxu0 %v3911
        %v4101 = vpop.f32.mrb[0].mxu0
        %v4102 = vadd.f32 %v4037, %v4101
        %v4103 = vpop.f32.mrb[0].mxu0
        %v4104 = vpop.f32.mrb[0].mxu0
        %v4105 = vadd.f32 %v4040, %v4104
        %v4106 = vpop.f32.mrb[0].mxu0
        %4107 = vdwg.mxu0
        %v4108 = vmax.f32 %v4078, 0.0
        %v4109 = vmax.f32 %v4081, 0.0
        %v4110 = vmax.f32 %v4086, 0.0
        %v4111 = vmax.f32 %v4089, 0.0
        %v4112 = vmax.f32 %v4094, 0.0
        %v4113 = vmax.f32 %v4097, 0.0
        %v4114 = vmax.f32 %v4102, 0.0
        %v4115 = vmax.f32 %v4105, 0.0
        %4116 = vst.msk [vmem:[#allocation2] sm:$0xff] %vm3394, %v4108
        %4117 = vst.msk [vmem:[#allocation2 + $0x18] sm:$0xff] %vm3394, %v4109
        %4118 = vst.msk [vmem:[#allocation2 + $0x30] sm:$0xff] %vm3394, %v4110
        %4119 = vst.msk [vmem:[#allocation2 + $0x48] sm:$0xff] %vm3394, %v4111
        %4120 = vst.msk [vmem:[#allocation2 + $0x60] sm:$0xff] %vm3394, %v4112
        %4121 = vst.msk [vmem:[#allocation2 + $0x78] sm:$0xff] %vm3394, %v4113
        %4122 = vst.msk [vmem:[#allocation2 + $0x90] sm:$0xff] %vm3394, %v4114
        %4123 = vst.msk [vmem:[#allocation2 + $0xa8] sm:$0xff] %vm3394, %v4115
        %v4124 = vld [vmem:[#allocation2] sm:$0xff]
        %v4125 = vld [vmem:[#allocation2 + $0x18] sm:$0xff]
        %v4126 = vld [vmem:[#allocation2 + $0x30] sm:$0xff]
        %v4127 = vld [vmem:[#allocation2 + $0x48] sm:$0xff]
        %v4128 = vld [vmem:[#allocation2 + $0x60] sm:$0xff]
        %v4129 = vld [vmem:[#allocation2 + $0x78] sm:$0xff]
        %v4130 = vld [vmem:[#allocation2 + $0x90] sm:$0xff]
        %v4131 = vld [vmem:[#allocation2 + $0xa8] sm:$0xff]
        %4140 = vrot.lane.b32.xlu0 %v4124, 127
        %v4141 = vpop.permute.xlu0 %4140
        %4142 = vrot.lane.b32.xlu0 %v4125, 127
        %v4143 = vpop.permute.xlu0 %4142
        %4144 = vrot.lane.b32.xlu0 %v4126, 127
        %v4145 = vpop.permute.xlu0 %4144
        %4146 = vrot.lane.b32.xlu0 %v4127, 127
        %v4147 = vpop.permute.xlu0 %4146
        %4148 = vrot.lane.b32.xlu0 %v4128, 127
        %v4149 = vpop.permute.xlu0 %4148
        %4150 = vrot.lane.b32.xlu0 %v4129, 127
        %v4151 = vpop.permute.xlu0 %4150
        %4152 = vrot.lane.b32.xlu0 %v4130, 127
        %v4153 = vpop.permute.xlu0 %4152
        %4154 = vrot.lane.b32.xlu0 %v4131, 127
        %v4155 = vpop.permute.xlu0 %4154
        %v4164 = vmax.f32 %v4124, %v4141
        %v4165 = vmax.f32 %v4125, %v4143
        %v4166 = vmax.f32 %v4126, %v4145
        %v4167 = vmax.f32 %v4127, %v4147
        %v4168 = vmax.f32 %v4128, %v4149
        %v4169 = vmax.f32 %v4129, %v4151
        %v4170 = vmax.f32 %v4130, %v4153
        %v4171 = vmax.f32 %v4131, %v4155
        %4172 = vrot.lane.b32.xlu0 %v4124, 122
        %v4173 = vpop.permute.xlu0 %4172
        %4174 = vrot.lane.b32.xlu0 %v4125, 122
        %v4175 = vpop.permute.xlu0 %4174
        %4176 = vrot.lane.b32.xlu0 %v4126, 122
        %v4177 = vpop.permute.xlu0 %4176
        %4178 = vrot.lane.b32.xlu0 %v4127, 122
        %v4179 = vpop.permute.xlu0 %4178
        %4180 = vrot.lane.b32.xlu0 %v4128, 122
        %v4181 = vpop.permute.xlu0 %4180
        %4182 = vrot.lane.b32.xlu0 %v4129, 122
        %v4183 = vpop.permute.xlu0 %4182
        %4184 = vrot.lane.b32.xlu0 %v4130, 122
        %v4185 = vpop.permute.xlu0 %4184
        %4186 = vrot.lane.b32.xlu0 %v4131, 122
        %v4187 = vpop.permute.xlu0 %4186
        %v4196 = vmax.f32 %v4164, %v4173
        %v4197 = vmax.f32 %v4165, %v4175
        %v4198 = vmax.f32 %v4166, %v4177
        %v4199 = vmax.f32 %v4167, %v4179
        %v4200 = vmax.f32 %v4168, %v4181
        %v4201 = vmax.f32 %v4169, %v4183
        %v4202 = vmax.f32 %v4170, %v4185
        %v4203 = vmax.f32 %v4171, %v4187
        %4204 = vrot.lane.b32.xlu0 %v4124, 121
        %v4205 = vpop.permute.xlu0 %4204
        %4206 = vrot.lane.b32.xlu0 %v4125, 121
        %v4207 = vpop.permute.xlu0 %4206
        %4208 = vrot.lane.b32.xlu0 %v4126, 121
        %v4209 = vpop.permute.xlu0 %4208
        %4210 = vrot.lane.b32.xlu0 %v4127, 121
        %v4211 = vpop.permute.xlu0 %4210
        %4212 = vrot.lane.b32.xlu0 %v4128, 121
        %v4213 = vpop.permute.xlu0 %4212
        %4214 = vrot.lane.b32.xlu0 %v4129, 121
        %v4215 = vpop.permute.xlu0 %4214
        %4216 = vrot.lane.b32.xlu0 %v4130, 121
        %v4217 = vpop.permute.xlu0 %4216
        %4218 = vrot.lane.b32.xlu0 %v4131, 121
        %v4219 = vpop.permute.xlu0 %4218
        %v4228 = vmax.f32 %v4196, %v4205
        %v4229 = vmax.f32 %v4197, %v4207
        %v4230 = vmax.f32 %v4198, %v4209
        %v4231 = vmax.f32 %v4199, %v4211
        %v4232 = vmax.f32 %v4200, %v4213
        %v4233 = vmax.f32 %v4201, %v4215
        %v4234 = vmax.f32 %v4202, %v4217
        %v4235 = vmax.f32 %v4203, %v4219
        %v4236 = vpack.c.bf16 %v4229, %v4228
        %v4237 = vpack.c.bf16 %v4231, %v4230
        %v4238 = vpack.c.bf16 %v4233, %v4232
        %v4239 = vpack.c.bf16 %v4235, %v4234
        %v4240 = vld [vmem:[#allocation17] sm:$0xf]
        %v4241 = vld [vmem:[#allocation17 + $0x4] sm:$0xf]
        %v4244 = vunpack.c.l.b16 %v4240
        %v4245 = vunpack.c.l.b16 %v4241
        %v4246 = vpack.c.b16 %v4245, %v4244
        %vm4247 = vcmask 121856
        %v4249 = vsel %vm4247, %v4236, 0
        %v4252 = vsel %vm4247, %v4237, 0
        %v4255 = vsel %vm4247, %v4238, 0
        %v4258 = vsel %vm4247, %v4239, 0
        %vm4260 = vcmask 1047552
        %v4261 = vsel %vm1401, 4294967295, 65535
        %v4262 = vsel %vm4260, %v4261, 0
        %v4264 = vand.u32 %v4246, %v4262
        %4266 = vmatprep.subr.bf16.mxu0 0
        %4267 = vmatpush1.bf16.msra.mxu0 %v4264
        %4268 = vmatprep.subr.bf16.mxu0 0
        %4269 = vmatpush1.bf16.msra.mxu0 0
        %4270 = vmatprep.subr.bf16.mxu0 0
        %4271 = vmatpush1.bf16.msra.mxu0 0
        %4272 = vmatprep.subr.bf16.mxu0 0
        %4273 = vmatpush1.bf16.msra.mxu0 0
        %4274 = vmatprep.subr.bf16.mxu0 0
        %4275 = vmatpush1.bf16.msra.mxu0 0
        %4276 = vmatprep.subr.bf16.mxu0 0
        %4277 = vmatpush1.bf16.msra.mxu0 0
        %4278 = vmatprep.subr.bf16.mxu0 0
        %4279 = vmatpush1.bf16.msra.mxu0 0
        %4280 = vmatprep.subr.bf16.mxu0 0
        %4281 = vmatpush1.bf16.msra.mxu0 0
        %4282 = vmatprep.subr.bf16.mxu0 0
        %4283 = vmatpush1.bf16.msra.mxu0 0
        %4284 = vmatprep.subr.bf16.mxu0 0
        %4285 = vmatpush1.bf16.msra.mxu0 0
        %4286 = vmatprep.subr.bf16.mxu0 0
        %4287 = vmatpush1.bf16.msra.mxu0 0
        %4288 = vmatprep.subr.bf16.mxu0 0
        %4289 = vmatpush1.bf16.msra.mxu0 0
        %4290 = vmatprep.subr.bf16.mxu0 0
        %4291 = vmatpush1.bf16.msra.mxu0 0
        %4292 = vmatprep.subr.bf16.mxu0 0
        %4293 = vmatpush1.bf16.msra.mxu0 0
        %4294 = vmatprep.subr.bf16.mxu0 0
        %4295 = vmatpush1.bf16.msra.mxu0 0
        %4296 = vmatprep.subr.bf16.mxu0 0
        %4297 = vmatpush1.bf16.msra.mxu0 0
        %4298 = vmatprep.mubr.bf16.mxu0 0
        %4299 = vmatmul.mubr.bf16.gmra.mrb[0].mxu0 %v4249
        %v4300 = vpop.f32.mrb[0].mxu0
        %v4301 = vadd.f32 0.0, %v4300
        %v4302 = vpop.f32.mrb[0].mxu0
        %v4303 = vpop.f32.mrb[0].mxu0
        %v4304 = vadd.f32 0.0, %v4303
        %v4305 = vpop.f32.mrb[0].mxu0
        %4306 = vmatprep.mubr.bf16.mxu0 0
        %4307 = vmatmul.mubr.bf16.gmra.mrb[0].mxu0 %v4252
        %v4308 = vpop.f32.mrb[0].mxu0
        %v4309 = vadd.f32 0.0, %v4308
        %v4310 = vpop.f32.mrb[0].mxu0
        %v4311 = vpop.f32.mrb[0].mxu0
        %v4312 = vadd.f32 0.0, %v4311
        %v4313 = vpop.f32.mrb[0].mxu0
        %4314 = vmatprep.mubr.bf16.mxu0 0
        %4315 = vmatmul.mubr.bf16.gmra.mrb[0].mxu0 %v4255
        %v4316 = vpop.f32.mrb[0].mxu0
        %v4317 = vadd.f32 0.0, %v4316
        %v4318 = vpop.f32.mrb[0].mxu0
        %v4319 = vpop.f32.mrb[0].mxu0
        %v4320 = vadd.f32 0.0, %v4319
        %v4321 = vpop.f32.mrb[0].mxu0
        %4322 = vmatprep.mubr.bf16.mxu0 0
        %4323 = vmatmul.mubr.bf16.gmra.mrb[0].mxu0 %v4258
        %v4324 = vpop.f32.mrb[0].mxu0
        %v4325 = vadd.f32 0.0, %v4324
        %v4326 = vpop.f32.mrb[0].mxu0
        %v4327 = vpop.f32.mrb[0].mxu0
        %v4328 = vadd.f32 0.0, %v4327
        %v4329 = vpop.f32.mrb[0].mxu0
        %4330 = vdwg.mxu0
        %v4331 = vld [vmem:[%s19] sm:$0xf]
        %v4332 = vpack.c.bf16 %v4304, %v4301
        %v4333 = vpack.c.bf16 %v4312, %v4309
        %v4334 = vpack.c.bf16 %v4320, %v4317
        %v4335 = vpack.c.bf16 %v4328, %v4325
        %v4336 = vld [vmem:[%s20] sm:$0xff]
        %4338 = vset.pattern.permute.xlu0 0
        %4339 = vperm.xlu0 %4338, %v4336
        %v4340 = vpop.permute.xlu0 %4339
        %v4343 = vsel %vm3900, %v4331, 0
        %4345 = vmatprep.subr.bf16.mxu0 0
        %4346 = vmatpush1.bf16.msra.mxu0 %v4332
        %4347 = vmatprep.subr.bf16.mxu0 0
        %4348 = vmatpush1.bf16.msra.mxu0 %v4333
        %4349 = vmatprep.subr.bf16.mxu0 0
        %4350 = vmatpush1.bf16.msra.mxu0 %v4334
        %4351 = vmatprep.subr.bf16.mxu0 0
        %4352 = vmatpush1.bf16.msra.mxu0 %v4335
        %4353 = vmatprep.subr.bf16.mxu0 0
        %4354 = vmatpush1.bf16.msra.mxu0 0
        %4355 = vmatprep.subr.bf16.mxu0 0
        %4356 = vmatpush1.bf16.msra.mxu0 0
        %4357 = vmatprep.subr.bf16.mxu0 0
        %4358 = vmatpush1.bf16.msra.mxu0 0
        %4359 = vmatprep.subr.bf16.mxu0 0
        %4360 = vmatpush1.bf16.msra.mxu0 0
        %4361 = vmatprep.subr.bf16.mxu0 0
        %4362 = vmatpush1.bf16.msra.mxu0 0
        %4363 = vmatprep.subr.bf16.mxu0 0
        %4364 = vmatpush1.bf16.msra.mxu0 0
        %4365 = vmatprep.subr.bf16.mxu0 0
        %4366 = vmatpush1.bf16.msra.mxu0 0
        %4367 = vmatprep.subr.bf16.mxu0 0
        %4368 = vmatpush1.bf16.msra.mxu0 0
        %4369 = vmatprep.subr.bf16.mxu0 0
        %4370 = vmatpush1.bf16.msra.mxu0 0
        %4371 = vmatprep.subr.bf16.mxu0 0
        %4372 = vmatpush1.bf16.msra.mxu0 0
        %4373 = vmatprep.subr.bf16.mxu0 0
        %4374 = vmatpush1.bf16.msra.mxu0 0
        %4375 = vmatprep.subr.bf16.mxu0 0
        %4376 = vmatpush1.bf16.msra.mxu0 0
        %4377 = vmatprep.mubr.bf16.mxu0 0
        %4378 = vmatmul.mubr.bf16.gmra.mrb[0].mxu0 %v4343
        %v4379 = vpop.f32.mrb[0].mxu0
        %v4380 = vadd.f32 %v4340, %v4379
        %v4381 = vpop.f32.mrb[0].mxu0
        %v4382 = vpop.f32.mrb[0].mxu0
        %v4383 = vpop.f32.mrb[0].mxu0
        %4384 = vdwg.mxu0
        %4385 = vst [vmem:[%s788] sm:$0xff] %v4380
        %s4386 = sand.u32 %s496, 1
        %s4387 = scalar_lea.sflag [#allocation5], %s4386
        %s4388 = sand.u32 %s496, 1
        %s4389 = smul.addr %s4388, 8
        %s4390 = scalar_lea.vmem [#allocation18], %s4389
        // Predicated region
        $region141: #{tpu_custom_call.1} parent=103 // pred_check
          %p4391 = pneg %p506
        $region142: #{tpu_custom_call.1} parent=103 // pred_check_branch
          %4393 = sbr.rel (%p4391) target = $region144
        $region143: #{tpu_custom_call.1} parent=103 // pred_region
          %s4395 = ssub.s32 128, 128
          %4396 = vsyncadd %s4387, %s4395
          %s4397 = smul.addr %s42, 128
          %s4398 = scalar_lea.hbm %s21, %s4397
          %s4400 = sshll.u32 %s4390, 4
          %s4401 = int_to_ptr.vmem [resolvable:$true] %s4400
          %4403 = dma.vmem_to_hbm [thread:$0]  %s4401, 128, %s4398, %s4387
        $region144: #{tpu_custom_call.1} parent=103 // pred_fallthru
          _
      $region104: #{tpu_custom_call.1} parent=5 // pred_fallthru
        _
      %p4404 = scmp.le.s32.totalorder 2, %s37
      // Predicated region
      $region145: #{tpu_custom_call.1} parent=5 // pred_check
        %p4405 = pneg %p4404
      $region146: #{tpu_custom_call.1} parent=5 // pred_check_branch
        %4407 = sbr.rel (%p4405) target = $region148
      $region147: #{tpu_custom_call.1} parent=5 // pred_region
        %s4408 = ssub.s32 %s37, 2
        // Predicated region
        $region149: #{tpu_custom_call.1} parent=147 // pred_check
          %p4409 = pneg %p512
        $region150: #{tpu_custom_call.1} parent=147 // pred_check_branch
          %4411 = sbr.rel (%p4409) target = $region152
        $region151: #{tpu_custom_call.1} parent=147 // pred_region
          %s4412 = sand.u32 %s497, 1
          %s4413 = scalar_lea.sflag [#allocation5], %s4412
          %s4414 = sand.u32 %s497, 1
          %s4415 = smul.addr %s4414, 8
          %s4416 = scalar_lea.vmem [#allocation18], %s4415
          %4417 = dma.done %s4413, 128
        $region152: #{tpu_custom_call.1} parent=147 // pred_fallthru
          _
      $region148: #{tpu_custom_call.1} parent=5 // pred_fallthru
        _
    $region6: #{tpu_custom_call.1} parent=1 // loop_footer
      %s41 = sadd.s32 1, %s37
    $region7: #{tpu_custom_call.1} parent=1 // loop_footer_branch
      %36 = sbr.rel target = $region3
    $region8: #{tpu_custom_call.1} parent=1 // loop_exit
      _
    %4418 = vsyncpa [#allocation4], 1
    %s4419 = scalar_lea.sflag [#allocation4], 1
    %4420 = vsyncpa %s4419, 1
    %4421 = vsyncpa [#allocation7], 1
    %4422 = vsyncpa [#allocation10], 1
    %4423 = vsyncpa [#allocation13], 1
    %4424 = vsyncpa [#allocation16], 1
    %4425 = vsyncpa [#allocation5], 1
    %s4426 = scalar_lea.sflag [#allocation5], 1
    %4427 = vsyncpa %s4426, 1

</llo_original>
